<compile_context>
chip_gen: v6e
topology: v6e:2x2x1
jax: 0.10.0
libtpu: 0.0.40
codegen_flags: <defaults>
</compile_context>

<pallas_src>
import jax
import jax.numpy as jnp
import numpy as np
from jax import lax
from jax.experimental import pallas as pl
from jax.experimental.pallas import tpu as pltpu

# ---------------------------------------------------------------------------
# Config (small synthetic sizes consistent with the module)
# ---------------------------------------------------------------------------
D_MODEL = 32           # config.d_model
SPATIAL = 8            # config.input_spatial_size
L_SEQ = SPATIAL ** 2   # 64 tokens
M_RATIO = 2            # config.M (hourglass ratio)
J_SEQ = L_SEQ // M_RATIO
T_DIM = 256            # time-embed dim (MLPEmbedder(in_dim=256, ...))
N_STATE = 8            # SSM state size per channel
BATCH = 2
EPS = 1e-6

PARAM_ORDER = [
    "w_ce1", "b_ce1", "w_ce2", "b_ce2",              # condition embedder (MLPEmbedder 256->D)
    "w_mod", "b_mod",                                # Modulation linear (D -> 3D)
    "w_hg_dn", "b_hg_dn",                            # hourglass Conv1d L->J
    "w_hgm1", "b_hgm1", "w_hgm2", "b_hgm2",          # hourglass MLPEmbedder D->D
    "w_hg_up", "b_hg_up",                            # hourglass Conv1d J->L
    "ssm_af", "ssm_bf", "ssm_cf",                    # SSM forward params (N, D)
    "ssm_ab", "ssm_bb", "ssm_cb",                    # SSM backward params (N, D)
    "ssm_d",                                         # SSM skip (1, D)
    "w_dnl", "b_dnl", "w_dnr", "b_dnr",              # downscale_left / downscale_right (L->J)
    "w_l1", "b_l1", "w_l2", "b_l2",                  # mlp_left
    "w_r1", "b_r1", "w_r2", "b_r2",                  # mlp_right
    "w_f1", "b_f1", "w_f2", "b_f2",                  # mlp_final
    "w_upf", "b_upf",                                # upscale_final (J->L)
]

# Row-block indices into the packed (9*D, D) weight slab.
(_W_CE2, _W_HGM1, _W_HGM2, _W_L1, _W_L2, _W_R1, _W_R2, _W_F1, _W_F2) = range(9)
# Row indices into the packed (11, D) bias slab.
(_B_CE1, _B_CE2, _B_HGM1, _B_HGM2,
 _B_L1, _B_L2, _B_R1, _B_R2, _B_F1, _B_F2, _B_SSM_D) = range(11)

SCAN_CHUNK = 8  # sublane chunk size for the SSM scan


def _mm(a, b):
    return jnp.dot(a, b, preferred_element_type=jnp.float32)


def _silu(x):
    return x * jax.nn.sigmoid(x)


# ---------------------------------------------------------------------------
# Kernel (whole block, all batches, one grid step)
# ---------------------------------------------------------------------------
def _diffussm_kernel(x_ref, t_ref, w_ce1_ref, wdd_ref, bvec_ref,
                     wmod_ref, bmod_ref, ssm_ref, wcdn_ref, bcdn_ref,
                     wcup_ref, bcup_ref, o_ref, u_scr, y_scr):
    BL, D = x_ref.shape                  # (B*L, D)
    B = t_ref.shape[0]
    L = BL // B
    BJ = wcdn_ref.shape[0] // 3          # B*J
    N = ssm_ref.shape[0] // 3            # SSM state size
    C = SCAN_CHUNK
    n_chunks = L // C
    P = 2 * B * D                        # packed lane width for the scan (= 128)

    def dd(i):                           # i-th (D, D) weight from the packed slab
        return wdd_ref[i * D:(i + 1) * D, :]

    def bv(i):                           # i-th (1, D) bias row from the packed slab
        return bvec_ref[i:i + 1, :]

    def mlp(v, wi, bi):                  # MLPEmbedder: out_layer(silu(in_layer(v)))
        h1 = _silu(_mm(v, dd(wi)) + bv(bi))
        return _mm(h1, dd(wi + 1)) + bv(bi + 1)

    def conv_up(idx, v):                 # Conv1d(J -> L, k=1), block-diag over batch
        w = wcup_ref[idx * BL:(idx + 1) * BL, :]      # (B*L, B*J)
        b = bcup_ref[idx * BL:(idx + 1) * BL, :]      # (B*L, D)
        return _mm(w, v) + b

    x = x_ref[...]                                            # (B*L, D)
    t = t_ref[...]                                            # (B, T_DIM)

    # --- condition embedder: y = MLPEmbedder(256 -> D)(time_embed)
    h1 = _silu(_mm(t, w_ce1_ref[...]) + bv(_B_CE1))
    y = _mm(h1, dd(_W_CE2)) + bv(_B_CE2)                      # (B, D)

    # --- Modulation(dim=D, double=False): one fused (B, D) @ (D, 3D) matmul
    mod = _mm(_silu(y), wmod_ref[...]) + bmod_ref[...]        # (B, 3D)
    shift = mod[:, 0:D]
    scale = mod[:, D:2 * D]
    gate = mod[:, 2 * D:3 * D]

    # --- LayerNorm(d_model, no affine, eps=1e-6) + per-batch modulation (row broadcast)
    mu = jnp.mean(x, axis=-1, keepdims=True)
    var = jnp.mean((x - mu) ** 2, axis=-1, keepdims=True)
    hn = (x - mu) * lax.rsqrt(var + EPS)
    h_parts = [(1.0 + scale[bi:bi + 1, :]) * hn[bi * L:(bi + 1) * L, :]
               + shift[bi:bi + 1, :] for bi in range(B)]
    h = jnp.concatenate(h_parts, axis=0)                      # (B*L, D)

    # --- fused downscales that read h: hourglass-down + left-down in ONE MXU push
    dn_hl = _mm(wcdn_ref[0:2 * BJ, :], h) + bcdn_ref[0:2 * BJ, :]   # (2*B*J, D)
    hg_dn = dn_hl[0:BJ, :]                                    # hourglass Conv1d(L->J)(h)
    left_dn = dn_hl[BJ:2 * BJ, :]                             # downscale_left(h)

    # --- hourglass: Conv1d(L->J) -> MLPEmbedder(D, D) -> Conv1d(J->L)
    hg = conv_up(0, mlp(hg_dn, _W_HGM1, _B_HGM1))             # (B*L, D)

    # --- bidirectional diagonal SSM, lane-packed fwd/bwd x batch scan
    # TODO(synk): the exact SSM is instantiated from an external block_config; a
    #             bidirectional diagonal linear SSM with skip is used here.
    # Sequence reversal as an MXU matmul with the (L, L) anti-diagonal permutation.
    ri = lax.broadcasted_iota(jnp.int32, (L, L), 0)
    ci = lax.broadcasted_iota(jnp.int32, (L, L), 1)
    revP = (ri + ci == L - 1).astype(jnp.float32)             # (L, L)

    # packed scan input: columns [b0 fwd | b1 fwd | b0 reversed | b1 reversed]
    fwd_cols = jnp.concatenate([hg[bi * L:(bi + 1) * L, :] for bi in range(B)],
                               axis=1)                        # (L, B*D)
    bwd_cols = _mm(revP, fwd_cols)                            # (L, B*D), time-reversed
    u_scr[...] = jnp.concatenate([fwd_cols, bwd_cols], axis=1)   # (L, 2*B*D) = (64, 128)

    a_p = ssm_ref[0 * N:1 * N, :]                             # (N, 2*B*D) packed transitions
    b_p = ssm_ref[1 * N:2 * N, :]
    c_p = ssm_ref[2 * N:3 * N, :]

    # fully-unrolled chunked scan: one (N, 128) state vreg carries all 4 chains
    state = jnp.zeros((N, P), jnp.float32)
    for c in range(n_chunks):
        base = c * C
        u = u_scr[base:base + C, :]                           # (C, 128) lane-dense load
        rows = []
        for k in range(C):
            state = a_p * state + b_p * u[k:k + 1, :]
            rows.append(jnp.sum(c_p * state, axis=0, keepdims=True))
        y_scr[base:base + C, :] = jnp.concatenate(rows, axis=0)   # (C, 128) dense store

    y_pk = y_scr[...]                                         # (L, 2*B*D)
    y_sum = y_pk[:, 0:B * D] + _mm(revP, y_pk[:, B * D:2 * B * D])   # (L, B*D)
    h_ssm = jnp.concatenate([y_sum[:, bi * D:(bi + 1) * D] for bi in range(B)],
                            axis=0) + bv(_B_SSM_D) * hg       # (B*L, D)

    # --- fusion path
    right_dn = _mm(wcdn_ref[2 * BJ:3 * BJ, :], h_ssm) + bcdn_ref[2 * BJ:3 * BJ, :]
    left = mlp(left_dn, _W_L1, _B_L1)                         # (B*J, D)
    right = mlp(right_dn, _W_R1, _B_R1)                       # (B*J, D)
    fused = mlp(left * right, _W_F1, _B_F1)                   # (B*J, D)
    up = conv_up(1, fused)                                    # (B*L, D)

    # --- gated residual around the modulated-normalized input (single full-tile store)
    o_ref[...] = jnp.concatenate(
        [h_parts[bi] + gate[bi:bi + 1, :] * up[bi * L:(bi + 1) * L, :]
         for bi in range(B)], axis=0)


# ---------------------------------------------------------------------------
# Wrapper: packs parameters into a few slabs and launches one grid step
# ---------------------------------------------------------------------------
def diffusion_ssm_block(x, t_emb, params):
    B, L, D = x.shape
    J = params["w_hg_dn"].shape[0]

    x2 = x.reshape(B * L, D)

    # (D, D) weight slab
    wdd = jnp.concatenate([
        params["w_ce2"],
        params["w_hgm1"], params["w_hgm2"],
        params["w_l1"], params["w_l2"],
        params["w_r1"], params["w_r2"],
        params["w_f1"], params["w_f2"],
    ], axis=0)                                                 # (9*D, D)

    # (1, D) bias slab
    bvec = jnp.concatenate([
        params["b_ce1"], params["b_ce2"],
        params["b_hgm1"], params["b_hgm2"],
        params["b_l1"], params["b_l2"],
        params["b_r1"], params["b_r2"],
        params["b_f1"], params["b_f2"],
        params["ssm_d"],
    ], axis=0)                                                 # (11, D)

    # SSM transitions lane-packed: columns [fwd x B | bwd x B] -> (N, 2*B*D) = (8, 128)
    def lane_pack(pf, pb):
        return jnp.concatenate([jnp.tile(pf, (1, B)), jnp.tile(pb, (1, B))], axis=1)

    ssm = jnp.concatenate([
        lane_pack(params["ssm_af"], params["ssm_ab"]),
        lane_pack(params["ssm_bf"], params["ssm_bb"]),
        lane_pack(params["ssm_cf"], params["ssm_cb"]),
    ], axis=0)                                                 # (3*N, 2*B*D)

    # Conv1d(k=1) weights block-diagonalized over batch
    def block_diag(w):
        O, I = w.shape
        out = jnp.zeros((B * O, B * I), w.dtype)
        for bi in range(B):
            out = out.at[bi * O:(bi + 1) * O, bi * I:(bi + 1) * I].set(w)
        return out

    def conv_bias(b, O):       # (O, 1) -> tiled over batch, broadcast over D
        return jnp.tile(jnp.broadcast_to(b, (O, D)), (B, 1))

    wcdn = jnp.concatenate([block_diag(params["w_hg_dn"]),
                            block_diag(params["w_dnl"]),
                            block_diag(params["w_dnr"])], axis=0)     # (3*B*J, B*L)
    bcdn = jnp.concatenate([conv_bias(params["b_hg_dn"], J),
                            conv_bias(params["b_dnl"], J),
                            conv_bias(params["b_dnr"], J)], axis=0)   # (3*B*J, D)
    wcup = jnp.concatenate([block_diag(params["w_hg_up"]),
                            block_diag(params["w_upf"])], axis=0)     # (2*B*L, B*J)
    bcup = jnp.concatenate([conv_bias(params["b_hg_up"], L),
                            conv_bias(params["b_upf"], L)], axis=0)   # (2*B*L, D)

    inputs = [x2, t_emb, params["w_ce1"], wdd, bvec,
              params["w_mod"], params["b_mod"], ssm, wcdn, bcdn, wcup, bcup]
    in_specs = [pl.BlockSpec(a.shape, lambda i, _nd=a.ndim: (0,) * _nd) for a in inputs]

    out = pl.pallas_call(
        _diffussm_kernel,
        out_shape=jax.ShapeDtypeStruct((B * L, D), jnp.float32),
        grid_spec=pltpu.PrefetchScalarGridSpec(
            num_scalar_prefetch=0,
            grid=(1,),
            in_specs=in_specs,
            out_specs=pl.BlockSpec((B * L, D), lambda i: (0, 0)),
            scratch_shapes=[
                pltpu.VMEM((L, 2 * B * D), jnp.float32),   # packed scan input  (64, 128)
                pltpu.VMEM((L, 2 * B * D), jnp.float32),   # packed scan output (64, 128)
            ],
        ),
        compiler_params=pltpu.CompilerParams(
            dimension_semantics=("arbitrary",)),
    )(*inputs)
    return out.reshape(B, L, D)


# ---------------------------------------------------------------------------
# Deterministic parameter init
# ---------------------------------------------------------------------------
def init_params(key):
    shapes = {
        "w_ce1": (T_DIM, D_MODEL), "b_ce1": (1, D_MODEL),
        "w_ce2": (D_MODEL, D_MODEL), "b_ce2": (1, D_MODEL),
        "w_mod": (D_MODEL, 3 * D_MODEL), "b_mod": (1, 3 * D_MODEL),
        "w_hg_dn": (J_SEQ, L_SEQ), "b_hg_dn": (J_SEQ, 1),
        "w_hgm1": (D_MODEL, D_MODEL), "b_hgm1": (1, D_MODEL),
        "w_hgm2": (D_MODEL, D_MODEL), "b_hgm2": (1, D_MODEL),
        "w_hg_up": (L_SEQ, J_SEQ), "b_hg_up": (L_SEQ, 1),
        "ssm_af": (N_STATE, D_MODEL), "ssm_bf": (N_STATE, D_MODEL), "ssm_cf": (N_STATE, D_MODEL),
        "ssm_ab": (N_STATE, D_MODEL), "ssm_bb": (N_STATE, D_MODEL), "ssm_cb": (N_STATE, D_MODEL),
        "ssm_d": (1, D_MODEL),
        "w_dnl": (J_SEQ, L_SEQ), "b_dnl": (J_SEQ, 1),
        "w_dnr": (J_SEQ, L_SEQ), "b_dnr": (J_SEQ, 1),
        "w_l1": (D_MODEL, D_MODEL), "b_l1": (1, D_MODEL),
        "w_l2": (D_MODEL, D_MODEL), "b_l2": (1, D_MODEL),
        "w_r1": (D_MODEL, D_MODEL), "b_r1": (1, D_MODEL),
        "w_r2": (D_MODEL, D_MODEL), "b_r2": (1, D_MODEL),
        "w_f1": (D_MODEL, D_MODEL), "b_f1": (1, D_MODEL),
        "w_f2": (D_MODEL, D_MODEL), "b_f2": (1, D_MODEL),
        "w_upf": (L_SEQ, J_SEQ), "b_upf": (L_SEQ, 1),
    }
    keys = jax.random.split(key, len(PARAM_ORDER))
    params = {}
    for name, k in zip(PARAM_ORDER, keys):
        shp = shapes[name]
        if name in ("ssm_af", "ssm_ab"):
            # stable decays in (0, 1)
            params[name] = jnp.exp(-jnp.exp(0.5 * jax.random.normal(k, shp) - 1.0)).astype(jnp.float32)
        else:
            params[name] = (0.05 * jax.random.normal(k, shp)).astype(jnp.float32)
    return params


# ---------------------------------------------------------------------------
# Pure-JAX reference (same math) for validation
# ---------------------------------------------------------------------------
def reference(x, t_emb, p):
    def mlp(h, w1, b1, w2, b2):
        return jax.nn.silu(h @ w1 + b1) @ w2 + b2

    def conv(w, b, v):  # Conv1d(kernel_size=1) over the L axis
        return jnp.einsum("jl,bld->bjd", w, v) + b[None]

    y = mlp(t_emb[:, None, :], p["w_ce1"], p["b_ce1"], p["w_ce2"], p["b_ce2"])   # (B,1,D)
    mod = jax.nn.silu(y) @ p["w_mod"] + p["b_mod"]                               # (B,1,3D)
    shift, scale, gate = jnp.split(mod, 3, axis=-1)

    mu = jnp.mean(x, axis=-1, keepdims=True)
    var = jnp.mean((x - mu) ** 2, axis=-1, keepdims=True)
    hn = (x - mu) / jnp.sqrt(var + EPS)
    h = (1.0 + scale) * hn + shift

    hg = conv(p["w_hg_up"], p["b_hg_up"],
              mlp(conv(p["w_hg_dn"], p["b_hg_dn"], h),
                  p["w_hgm1"], p["b_hgm1"], p["w_hgm2"], p["b_hgm2"]))

    def ssm_dir(u, a, b, c, reverse):
        seq = jnp.swapaxes(u, 0, 1)           # (L, B, D)
        if reverse:
            seq = seq[::-1]

        def step(s, u_t):
            s = a[None] * s + b[None] * u_t[:, None, :]
            return s, jnp.sum(c[None] * s, axis=1)

        s0 = jnp.zeros((u.shape[0], a.shape[0], u.shape[-1]), u.dtype)
        _, ys = lax.scan(step, s0, seq)
        if reverse:
            ys = ys[::-1]
        return jnp.swapaxes(ys, 0, 1)

    h_ssm = (ssm_dir(hg, p["ssm_af"], p["ssm_bf"], p["ssm_cf"], False)
             + ssm_dir(hg, p["ssm_ab"], p["ssm_bb"], p["ssm_cb"], True)
             + p["ssm_d"][None] * hg)

    left = mlp(conv(p["w_dnl"], p["b_dnl"], h), p["w_l1"], p["b_l1"], p["w_l2"], p["b_l2"])
    right = mlp(conv(p["w_dnr"], p["b_dnr"], h_ssm), p["w_r1"], p["b_r1"], p["w_r2"], p["b_r2"])
    fused = mlp(left * right, p["w_f1"], p["b_f1"], p["w_f2"], p["b_f2"])
    up = conv(p["w_upf"], p["b_upf"], fused)
    return h + gate * up


if __name__ == "__main__":
    key = jax.random.PRNGKey(0)
    kx, kt, kp = jax.random.split(key, 3)
    x = jax.random.normal(kx, (BATCH, L_SEQ, D_MODEL), dtype=jnp.float32)
    t_emb = jax.random.normal(kt, (BATCH, T_DIM), dtype=jnp.float32)
    params = init_params(kp)

    out = diffusion_ssm_block(x, t_emb, params)
    out = jax.block_until_ready(out)

    ref = reference(x, t_emb, params)
    np.testing.assert_allclose(np.asarray(out), np.asarray(ref), rtol=2e-3, atol=2e-3)
    print("KERNEL_OK")
</pallas_src>

<mosaic_0001>
module attributes {stable_mosaic.version = 11 : i64} {
  func.func @_diffussm_kernel(%arg0: i32, %arg1: memref<128x32xf32, #tpu.memory_space<vmem>>, %arg2: memref<2x256xf32, #tpu.memory_space<vmem>>, %arg3: memref<256x32xf32, #tpu.memory_space<vmem>>, %arg4: memref<288x32xf32, #tpu.memory_space<vmem>>, %arg5: memref<11x32xf32, #tpu.memory_space<vmem>>, %arg6: memref<32x96xf32, #tpu.memory_space<vmem>>, %arg7: memref<1x96xf32, #tpu.memory_space<vmem>>, %arg8: memref<24x128xf32, #tpu.memory_space<vmem>>, %arg9: memref<192x128xf32, #tpu.memory_space<vmem>>, %arg10: memref<192x32xf32, #tpu.memory_space<vmem>>, %arg11: memref<256x64xf32, #tpu.memory_space<vmem>>, %arg12: memref<256x32xf32, #tpu.memory_space<vmem>>, %arg13: memref<128x32xf32, #tpu.memory_space<vmem>>, %arg14: memref<64x128xf32, #tpu.memory_space<vmem>>, %arg15: memref<64x128xf32, #tpu.memory_space<vmem>>) attributes {dimension_semantics = [#tpu.dimension_semantics<arbitrary>], iteration_bounds = array<i64: 1>, scalar_prefetch = 0 : i64, scratch_operands = 2 : i64, tpu.core_type = #tpu.core_type<tc>, window_params = [{pipeline_mode = #tpu.pipeline_mode<synchronous>, transform_indices = @transform_0, window_bounds = array<i64: 128, 32>}, {pipeline_mode = #tpu.pipeline_mode<synchronous>, transform_indices = @transform_1, window_bounds = array<i64: 2, 256>}, {pipeline_mode = #tpu.pipeline_mode<synchronous>, transform_indices = @transform_2, window_bounds = array<i64: 256, 32>}, {pipeline_mode = #tpu.pipeline_mode<synchronous>, transform_indices = @transform_3, window_bounds = array<i64: 288, 32>}, {pipeline_mode = #tpu.pipeline_mode<synchronous>, transform_indices = @transform_4, window_bounds = array<i64: 11, 32>}, {pipeline_mode = #tpu.pipeline_mode<synchronous>, transform_indices = @transform_5, window_bounds = array<i64: 32, 96>}, {pipeline_mode = #tpu.pipeline_mode<synchronous>, transform_indices = @transform_6, window_bounds = array<i64: 1, 96>}, {pipeline_mode = #tpu.pipeline_mode<synchronous>, transform_indices = @transform_7, window_bounds = array<i64: 24, 128>}, {pipeline_mode = #tpu.pipeline_mode<synchronous>, transform_indices = @transform_8, window_bounds = array<i64: 192, 128>}, {pipeline_mode = #tpu.pipeline_mode<synchronous>, transform_indices = @transform_9, window_bounds = array<i64: 192, 32>}, {pipeline_mode = #tpu.pipeline_mode<synchronous>, transform_indices = @transform_10, window_bounds = array<i64: 256, 64>}, {pipeline_mode = #tpu.pipeline_mode<synchronous>, transform_indices = @transform_11, window_bounds = array<i64: 256, 32>}, {pipeline_mode = #tpu.pipeline_mode<synchronous>, transform_indices = @transform_12, window_bounds = array<i64: 128, 32>}]} {
    %c0 = arith.constant 0 : index
    %c0_0 = arith.constant 0 : index
    %0 = vector.load %arg1[%c0, %c0_0] : memref<128x32xf32, #tpu.memory_space<vmem>>, vector<128x32xf32>
    %c0_1 = arith.constant 0 : index
    %c0_2 = arith.constant 0 : index
    %1 = vector.load %arg2[%c0_1, %c0_2] : memref<2x256xf32, #tpu.memory_space<vmem>>, vector<2x256xf32>
    %c0_3 = arith.constant 0 : index
    %c0_4 = arith.constant 0 : index
    %2 = vector.load %arg3[%c0_3, %c0_4] : memref<256x32xf32, #tpu.memory_space<vmem>>, vector<256x32xf32>
    %cst = arith.constant dense<0.000000e+00> : vector<2x32xf32>
    %3 = tpu.matmul %1, %2, %cst {dimension_numbers = #tpu.dot_dimension_numbers<[1], [0], [0], [1], [0, 0, 1, 1], [], []>} : vector<2x256xf32>, vector<256x32xf32>, vector<2x32xf32> -> vector<2x32xf32>
    %c0_5 = arith.constant 0 : index
    %c0_6 = arith.constant 0 : index
    %4 = vector.load %arg5[%c0_5, %c0_6] : memref<11x32xf32, #tpu.memory_space<vmem>>, vector<1x32xf32>
    %5 = vector.broadcast %4 : vector<1x32xf32> to vector<2x32xf32>
    %6 = arith.addf %3, %5 : vector<2x32xf32>
    %7 = arith.negf %6 : vector<2x32xf32>
    %8 = math.exp %7 : vector<2x32xf32>
    %cst_7 = arith.constant 1.000000e+00 : f32
    %9 = vector.broadcast %cst_7 : f32 to vector<2x32xf32>
    %10 = arith.addf %9, %8 : vector<2x32xf32>
    %11 = arith.divf %9, %10 : vector<2x32xf32>
    %12 = arith.mulf %6, %11 : vector<2x32xf32>
    %c0_8 = arith.constant 0 : index
    %c0_9 = arith.constant 0 : index
    %13 = vector.load %arg4[%c0_8, %c0_9] : memref<288x32xf32, #tpu.memory_space<vmem>>, vector<32x32xf32>
    %cst_10 = arith.constant dense<0.000000e+00> : vector<2x32xf32>
    %14 = tpu.matmul %12, %13, %cst_10 {dimension_numbers = #tpu.dot_dimension_numbers<[1], [0], [0], [1], [0, 0, 1, 1], [], []>} : vector<2x32xf32>, vector<32x32xf32>, vector<2x32xf32> -> vector<2x32xf32>
    %c1 = arith.constant 1 : index
    %c0_11 = arith.constant 0 : index
    %15 = vector.load %arg5[%c1, %c0_11] : memref<11x32xf32, #tpu.memory_space<vmem>>, vector<1x32xf32>
    %16 = vector.broadcast %15 : vector<1x32xf32> to vector<2x32xf32>
    %17 = arith.addf %14, %16 : vector<2x32xf32>
    %18 = arith.negf %17 : vector<2x32xf32>
    %19 = math.exp %18 : vector<2x32xf32>
    %cst_12 = arith.constant 1.000000e+00 : f32
    %20 = vector.broadcast %cst_12 : f32 to vector<2x32xf32>
    %21 = arith.addf %20, %19 : vector<2x32xf32>
    %22 = arith.divf %20, %21 : vector<2x32xf32>
    %23 = arith.mulf %17, %22 : vector<2x32xf32>
    %c0_13 = arith.constant 0 : index
    %c0_14 = arith.constant 0 : index
    %24 = vector.load %arg6[%c0_13, %c0_14] : memref<32x96xf32, #tpu.memory_space<vmem>>, vector<32x96xf32>
    %cst_15 = arith.constant dense<0.000000e+00> : vector<2x96xf32>
    %25 = tpu.matmul %23, %24, %cst_15 {dimension_numbers = #tpu.dot_dimension_numbers<[1], [0], [0], [1], [0, 0, 1, 1], [], []>} : vector<2x32xf32>, vector<32x96xf32>, vector<2x96xf32> -> vector<2x96xf32>
    %c0_16 = arith.constant 0 : index
    %c0_17 = arith.constant 0 : index
    %26 = vector.load %arg7[%c0_16, %c0_17] : memref<1x96xf32, #tpu.memory_space<vmem>>, vector<1x96xf32>
    %27 = vector.broadcast %26 : vector<1x96xf32> to vector<2x96xf32>
    %28 = arith.addf %25, %27 : vector<2x96xf32>
    %29 = vector.extract_strided_slice %28 {offsets = [0, 0], sizes = [2, 32], strides = [1, 1]} : vector<2x96xf32> to vector<2x32xf32>
    %30 = vector.extract_strided_slice %28 {offsets = [0, 32], sizes = [2, 32], strides = [1, 1]} : vector<2x96xf32> to vector<2x32xf32>
    %31 = vector.extract_strided_slice %28 {offsets = [0, 64], sizes = [2, 32], strides = [1, 1]} : vector<2x96xf32> to vector<2x32xf32>
    %cst_18 = arith.constant dense<0.000000e+00> : vector<128xf32>
    %32 = vector.multi_reduction <add>, %0, %cst_18 [1] : vector<128x32xf32> to vector<128xf32>
    %33 = vector.shape_cast %32 : vector<128xf32> to vector<128x1xf32>
    %cst_19 = arith.constant 3.200000e+01 : f32
    %34 = vector.broadcast %cst_19 : f32 to vector<128x1xf32>
    %35 = arith.divf %33, %34 : vector<128x1xf32>
    %36 = vector.broadcast %35 : vector<128x1xf32> to vector<128x32xf32>
    %37 = arith.subf %0, %36 : vector<128x32xf32>
    %38 = arith.mulf %37, %37 : vector<128x32xf32>
    %cst_20 = arith.constant dense<0.000000e+00> : vector<128xf32>
    %39 = vector.multi_reduction <add>, %38, %cst_20 [1] : vector<128x32xf32> to vector<128xf32>
    %40 = vector.shape_cast %39 : vector<128xf32> to vector<128x1xf32>
    %cst_21 = arith.constant 3.200000e+01 : f32
    %41 = vector.broadcast %cst_21 : f32 to vector<128x1xf32>
    %42 = arith.divf %40, %41 : vector<128x1xf32>
    %43 = vector.broadcast %35 : vector<128x1xf32> to vector<128x32xf32>
    %44 = arith.subf %0, %43 : vector<128x32xf32>
    %cst_22 = arith.constant 9.99999997E-7 : f32
    %45 = vector.broadcast %cst_22 : f32 to vector<128x1xf32>
    %46 = arith.addf %42, %45 : vector<128x1xf32>
    %47 = math.rsqrt %46 : vector<128x1xf32>
    %48 = vector.broadcast %47 : vector<128x1xf32> to vector<128x32xf32>
    %49 = arith.mulf %44, %48 : vector<128x32xf32>
    %50 = vector.extract_strided_slice %30 {offsets = [0, 0], sizes = [1, 32], strides = [1, 1]} : vector<2x32xf32> to vector<1x32xf32>
    %cst_23 = arith.constant 1.000000e+00 : f32
    %51 = vector.broadcast %cst_23 : f32 to vector<1x32xf32>
    %52 = arith.addf %51, %50 : vector<1x32xf32>
    %53 = vector.extract_strided_slice %49 {offsets = [0, 0], sizes = [64, 32], strides = [1, 1]} : vector<128x32xf32> to vector<64x32xf32>
    %54 = vector.broadcast %52 : vector<1x32xf32> to vector<64x32xf32>
    %55 = arith.mulf %54, %53 : vector<64x32xf32>
    %56 = vector.extract_strided_slice %29 {offsets = [0, 0], sizes = [1, 32], strides = [1, 1]} : vector<2x32xf32> to vector<1x32xf32>
    %57 = vector.broadcast %56 : vector<1x32xf32> to vector<64x32xf32>
    %58 = arith.addf %55, %57 : vector<64x32xf32>
    %59 = vector.extract_strided_slice %30 {offsets = [1, 0], sizes = [1, 32], strides = [1, 1]} : vector<2x32xf32> to vector<1x32xf32>
    %cst_24 = arith.constant 1.000000e+00 : f32
    %60 = vector.broadcast %cst_24 : f32 to vector<1x32xf32>
    %61 = arith.addf %60, %59 : vector<1x32xf32>
    %62 = vector.extract_strided_slice %49 {offsets = [64, 0], sizes = [64, 32], strides = [1, 1]} : vector<128x32xf32> to vector<64x32xf32>
    %63 = vector.broadcast %61 : vector<1x32xf32> to vector<64x32xf32>
    %64 = arith.mulf %63, %62 : vector<64x32xf32>
    %65 = vector.extract_strided_slice %29 {offsets = [1, 0], sizes = [1, 32], strides = [1, 1]} : vector<2x32xf32> to vector<1x32xf32>
    %66 = vector.broadcast %65 : vector<1x32xf32> to vector<64x32xf32>
    %67 = arith.addf %64, %66 : vector<64x32xf32>
    %68 = tpu.concatenate %58, %67 in 0 : vector<64x32xf32>, vector<64x32xf32> -> vector<128x32xf32>
    %c0_25 = arith.constant 0 : index
    %c0_26 = arith.constant 0 : index
    %69 = vector.load %arg9[%c0_25, %c0_26] : memref<192x128xf32, #tpu.memory_space<vmem>>, vector<128x128xf32>
    %cst_27 = arith.constant dense<0.000000e+00> : vector<128x32xf32>
    %70 = tpu.matmul %69, %68, %cst_27 {dimension_numbers = #tpu.dot_dimension_numbers<[1], [0], [0], [1], [0, 0, 1, 1], [], []>} : vector<128x128xf32>, vector<128x32xf32>, vector<128x32xf32> -> vector<128x32xf32>
    %c0_28 = arith.constant 0 : index
    %c0_29 = arith.constant 0 : index
    %71 = vector.load %arg10[%c0_28, %c0_29] : memref<192x32xf32, #tpu.memory_space<vmem>>, vector<128x32xf32>
    %72 = arith.addf %70, %71 : vector<128x32xf32>
    %73 = vector.extract_strided_slice %72 {offsets = [0, 0], sizes = [64, 32], strides = [1, 1]} : vector<128x32xf32> to vector<64x32xf32>
    %74 = vector.extract_strided_slice %72 {offsets = [64, 0], sizes = [64, 32], strides = [1, 1]} : vector<128x32xf32> to vector<64x32xf32>
    %c32 = arith.constant 32 : index
    %c0_30 = arith.constant 0 : index
    %75 = vector.load %arg4[%c32, %c0_30] : memref<288x32xf32, #tpu.memory_space<vmem>>, vector<32x32xf32>
    %cst_31 = arith.constant dense<0.000000e+00> : vector<64x32xf32>
    %76 = tpu.matmul %73, %75, %cst_31 {dimension_numbers = #tpu.dot_dimension_numbers<[1], [0], [0], [1], [0, 0, 1, 1], [], []>} : vector<64x32xf32>, vector<32x32xf32>, vector<64x32xf32> -> vector<64x32xf32>
    %c2 = arith.constant 2 : index
    %c0_32 = arith.constant 0 : index
    %77 = vector.load %arg5[%c2, %c0_32] : memref<11x32xf32, #tpu.memory_space<vmem>>, vector<1x32xf32>
    %78 = vector.broadcast %77 : vector<1x32xf32> to vector<64x32xf32>
    %79 = arith.addf %76, %78 : vector<64x32xf32>
    %80 = arith.negf %79 : vector<64x32xf32>
    %81 = math.exp %80 : vector<64x32xf32>
    %cst_33 = arith.constant 1.000000e+00 : f32
    %82 = vector.broadcast %cst_33 : f32 to vector<64x32xf32>
    %83 = arith.addf %82, %81 : vector<64x32xf32>
    %84 = arith.divf %82, %83 : vector<64x32xf32>
    %85 = arith.mulf %79, %84 : vector<64x32xf32>
    %c64 = arith.constant 64 : index
    %c0_34 = arith.constant 0 : index
    %86 = vector.load %arg4[%c64, %c0_34] : memref<288x32xf32, #tpu.memory_space<vmem>>, vector<32x32xf32>
    %cst_35 = arith.constant dense<0.000000e+00> : vector<64x32xf32>
    %87 = tpu.matmul %85, %86, %cst_35 {dimension_numbers = #tpu.dot_dimension_numbers<[1], [0], [0], [1], [0, 0, 1, 1], [], []>} : vector<64x32xf32>, vector<32x32xf32>, vector<64x32xf32> -> vector<64x32xf32>
    %c3 = arith.constant 3 : index
    %c0_36 = arith.constant 0 : index
    %88 = vector.load %arg5[%c3, %c0_36] : memref<11x32xf32, #tpu.memory_space<vmem>>, vector<1x32xf32>
    %89 = vector.broadcast %88 : vector<1x32xf32> to vector<64x32xf32>
    %90 = arith.addf %87, %89 : vector<64x32xf32>
    %c0_37 = arith.constant 0 : index
    %c0_38 = arith.constant 0 : index
    %91 = vector.load %arg11[%c0_37, %c0_38] : memref<256x64xf32, #tpu.memory_space<vmem>>, vector<128x64xf32>
    %c0_39 = arith.constant 0 : index
    %c0_40 = arith.constant 0 : index
    %92 = vector.load %arg12[%c0_39, %c0_40] : memref<256x32xf32, #tpu.memory_space<vmem>>, vector<128x32xf32>
    %cst_41 = arith.constant dense<0.000000e+00> : vector<128x32xf32>
    %93 = tpu.matmul %91, %90, %cst_41 {dimension_numbers = #tpu.dot_dimension_numbers<[1], [0], [0], [1], [0, 0, 1, 1], [], []>} : vector<128x64xf32>, vector<64x32xf32>, vector<128x32xf32> -> vector<128x32xf32>
    %94 = arith.addf %93, %92 : vector<128x32xf32>
    %95 = tpu.iota {dimensions = array<i32: 0>} : vector<64x64xi32>
    %96 = tpu.iota {dimensions = array<i32: 1>} : vector<64x64xi32>
    %97 = arith.addi %95, %96 : vector<64x64xi32>
    %c63_i32 = arith.constant 63 : i32
    %98 = vector.broadcast %c63_i32 : i32 to vector<64x64xi32>
    %99 = arith.cmpi eq, %97, %98 : vector<64x64xi32>
    %100 = arith.extui %99 : vector<64x64xi1> to vector<64x64xi32>
    %101 = arith.sitofp %100 : vector<64x64xi32> to vector<64x64xf32>
    %102 = vector.extract_strided_slice %94 {offsets = [0, 0], sizes = [64, 32], strides = [1, 1]} : vector<128x32xf32> to vector<64x32xf32>
    %103 = vector.extract_strided_slice %94 {offsets = [64, 0], sizes = [64, 32], strides = [1, 1]} : vector<128x32xf32> to vector<64x32xf32>
    %104 = tpu.concatenate %102, %103 in 1 : vector<64x32xf32>, vector<64x32xf32> -> vector<64x64xf32>
    %cst_42 = arith.constant dense<0.000000e+00> : vector<64x64xf32>
    %105 = tpu.matmul %101, %104, %cst_42 {dimension_numbers = #tpu.dot_dimension_numbers<[1], [0], [0], [1], [0, 0, 1, 1], [], []>} : vector<64x64xf32>, vector<64x64xf32>, vector<64x64xf32> -> vector<64x64xf32>
    %106 = tpu.concatenate %104, %105 in 1 : vector<64x64xf32>, vector<64x64xf32> -> vector<64x128xf32>
    %c0_43 = arith.constant 0 : index
    %c0_44 = arith.constant 0 : index
    %107 = vector.load %arg14[%c0_43, %c0_44] : memref<64x128xf32, #tpu.memory_space<vmem>>, vector<64x128xf32>
    tpu.vector_store %arg14[%c0_43, %c0_44], %106 {strides = array<i32>} : memref<64x128xf32, #tpu.memory_space<vmem>>, vector<64x128xf32>,
    %c0_45 = arith.constant 0 : index
    %c0_46 = arith.constant 0 : index
    %108 = vector.load %arg8[%c0_45, %c0_46] : memref<24x128xf32, #tpu.memory_space<vmem>>, vector<8x128xf32>
    %c8 = arith.constant 8 : index
    %c0_47 = arith.constant 0 : index
    %109 = vector.load %arg8[%c8, %c0_47] : memref<24x128xf32, #tpu.memory_space<vmem>>, vector<8x128xf32>
    %c16 = arith.constant 16 : index
    %c0_48 = arith.constant 0 : index
    %110 = vector.load %arg8[%c16, %c0_48] : memref<24x128xf32, #tpu.memory_space<vmem>>, vector<8x128xf32>
    %cst_49 = arith.constant 0.000000e+00 : f32
    %111 = vector.broadcast %cst_49 : f32 to vector<8x128xf32>
    %c0_50 = arith.constant 0 : index
    %c0_51 = arith.constant 0 : index
    %112 = vector.load %arg14[%c0_50, %c0_51] : memref<64x128xf32, #tpu.memory_space<vmem>>, vector<8x128xf32>
    %113 = arith.mulf %108, %111 : vector<8x128xf32>
    %114 = vector.extract_strided_slice %112 {offsets = [0, 0], sizes = [1, 128], strides = [1, 1]} : vector<8x128xf32> to vector<1x128xf32>
    %115 = vector.broadcast %114 : vector<1x128xf32> to vector<8x128xf32>
    %116 = arith.mulf %109, %115 : vector<8x128xf32>
    %117 = arith.addf %113, %116 : vector<8x128xf32>
    %118 = arith.mulf %110, %117 : vector<8x128xf32>
    %cst_52 = arith.constant dense<0.000000e+00> : vector<128xf32>
    %119 = vector.multi_reduction <add>, %118, %cst_52 [0] : vector<8x128xf32> to vector<128xf32>
    %120 = vector.shape_cast %119 : vector<128xf32> to vector<1x128xf32>
    %121 = arith.mulf %108, %117 : vector<8x128xf32>
    %122 = vector.extract_strided_slice %112 {offsets = [1, 0], sizes = [1, 128], strides = [1, 1]} : vector<8x128xf32> to vector<1x128xf32>
    %123 = vector.broadcast %122 : vector<1x128xf32> to vector<8x128xf32>
    %124 = arith.mulf %109, %123 : vector<8x128xf32>
    %125 = arith.addf %121, %124 : vector<8x128xf32>
    %126 = arith.mulf %110, %125 : vector<8x128xf32>
    %cst_53 = arith.constant dense<0.000000e+00> : vector<128xf32>
    %127 = vector.multi_reduction <add>, %126, %cst_53 [0] : vector<8x128xf32> to vector<128xf32>
    %128 = vector.shape_cast %127 : vector<128xf32> to vector<1x128xf32>
    %129 = arith.mulf %108, %125 : vector<8x128xf32>
    %130 = vector.extract_strided_slice %112 {offsets = [2, 0], sizes = [1, 128], strides = [1, 1]} : vector<8x128xf32> to vector<1x128xf32>
    %131 = vector.broadcast %130 : vector<1x128xf32> to vector<8x128xf32>
    %132 = arith.mulf %109, %131 : vector<8x128xf32>
    %133 = arith.addf %129, %132 : vector<8x128xf32>
    %134 = arith.mulf %110, %133 : vector<8x128xf32>
    %cst_54 = arith.constant dense<0.000000e+00> : vector<128xf32>
    %135 = vector.multi_reduction <add>, %134, %cst_54 [0] : vector<8x128xf32> to vector<128xf32>
    %136 = vector.shape_cast %135 : vector<128xf32> to vector<1x128xf32>
    %137 = arith.mulf %108, %133 : vector<8x128xf32>
    %138 = vector.extract_strided_slice %112 {offsets = [3, 0], sizes = [1, 128], strides = [1, 1]} : vector<8x128xf32> to vector<1x128xf32>
    %139 = vector.broadcast %138 : vector<1x128xf32> to vector<8x128xf32>
    %140 = arith.mulf %109, %139 : vector<8x128xf32>
    %141 = arith.addf %137, %140 : vector<8x128xf32>
    %142 = arith.mulf %110, %141 : vector<8x128xf32>
    %cst_55 = arith.constant dense<0.000000e+00> : vector<128xf32>
    %143 = vector.multi_reduction <add>, %142, %cst_55 [0] : vector<8x128xf32> to vector<128xf32>
    %144 = vector.shape_cast %143 : vector<128xf32> to vector<1x128xf32>
    %145 = arith.mulf %108, %141 : vector<8x128xf32>
    %146 = vector.extract_strided_slice %112 {offsets = [4, 0], sizes = [1, 128], strides = [1, 1]} : vector<8x128xf32> to vector<1x128xf32>
    %147 = vector.broadcast %146 : vector<1x128xf32> to vector<8x128xf32>
    %148 = arith.mulf %109, %147 : vector<8x128xf32>
    %149 = arith.addf %145, %148 : vector<8x128xf32>
    %150 = arith.mulf %110, %149 : vector<8x128xf32>
    %cst_56 = arith.constant dense<0.000000e+00> : vector<128xf32>
    %151 = vector.multi_reduction <add>, %150, %cst_56 [0] : vector<8x128xf32> to vector<128xf32>
    %152 = vector.shape_cast %151 : vector<128xf32> to vector<1x128xf32>
    %153 = arith.mulf %108, %149 : vector<8x128xf32>
    %154 = vector.extract_strided_slice %112 {offsets = [5, 0], sizes = [1, 128], strides = [1, 1]} : vector<8x128xf32> to vector<1x128xf32>
    %155 = vector.broadcast %154 : vector<1x128xf32> to vector<8x128xf32>
    %156 = arith.mulf %109, %155 : vector<8x128xf32>
    %157 = arith.addf %153, %156 : vector<8x128xf32>
    %158 = arith.mulf %110, %157 : vector<8x128xf32>
    %cst_57 = arith.constant dense<0.000000e+00> : vector<128xf32>
    %159 = vector.multi_reduction <add>, %158, %cst_57 [0] : vector<8x128xf32> to vector<128xf32>
    %160 = vector.shape_cast %159 : vector<128xf32> to vector<1x128xf32>
    %161 = arith.mulf %108, %157 : vector<8x128xf32>
    %162 = vector.extract_strided_slice %112 {offsets = [6, 0], sizes = [1, 128], strides = [1, 1]} : vector<8x128xf32> to vector<1x128xf32>
    %163 = vector.broadcast %162 : vector<1x128xf32> to vector<8x128xf32>
    %164 = arith.mulf %109, %163 : vector<8x128xf32>
    %165 = arith.addf %161, %164 : vector<8x128xf32>
    %166 = arith.mulf %110, %165 : vector<8x128xf32>
    %cst_58 = arith.constant dense<0.000000e+00> : vector<128xf32>
    %167 = vector.multi_reduction <add>, %166, %cst_58 [0] : vector<8x128xf32> to vector<128xf32>
    %168 = vector.shape_cast %167 : vector<128xf32> to vector<1x128xf32>
    %169 = arith.mulf %108, %165 : vector<8x128xf32>
    %170 = vector.extract_strided_slice %112 {offsets = [7, 0], sizes = [1, 128], strides = [1, 1]} : vector<8x128xf32> to vector<1x128xf32>
    %171 = vector.broadcast %170 : vector<1x128xf32> to vector<8x128xf32>
    %172 = arith.mulf %109, %171 : vector<8x128xf32>
    %173 = arith.addf %169, %172 : vector<8x128xf32>
    %174 = arith.mulf %110, %173 : vector<8x128xf32>
    %cst_59 = arith.constant dense<0.000000e+00> : vector<128xf32>
    %175 = vector.multi_reduction <add>, %174, %cst_59 [0] : vector<8x128xf32> to vector<128xf32>
    %176 = vector.shape_cast %175 : vector<128xf32> to vector<1x128xf32>
    %177 = tpu.concatenate %120, %128, %136, %144, %152, %160, %168, %176 in 0 : vector<1x128xf32>, vector<1x128xf32>, vector<1x128xf32>, vector<1x128xf32>, vector<1x128xf32>, vector<1x128xf32>, vector<1x128xf32>, vector<1x128xf32> -> vector<8x128xf32>
    %c0_60 = arith.constant 0 : index
    %c0_61 = arith.constant 0 : index
    %178 = vector.load %arg15[%c0_60, %c0_61] : memref<64x128xf32, #tpu.memory_space<vmem>>, vector<8x128xf32>
    tpu.vector_store %arg15[%c0_60, %c0_61], %177 {strides = array<i32>} : memref<64x128xf32, #tpu.memory_space<vmem>>, vector<8x128xf32>,
    %c8_62 = arith.constant 8 : index
    %c0_63 = arith.constant 0 : index
    %179 = vector.load %arg14[%c8_62, %c0_63] : memref<64x128xf32, #tpu.memory_space<vmem>>, vector<8x128xf32>
    %180 = arith.mulf %108, %173 : vector<8x128xf32>
    %181 = vector.extract_strided_slice %179 {offsets = [0, 0], sizes = [1, 128], strides = [1, 1]} : vector<8x128xf32> to vector<1x128xf32>
    %182 = vector.broadcast %181 : vector<1x128xf32> to vector<8x128xf32>
    %183 = arith.mulf %109, %182 : vector<8x128xf32>
    %184 = arith.addf %180, %183 : vector<8x128xf32>
    %185 = arith.mulf %110, %184 : vector<8x128xf32>
    %cst_64 = arith.constant dense<0.000000e+00> : vector<128xf32>
    %186 = vector.multi_reduction <add>, %185, %cst_64 [0] : vector<8x128xf32> to vector<128xf32>
    %187 = vector.shape_cast %186 : vector<128xf32> to vector<1x128xf32>
    %188 = arith.mulf %108, %184 : vector<8x128xf32>
    %189 = vector.extract_strided_slice %179 {offsets = [1, 0], sizes = [1, 128], strides = [1, 1]} : vector<8x128xf32> to vector<1x128xf32>
    %190 = vector.broadcast %189 : vector<1x128xf32> to vector<8x128xf32>
    %191 = arith.mulf %109, %190 : vector<8x128xf32>
    %192 = arith.addf %188, %191 : vector<8x128xf32>
    %193 = arith.mulf %110, %192 : vector<8x128xf32>
    %cst_65 = arith.constant dense<0.000000e+00> : vector<128xf32>
    %194 = vector.multi_reduction <add>, %193, %cst_65 [0] : vector<8x128xf32> to vector<128xf32>
    %195 = vector.shape_cast %194 : vector<128xf32> to vector<1x128xf32>
    %196 = arith.mulf %108, %192 : vector<8x128xf32>
    %197 = vector.extract_strided_slice %179 {offsets = [2, 0], sizes = [1, 128], strides = [1, 1]} : vector<8x128xf32> to vector<1x128xf32>
    %198 = vector.broadcast %197 : vector<1x128xf32> to vector<8x128xf32>
    %199 = arith.mulf %109, %198 : vector<8x128xf32>
    %200 = arith.addf %196, %199 : vector<8x128xf32>
    %201 = arith.mulf %110, %200 : vector<8x128xf32>
    %cst_66 = arith.constant dense<0.000000e+00> : vector<128xf32>
    %202 = vector.multi_reduction <add>, %201, %cst_66 [0] : vector<8x128xf32> to vector<128xf32>
    %203 = vector.shape_cast %202 : vector<128xf32> to vector<1x128xf32>
    %204 = arith.mulf %108, %200 : vector<8x128xf32>
    %205 = vector.extract_strided_slice %179 {offsets = [3, 0], sizes = [1, 128], strides = [1, 1]} : vector<8x128xf32> to vector<1x128xf32>
    %206 = vector.broadcast %205 : vector<1x128xf32> to vector<8x128xf32>
    %207 = arith.mulf %109, %206 : vector<8x128xf32>
    %208 = arith.addf %204, %207 : vector<8x128xf32>
    %209 = arith.mulf %110, %208 : vector<8x128xf32>
    %cst_67 = arith.constant dense<0.000000e+00> : vector<128xf32>
    %210 = vector.multi_reduction <add>, %209, %cst_67 [0] : vector<8x128xf32> to vector<128xf32>
    %211 = vector.shape_cast %210 : vector<128xf32> to vector<1x128xf32>
    %212 = arith.mulf %108, %208 : vector<8x128xf32>
    %213 = vector.extract_strided_slice %179 {offsets = [4, 0], sizes = [1, 128], strides = [1, 1]} : vector<8x128xf32> to vector<1x128xf32>
    %214 = vector.broadcast %213 : vector<1x128xf32> to vector<8x128xf32>
    %215 = arith.mulf %109, %214 : vector<8x128xf32>
    %216 = arith.addf %212, %215 : vector<8x128xf32>
    %217 = arith.mulf %110, %216 : vector<8x128xf32>
    %cst_68 = arith.constant dense<0.000000e+00> : vector<128xf32>
    %218 = vector.multi_reduction <add>, %217, %cst_68 [0] : vector<8x128xf32> to vector<128xf32>
    %219 = vector.shape_cast %218 : vector<128xf32> to vector<1x128xf32>
    %220 = arith.mulf %108, %216 : vector<8x128xf32>
    %221 = vector.extract_strided_slice %179 {offsets = [5, 0], sizes = [1, 128], strides = [1, 1]} : vector<8x128xf32> to vector<1x128xf32>
    %222 = vector.broadcast %221 : vector<1x128xf32> to vector<8x128xf32>
    %223 = arith.mulf %109, %222 : vector<8x128xf32>
    %224 = arith.addf %220, %223 : vector<8x128xf32>
    %225 = arith.mulf %110, %224 : vector<8x128xf32>
    %cst_69 = arith.constant dense<0.000000e+00> : vector<128xf32>
    %226 = vector.multi_reduction <add>, %225, %cst_69 [0] : vector<8x128xf32> to vector<128xf32>
    %227 = vector.shape_cast %226 : vector<128xf32> to vector<1x128xf32>
    %228 = arith.mulf %108, %224 : vector<8x128xf32>
    %229 = vector.extract_strided_slice %179 {offsets = [6, 0], sizes = [1, 128], strides = [1, 1]} : vector<8x128xf32> to vector<1x128xf32>
    %230 = vector.broadcast %229 : vector<1x128xf32> to vector<8x128xf32>
    %231 = arith.mulf %109, %230 : vector<8x128xf32>
    %232 = arith.addf %228, %231 : vector<8x128xf32>
    %233 = arith.mulf %110, %232 : vector<8x128xf32>
    %cst_70 = arith.constant dense<0.000000e+00> : vector<128xf32>
    %234 = vector.multi_reduction <add>, %233, %cst_70 [0] : vector<8x128xf32> to vector<128xf32>
    %235 = vector.shape_cast %234 : vector<128xf32> to vector<1x128xf32>
    %236 = arith.mulf %108, %232 : vector<8x128xf32>
    %237 = vector.extract_strided_slice %179 {offsets = [7, 0], sizes = [1, 128], strides = [1, 1]} : vector<8x128xf32> to vector<1x128xf32>
    %238 = vector.broadcast %237 : vector<1x128xf32> to vector<8x128xf32>
    %239 = arith.mulf %109, %238 : vector<8x128xf32>
    %240 = arith.addf %236, %239 : vector<8x128xf32>
    %241 = arith.mulf %110, %240 : vector<8x128xf32>
    %cst_71 = arith.constant dense<0.000000e+00> : vector<128xf32>
    %242 = vector.multi_reduction <add>, %241, %cst_71 [0] : vector<8x128xf32> to vector<128xf32>
    %243 = vector.shape_cast %242 : vector<128xf32> to vector<1x128xf32>
    %244 = tpu.concatenate %187, %195, %203, %211, %219, %227, %235, %243 in 0 : vector<1x128xf32>, vector<1x128xf32>, vector<1x128xf32>, vector<1x128xf32>, vector<1x128xf32>, vector<1x128xf32>, vector<1x128xf32>, vector<1x128xf32> -> vector<8x128xf32>
    %c8_72 = arith.constant 8 : index
    %c0_73 = arith.constant 0 : index
    %245 = vector.load %arg15[%c8_72, %c0_73] : memref<64x128xf32, #tpu.memory_space<vmem>>, vector<8x128xf32>
    tpu.vector_store %arg15[%c8_72, %c0_73], %244 {strides = array<i32>} : memref<64x128xf32, #tpu.memory_space<vmem>>, vector<8x128xf32>,
    %c16_74 = arith.constant 16 : index
    %c0_75 = arith.constant 0 : index
    %246 = vector.load %arg14[%c16_74, %c0_75] : memref<64x128xf32, #tpu.memory_space<vmem>>, vector<8x128xf32>
    %247 = arith.mulf %108, %240 : vector<8x128xf32>
    %248 = vector.extract_strided_slice %246 {offsets = [0, 0], sizes = [1, 128], strides = [1, 1]} : vector<8x128xf32> to vector<1x128xf32>
    %249 = vector.broadcast %248 : vector<1x128xf32> to vector<8x128xf32>
    %250 = arith.mulf %109, %249 : vector<8x128xf32>
    %251 = arith.addf %247, %250 : vector<8x128xf32>
    %252 = arith.mulf %110, %251 : vector<8x128xf32>
    %cst_76 = arith.constant dense<0.000000e+00> : vector<128xf32>
    %253 = vector.multi_reduction <add>, %252, %cst_76 [0] : vector<8x128xf32> to vector<128xf32>
    %254 = vector.shape_cast %253 : vector<128xf32> to vector<1x128xf32>
    %255 = arith.mulf %108, %251 : vector<8x128xf32>
    %256 = vector.extract_strided_slice %246 {offsets = [1, 0], sizes = [1, 128], strides = [1, 1]} : vector<8x128xf32> to vector<1x128xf32>
    %257 = vector.broadcast %256 : vector<1x128xf32> to vector<8x128xf32>
    %258 = arith.mulf %109, %257 : vector<8x128xf32>
    %259 = arith.addf %255, %258 : vector<8x128xf32>
    %260 = arith.mulf %110, %259 : vector<8x128xf32>
    %cst_77 = arith.constant dense<0.000000e+00> : vector<128xf32>
    %261 = vector.multi_reduction <add>, %260, %cst_77 [0] : vector<8x128xf32> to vector<128xf32>
    %262 = vector.shape_cast %261 : vector<128xf32> to vector<1x128xf32>
    %263 = arith.mulf %108, %259 : vector<8x128xf32>
    %264 = vector.extract_strided_slice %246 {offsets = [2, 0], sizes = [1, 128], strides = [1, 1]} : vector<8x128xf32> to vector<1x128xf32>
    %265 = vector.broadcast %264 : vector<1x128xf32> to vector<8x128xf32>
    %266 = arith.mulf %109, %265 : vector<8x128xf32>
    %267 = arith.addf %263, %266 : vector<8x128xf32>
    %268 = arith.mulf %110, %267 : vector<8x128xf32>
    %cst_78 = arith.constant dense<0.000000e+00> : vector<128xf32>
    %269 = vector.multi_reduction <add>, %268, %cst_78 [0] : vector<8x128xf32> to vector<128xf32>
    %270 = vector.shape_cast %269 : vector<128xf32> to vector<1x128xf32>
    %271 = arith.mulf %108, %267 : vector<8x128xf32>
    %272 = vector.extract_strided_slice %246 {offsets = [3, 0], sizes = [1, 128], strides = [1, 1]} : vector<8x128xf32> to vector<1x128xf32>
    %273 = vector.broadcast %272 : vector<1x128xf32> to vector<8x128xf32>
    %274 = arith.mulf %109, %273 : vector<8x128xf32>
    %275 = arith.addf %271, %274 : vector<8x128xf32>
    %276 = arith.mulf %110, %275 : vector<8x128xf32>
    %cst_79 = arith.constant dense<0.000000e+00> : vector<128xf32>
    %277 = vector.multi_reduction <add>, %276, %cst_79 [0] : vector<8x128xf32> to vector<128xf32>
    %278 = vector.shape_cast %277 : vector<128xf32> to vector<1x128xf32>
    %279 = arith.mulf %108, %275 : vector<8x128xf32>
    %280 = vector.extract_strided_slice %246 {offsets = [4, 0], sizes = [1, 128], strides = [1, 1]} : vector<8x128xf32> to vector<1x128xf32>
    %281 = vector.broadcast %280 : vector<1x128xf32> to vector<8x128xf32>
    %282 = arith.mulf %109, %281 : vector<8x128xf32>
    %283 = arith.addf %279, %282 : vector<8x128xf32>
    %284 = arith.mulf %110, %283 : vector<8x128xf32>
    %cst_80 = arith.constant dense<0.000000e+00> : vector<128xf32>
    %285 = vector.multi_reduction <add>, %284, %cst_80 [0] : vector<8x128xf32> to vector<128xf32>
    %286 = vector.shape_cast %285 : vector<128xf32> to vector<1x128xf32>
    %287 = arith.mulf %108, %283 : vector<8x128xf32>
    %288 = vector.extract_strided_slice %246 {offsets = [5, 0], sizes = [1, 128], strides = [1, 1]} : vector<8x128xf32> to vector<1x128xf32>
    %289 = vector.broadcast %288 : vector<1x128xf32> to vector<8x128xf32>
    %290 = arith.mulf %109, %289 : vector<8x128xf32>
    %291 = arith.addf %287, %290 : vector<8x128xf32>
    %292 = arith.mulf %110, %291 : vector<8x128xf32>
    %cst_81 = arith.constant dense<0.000000e+00> : vector<128xf32>
    %293 = vector.multi_reduction <add>, %292, %cst_81 [0] : vector<8x128xf32> to vector<128xf32>
    %294 = vector.shape_cast %293 : vector<128xf32> to vector<1x128xf32>
    %295 = arith.mulf %108, %291 : vector<8x128xf32>
    %296 = vector.extract_strided_slice %246 {offsets = [6, 0], sizes = [1, 128], strides = [1, 1]} : vector<8x128xf32> to vector<1x128xf32>
    %297 = vector.broadcast %296 : vector<1x128xf32> to vector<8x128xf32>
    %298 = arith.mulf %109, %297 : vector<8x128xf32>
    %299 = arith.addf %295, %298 : vector<8x128xf32>
    %300 = arith.mulf %110, %299 : vector<8x128xf32>
    %cst_82 = arith.constant dense<0.000000e+00> : vector<128xf32>
    %301 = vector.multi_reduction <add>, %300, %cst_82 [0] : vector<8x128xf32> to vector<128xf32>
    %302 = vector.shape_cast %301 : vector<128xf32> to vector<1x128xf32>
    %303 = arith.mulf %108, %299 : vector<8x128xf32>
    %304 = vector.extract_strided_slice %246 {offsets = [7, 0], sizes = [1, 128], strides = [1, 1]} : vector<8x128xf32> to vector<1x128xf32>
    %305 = vector.broadcast %304 : vector<1x128xf32> to vector<8x128xf32>
    %306 = arith.mulf %109, %305 : vector<8x128xf32>
    %307 = arith.addf %303, %306 : vector<8x128xf32>
    %308 = arith.mulf %110, %307 : vector<8x128xf32>
    %cst_83 = arith.constant dense<0.000000e+00> : vector<128xf32>
    %309 = vector.multi_reduction <add>, %308, %cst_83 [0] : vector<8x128xf32> to vector<128xf32>
    %310 = vector.shape_cast %309 : vector<128xf32> to vector<1x128xf32>
    %311 = tpu.concatenate %254, %262, %270, %278, %286, %294, %302, %310 in 0 : vector<1x128xf32>, vector<1x128xf32>, vector<1x128xf32>, vector<1x128xf32>, vector<1x128xf32>, vector<1x128xf32>, vector<1x128xf32>, vector<1x128xf32> -> vector<8x128xf32>
    %c16_84 = arith.constant 16 : index
    %c0_85 = arith.constant 0 : index
    %312 = vector.load %arg15[%c16_84, %c0_85] : memref<64x128xf32, #tpu.memory_space<vmem>>, vector<8x128xf32>
    tpu.vector_store %arg15[%c16_84, %c0_85], %311 {strides = array<i32>} : memref<64x128xf32, #tpu.memory_space<vmem>>, vector<8x128xf32>,
    %c24 = arith.constant 24 : index
    %c0_86 = arith.constant 0 : index
    %313 = vector.load %arg14[%c24, %c0_86] : memref<64x128xf32, #tpu.memory_space<vmem>>, vector<8x128xf32>
    %314 = arith.mulf %108, %307 : vector<8x128xf32>
    %315 = vector.extract_strided_slice %313 {offsets = [0, 0], sizes = [1, 128], strides = [1, 1]} : vector<8x128xf32> to vector<1x128xf32>
    %316 = vector.broadcast %315 : vector<1x128xf32> to vector<8x128xf32>
    %317 = arith.mulf %109, %316 : vector<8x128xf32>
    %318 = arith.addf %314, %317 : vector<8x128xf32>
    %319 = arith.mulf %110, %318 : vector<8x128xf32>
    %cst_87 = arith.constant dense<0.000000e+00> : vector<128xf32>
    %320 = vector.multi_reduction <add>, %319, %cst_87 [0] : vector<8x128xf32> to vector<128xf32>
    %321 = vector.shape_cast %320 : vector<128xf32> to vector<1x128xf32>
    %322 = arith.mulf %108, %318 : vector<8x128xf32>
    %323 = vector.extract_strided_slice %313 {offsets = [1, 0], sizes = [1, 128], strides = [1, 1]} : vector<8x128xf32> to vector<1x128xf32>
    %324 = vector.broadcast %323 : vector<1x128xf32> to vector<8x128xf32>
    %325 = arith.mulf %109, %324 : vector<8x128xf32>
    %326 = arith.addf %322, %325 : vector<8x128xf32>
    %327 = arith.mulf %110, %326 : vector<8x128xf32>
    %cst_88 = arith.constant dense<0.000000e+00> : vector<128xf32>
    %328 = vector.multi_reduction <add>, %327, %cst_88 [0] : vector<8x128xf32> to vector<128xf32>
    %329 = vector.shape_cast %328 : vector<128xf32> to vector<1x128xf32>
    %330 = arith.mulf %108, %326 : vector<8x128xf32>
    %331 = vector.extract_strided_slice %313 {offsets = [2, 0], sizes = [1, 128], strides = [1, 1]} : vector<8x128xf32> to vector<1x128xf32>
    %332 = vector.broadcast %331 : vector<1x128xf32> to vector<8x128xf32>
    %333 = arith.mulf %109, %332 : vector<8x128xf32>
    %334 = arith.addf %330, %333 : vector<8x128xf32>
    %335 = arith.mulf %110, %334 : vector<8x128xf32>
    %cst_89 = arith.constant dense<0.000000e+00> : vector<128xf32>
    %336 = vector.multi_reduction <add>, %335, %cst_89 [0] : vector<8x128xf32> to vector<128xf32>
    %337 = vector.shape_cast %336 : vector<128xf32> to vector<1x128xf32>
    %338 = arith.mulf %108, %334 : vector<8x128xf32>
    %339 = vector.extract_strided_slice %313 {offsets = [3, 0], sizes = [1, 128], strides = [1, 1]} : vector<8x128xf32> to vector<1x128xf32>
    %340 = vector.broadcast %339 : vector<1x128xf32> to vector<8x128xf32>
    %341 = arith.mulf %109, %340 : vector<8x128xf32>
    %342 = arith.addf %338, %341 : vector<8x128xf32>
    %343 = arith.mulf %110, %342 : vector<8x128xf32>
    %cst_90 = arith.constant dense<0.000000e+00> : vector<128xf32>
    %344 = vector.multi_reduction <add>, %343, %cst_90 [0] : vector<8x128xf32> to vector<128xf32>
    %345 = vector.shape_cast %344 : vector<128xf32> to vector<1x128xf32>
    %346 = arith.mulf %108, %342 : vector<8x128xf32>
    %347 = vector.extract_strided_slice %313 {offsets = [4, 0], sizes = [1, 128], strides = [1, 1]} : vector<8x128xf32> to vector<1x128xf32>
    %348 = vector.broadcast %347 : vector<1x128xf32> to vector<8x128xf32>
    %349 = arith.mulf %109, %348 : vector<8x128xf32>
    %350 = arith.addf %346, %349 : vector<8x128xf32>
    %351 = arith.mulf %110, %350 : vector<8x128xf32>
    %cst_91 = arith.constant dense<0.000000e+00> : vector<128xf32>
    %352 = vector.multi_reduction <add>, %351, %cst_91 [0] : vector<8x128xf32> to vector<128xf32>
    %353 = vector.shape_cast %352 : vector<128xf32> to vector<1x128xf32>
    %354 = arith.mulf %108, %350 : vector<8x128xf32>
    %355 = vector.extract_strided_slice %313 {offsets = [5, 0], sizes = [1, 128], strides = [1, 1]} : vector<8x128xf32> to vector<1x128xf32>
    %356 = vector.broadcast %355 : vector<1x128xf32> to vector<8x128xf32>
    %357 = arith.mulf %109, %356 : vector<8x128xf32>
    %358 = arith.addf %354, %357 : vector<8x128xf32>
    %359 = arith.mulf %110, %358 : vector<8x128xf32>
    %cst_92 = arith.constant dense<0.000000e+00> : vector<128xf32>
    %360 = vector.multi_reduction <add>, %359, %cst_92 [0] : vector<8x128xf32> to vector<128xf32>
    %361 = vector.shape_cast %360 : vector<128xf32> to vector<1x128xf32>
    %362 = arith.mulf %108, %358 : vector<8x128xf32>
    %363 = vector.extract_strided_slice %313 {offsets = [6, 0], sizes = [1, 128], strides = [1, 1]} : vector<8x128xf32> to vector<1x128xf32>
    %364 = vector.broadcast %363 : vector<1x128xf32> to vector<8x128xf32>
    %365 = arith.mulf %109, %364 : vector<8x128xf32>
    %366 = arith.addf %362, %365 : vector<8x128xf32>
    %367 = arith.mulf %110, %366 : vector<8x128xf32>
    %cst_93 = arith.constant dense<0.000000e+00> : vector<128xf32>
    %368 = vector.multi_reduction <add>, %367, %cst_93 [0] : vector<8x128xf32> to vector<128xf32>
    %369 = vector.shape_cast %368 : vector<128xf32> to vector<1x128xf32>
    %370 = arith.mulf %108, %366 : vector<8x128xf32>
    %371 = vector.extract_strided_slice %313 {offsets = [7, 0], sizes = [1, 128], strides = [1, 1]} : vector<8x128xf32> to vector<1x128xf32>
    %372 = vector.broadcast %371 : vector<1x128xf32> to vector<8x128xf32>
    %373 = arith.mulf %109, %372 : vector<8x128xf32>
    %374 = arith.addf %370, %373 : vector<8x128xf32>
    %375 = arith.mulf %110, %374 : vector<8x128xf32>
    %cst_94 = arith.constant dense<0.000000e+00> : vector<128xf32>
    %376 = vector.multi_reduction <add>, %375, %cst_94 [0] : vector<8x128xf32> to vector<128xf32>
    %377 = vector.shape_cast %376 : vector<128xf32> to vector<1x128xf32>
    %378 = tpu.concatenate %321, %329, %337, %345, %353, %361, %369, %377 in 0 : vector<1x128xf32>, vector<1x128xf32>, vector<1x128xf32>, vector<1x128xf32>, vector<1x128xf32>, vector<1x128xf32>, vector<1x128xf32>, vector<1x128xf32> -> vector<8x128xf32>
    %c24_95 = arith.constant 24 : index
    %c0_96 = arith.constant 0 : index
    %379 = vector.load %arg15[%c24_95, %c0_96] : memref<64x128xf32, #tpu.memory_space<vmem>>, vector<8x128xf32>
    tpu.vector_store %arg15[%c24_95, %c0_96], %378 {strides = array<i32>} : memref<64x128xf32, #tpu.memory_space<vmem>>, vector<8x128xf32>,
    %c32_97 = arith.constant 32 : index
    %c0_98 = arith.constant 0 : index
    %380 = vector.load %arg14[%c32_97, %c0_98] : memref<64x128xf32, #tpu.memory_space<vmem>>, vector<8x128xf32>
    %381 = arith.mulf %108, %374 : vector<8x128xf32>
    %382 = vector.extract_strided_slice %380 {offsets = [0, 0], sizes = [1, 128], strides = [1, 1]} : vector<8x128xf32> to vector<1x128xf32>
    %383 = vector.broadcast %382 : vector<1x128xf32> to vector<8x128xf32>
    %384 = arith.mulf %109, %383 : vector<8x128xf32>
    %385 = arith.addf %381, %384 : vector<8x128xf32>
    %386 = arith.mulf %110, %385 : vector<8x128xf32>
    %cst_99 = arith.constant dense<0.000000e+00> : vector<128xf32>
    %387 = vector.multi_reduction <add>, %386, %cst_99 [0] : vector<8x128xf32> to vector<128xf32>
    %388 = vector.shape_cast %387 : vector<128xf32> to vector<1x128xf32>
    %389 = arith.mulf %108, %385 : vector<8x128xf32>
    %390 = vector.extract_strided_slice %380 {offsets = [1, 0], sizes = [1, 128], strides = [1, 1]} : vector<8x128xf32> to vector<1x128xf32>
    %391 = vector.broadcast %390 : vector<1x128xf32> to vector<8x128xf32>
    %392 = arith.mulf %109, %391 : vector<8x128xf32>
    %393 = arith.addf %389, %392 : vector<8x128xf32>
    %394 = arith.mulf %110, %393 : vector<8x128xf32>
    %cst_100 = arith.constant dense<0.000000e+00> : vector<128xf32>
    %395 = vector.multi_reduction <add>, %394, %cst_100 [0] : vector<8x128xf32> to vector<128xf32>
    %396 = vector.shape_cast %395 : vector<128xf32> to vector<1x128xf32>
    %397 = arith.mulf %108, %393 : vector<8x128xf32>
    %398 = vector.extract_strided_slice %380 {offsets = [2, 0], sizes = [1, 128], strides = [1, 1]} : vector<8x128xf32> to vector<1x128xf32>
    %399 = vector.broadcast %398 : vector<1x128xf32> to vector<8x128xf32>
    %400 = arith.mulf %109, %399 : vector<8x128xf32>
    %401 = arith.addf %397, %400 : vector<8x128xf32>
    %402 = arith.mulf %110, %401 : vector<8x128xf32>
    %cst_101 = arith.constant dense<0.000000e+00> : vector<128xf32>
    %403 = vector.multi_reduction <add>, %402, %cst_101 [0] : vector<8x128xf32> to vector<128xf32>
    %404 = vector.shape_cast %403 : vector<128xf32> to vector<1x128xf32>
    %405 = arith.mulf %108, %401 : vector<8x128xf32>
    %406 = vector.extract_strided_slice %380 {offsets = [3, 0], sizes = [1, 128], strides = [1, 1]} : vector<8x128xf32> to vector<1x128xf32>
    %407 = vector.broadcast %406 : vector<1x128xf32> to vector<8x128xf32>
    %408 = arith.mulf %109, %407 : vector<8x128xf32>
    %409 = arith.addf %405, %408 : vector<8x128xf32>
    %410 = arith.mulf %110, %409 : vector<8x128xf32>
    %cst_102 = arith.constant dense<0.000000e+00> : vector<128xf32>
    %411 = vector.multi_reduction <add>, %410, %cst_102 [0] : vector<8x128xf32> to vector<128xf32>
    %412 = vector.shape_cast %411 : vector<128xf32> to vector<1x128xf32>
    %413 = arith.mulf %108, %409 : vector<8x128xf32>
    %414 = vector.extract_strided_slice %380 {offsets = [4, 0], sizes = [1, 128], strides = [1, 1]} : vector<8x128xf32> to vector<1x128xf32>
    %415 = vector.broadcast %414 : vector<1x128xf32> to vector<8x128xf32>
    %416 = arith.mulf %109, %415 : vector<8x128xf32>
    %417 = arith.addf %413, %416 : vector<8x128xf32>
    %418 = arith.mulf %110, %417 : vector<8x128xf32>
    %cst_103 = arith.constant dense<0.000000e+00> : vector<128xf32>
    %419 = vector.multi_reduction <add>, %418, %cst_103 [0] : vector<8x128xf32> to vector<128xf32>
    %420 = vector.shape_cast %419 : vector<128xf32> to vector<1x128xf32>
    %421 = arith.mulf %108, %417 : vector<8x128xf32>
    %422 = vector.extract_strided_slice %380 {offsets = [5, 0], sizes = [1, 128], strides = [1, 1]} : vector<8x128xf32> to vector<1x128xf32>
    %423 = vector.broadcast %422 : vector<1x128xf32> to vector<8x128xf32>
    %424 = arith.mulf %109, %423 : vector<8x128xf32>
    %425 = arith.addf %421, %424 : vector<8x128xf32>
    %426 = arith.mulf %110, %425 : vector<8x128xf32>
    %cst_104 = arith.constant dense<0.000000e+00> : vector<128xf32>
    %427 = vector.multi_reduction <add>, %426, %cst_104 [0] : vector<8x128xf32> to vector<128xf32>
    %428 = vector.shape_cast %427 : vector<128xf32> to vector<1x128xf32>
    %429 = arith.mulf %108, %425 : vector<8x128xf32>
    %430 = vector.extract_strided_slice %380 {offsets = [6, 0], sizes = [1, 128], strides = [1, 1]} : vector<8x128xf32> to vector<1x128xf32>
    %431 = vector.broadcast %430 : vector<1x128xf32> to vector<8x128xf32>
    %432 = arith.mulf %109, %431 : vector<8x128xf32>
    %433 = arith.addf %429, %432 : vector<8x128xf32>
    %434 = arith.mulf %110, %433 : vector<8x128xf32>
    %cst_105 = arith.constant dense<0.000000e+00> : vector<128xf32>
    %435 = vector.multi_reduction <add>, %434, %cst_105 [0] : vector<8x128xf32> to vector<128xf32>
    %436 = vector.shape_cast %435 : vector<128xf32> to vector<1x128xf32>
    %437 = arith.mulf %108, %433 : vector<8x128xf32>
    %438 = vector.extract_strided_slice %380 {offsets = [7, 0], sizes = [1, 128], strides = [1, 1]} : vector<8x128xf32> to vector<1x128xf32>
    %439 = vector.broadcast %438 : vector<1x128xf32> to vector<8x128xf32>
    %440 = arith.mulf %109, %439 : vector<8x128xf32>
    %441 = arith.addf %437, %440 : vector<8x128xf32>
    %442 = arith.mulf %110, %441 : vector<8x128xf32>
    %cst_106 = arith.constant dense<0.000000e+00> : vector<128xf32>
    %443 = vector.multi_reduction <add>, %442, %cst_106 [0] : vector<8x128xf32> to vector<128xf32>
    %444 = vector.shape_cast %443 : vector<128xf32> to vector<1x128xf32>
    %445 = tpu.concatenate %388, %396, %404, %412, %420, %428, %436, %444 in 0 : vector<1x128xf32>, vector<1x128xf32>, vector<1x128xf32>, vector<1x128xf32>, vector<1x128xf32>, vector<1x128xf32>, vector<1x128xf32>, vector<1x128xf32> -> vector<8x128xf32>
    %c32_107 = arith.constant 32 : index
    %c0_108 = arith.constant 0 : index
    %446 = vector.load %arg15[%c32_107, %c0_108] : memref<64x128xf32, #tpu.memory_space<vmem>>, vector<8x128xf32>
    tpu.vector_store %arg15[%c32_107, %c0_108], %445 {strides = array<i32>} : memref<64x128xf32, #tpu.memory_space<vmem>>, vector<8x128xf32>,
    %c40 = arith.constant 40 : index
    %c0_109 = arith.constant 0 : index
    %447 = vector.load %arg14[%c40, %c0_109] : memref<64x128xf32, #tpu.memory_space<vmem>>, vector<8x128xf32>
    %448 = arith.mulf %108, %441 : vector<8x128xf32>
    %449 = vector.extract_strided_slice %447 {offsets = [0, 0], sizes = [1, 128], strides = [1, 1]} : vector<8x128xf32> to vector<1x128xf32>
    %450 = vector.broadcast %449 : vector<1x128xf32> to vector<8x128xf32>
    %451 = arith.mulf %109, %450 : vector<8x128xf32>
    %452 = arith.addf %448, %451 : vector<8x128xf32>
    %453 = arith.mulf %110, %452 : vector<8x128xf32>
    %cst_110 = arith.constant dense<0.000000e+00> : vector<128xf32>
    %454 = vector.multi_reduction <add>, %453, %cst_110 [0] : vector<8x128xf32> to vector<128xf32>
    %455 = vector.shape_cast %454 : vector<128xf32> to vector<1x128xf32>
    %456 = arith.mulf %108, %452 : vector<8x128xf32>
    %457 = vector.extract_strided_slice %447 {offsets = [1, 0], sizes = [1, 128], strides = [1, 1]} : vector<8x128xf32> to vector<1x128xf32>
    %458 = vector.broadcast %457 : vector<1x128xf32> to vector<8x128xf32>
    %459 = arith.mulf %109, %458 : vector<8x128xf32>
    %460 = arith.addf %456, %459 : vector<8x128xf32>
    %461 = arith.mulf %110, %460 : vector<8x128xf32>
    %cst_111 = arith.constant dense<0.000000e+00> : vector<128xf32>
    %462 = vector.multi_reduction <add>, %461, %cst_111 [0] : vector<8x128xf32> to vector<128xf32>
    %463 = vector.shape_cast %462 : vector<128xf32> to vector<1x128xf32>
    %464 = arith.mulf %108, %460 : vector<8x128xf32>
    %465 = vector.extract_strided_slice %447 {offsets = [2, 0], sizes = [1, 128], strides = [1, 1]} : vector<8x128xf32> to vector<1x128xf32>
    %466 = vector.broadcast %465 : vector<1x128xf32> to vector<8x128xf32>
    %467 = arith.mulf %109, %466 : vector<8x128xf32>
    %468 = arith.addf %464, %467 : vector<8x128xf32>
    %469 = arith.mulf %110, %468 : vector<8x128xf32>
    %cst_112 = arith.constant dense<0.000000e+00> : vector<128xf32>
    %470 = vector.multi_reduction <add>, %469, %cst_112 [0] : vector<8x128xf32> to vector<128xf32>
    %471 = vector.shape_cast %470 : vector<128xf32> to vector<1x128xf32>
    %472 = arith.mulf %108, %468 : vector<8x128xf32>
    %473 = vector.extract_strided_slice %447 {offsets = [3, 0], sizes = [1, 128], strides = [1, 1]} : vector<8x128xf32> to vector<1x128xf32>
    %474 = vector.broadcast %473 : vector<1x128xf32> to vector<8x128xf32>
    %475 = arith.mulf %109, %474 : vector<8x128xf32>
    %476 = arith.addf %472, %475 : vector<8x128xf32>
    %477 = arith.mulf %110, %476 : vector<8x128xf32>
    %cst_113 = arith.constant dense<0.000000e+00> : vector<128xf32>
    %478 = vector.multi_reduction <add>, %477, %cst_113 [0] : vector<8x128xf32> to vector<128xf32>
    %479 = vector.shape_cast %478 : vector<128xf32> to vector<1x128xf32>
    %480 = arith.mulf %108, %476 : vector<8x128xf32>
    %481 = vector.extract_strided_slice %447 {offsets = [4, 0], sizes = [1, 128], strides = [1, 1]} : vector<8x128xf32> to vector<1x128xf32>
    %482 = vector.broadcast %481 : vector<1x128xf32> to vector<8x128xf32>
    %483 = arith.mulf %109, %482 : vector<8x128xf32>
    %484 = arith.addf %480, %483 : vector<8x128xf32>
    %485 = arith.mulf %110, %484 : vector<8x128xf32>
    %cst_114 = arith.constant dense<0.000000e+00> : vector<128xf32>
    %486 = vector.multi_reduction <add>, %485, %cst_114 [0] : vector<8x128xf32> to vector<128xf32>
    %487 = vector.shape_cast %486 : vector<128xf32> to vector<1x128xf32>
    %488 = arith.mulf %108, %484 : vector<8x128xf32>
    %489 = vector.extract_strided_slice %447 {offsets = [5, 0], sizes = [1, 128], strides = [1, 1]} : vector<8x128xf32> to vector<1x128xf32>
    %490 = vector.broadcast %489 : vector<1x128xf32> to vector<8x128xf32>
    %491 = arith.mulf %109, %490 : vector<8x128xf32>
    %492 = arith.addf %488, %491 : vector<8x128xf32>
    %493 = arith.mulf %110, %492 : vector<8x128xf32>
    %cst_115 = arith.constant dense<0.000000e+00> : vector<128xf32>
    %494 = vector.multi_reduction <add>, %493, %cst_115 [0] : vector<8x128xf32> to vector<128xf32>
    %495 = vector.shape_cast %494 : vector<128xf32> to vector<1x128xf32>
    %496 = arith.mulf %108, %492 : vector<8x128xf32>
    %497 = vector.extract_strided_slice %447 {offsets = [6, 0], sizes = [1, 128], strides = [1, 1]} : vector<8x128xf32> to vector<1x128xf32>
    %498 = vector.broadcast %497 : vector<1x128xf32> to vector<8x128xf32>
    %499 = arith.mulf %109, %498 : vector<8x128xf32>
    %500 = arith.addf %496, %499 : vector<8x128xf32>
    %501 = arith.mulf %110, %500 : vector<8x128xf32>
    %cst_116 = arith.constant dense<0.000000e+00> : vector<128xf32>
    %502 = vector.multi_reduction <add>, %501, %cst_116 [0] : vector<8x128xf32> to vector<128xf32>
    %503 = vector.shape_cast %502 : vector<128xf32> to vector<1x128xf32>
    %504 = arith.mulf %108, %500 : vector<8x128xf32>
    %505 = vector.extract_strided_slice %447 {offsets = [7, 0], sizes = [1, 128], strides = [1, 1]} : vector<8x128xf32> to vector<1x128xf32>
    %506 = vector.broadcast %505 : vector<1x128xf32> to vector<8x128xf32>
    %507 = arith.mulf %109, %506 : vector<8x128xf32>
    %508 = arith.addf %504, %507 : vector<8x128xf32>
    %509 = arith.mulf %110, %508 : vector<8x128xf32>
    %cst_117 = arith.constant dense<0.000000e+00> : vector<128xf32>
    %510 = vector.multi_reduction <add>, %509, %cst_117 [0] : vector<8x128xf32> to vector<128xf32>
    %511 = vector.shape_cast %510 : vector<128xf32> to vector<1x128xf32>
    %512 = tpu.concatenate %455, %463, %471, %479, %487, %495, %503, %511 in 0 : vector<1x128xf32>, vector<1x128xf32>, vector<1x128xf32>, vector<1x128xf32>, vector<1x128xf32>, vector<1x128xf32>, vector<1x128xf32>, vector<1x128xf32> -> vector<8x128xf32>
    %c40_118 = arith.constant 40 : index
    %c0_119 = arith.constant 0 : index
    %513 = vector.load %arg15[%c40_118, %c0_119] : memref<64x128xf32, #tpu.memory_space<vmem>>, vector<8x128xf32>
    tpu.vector_store %arg15[%c40_118, %c0_119], %512 {strides = array<i32>} : memref<64x128xf32, #tpu.memory_space<vmem>>, vector<8x128xf32>,
    %c48 = arith.constant 48 : index
    %c0_120 = arith.constant 0 : index
    %514 = vector.load %arg14[%c48, %c0_120] : memref<64x128xf32, #tpu.memory_space<vmem>>, vector<8x128xf32>
    %515 = arith.mulf %108, %508 : vector<8x128xf32>
    %516 = vector.extract_strided_slice %514 {offsets = [0, 0], sizes = [1, 128], strides = [1, 1]} : vector<8x128xf32> to vector<1x128xf32>
    %517 = vector.broadcast %516 : vector<1x128xf32> to vector<8x128xf32>
    %518 = arith.mulf %109, %517 : vector<8x128xf32>
    %519 = arith.addf %515, %518 : vector<8x128xf32>
    %520 = arith.mulf %110, %519 : vector<8x128xf32>
    %cst_121 = arith.constant dense<0.000000e+00> : vector<128xf32>
    %521 = vector.multi_reduction <add>, %520, %cst_121 [0] : vector<8x128xf32> to vector<128xf32>
    %522 = vector.shape_cast %521 : vector<128xf32> to vector<1x128xf32>
    %523 = arith.mulf %108, %519 : vector<8x128xf32>
    %524 = vector.extract_strided_slice %514 {offsets = [1, 0], sizes = [1, 128], strides = [1, 1]} : vector<8x128xf32> to vector<1x128xf32>
    %525 = vector.broadcast %524 : vector<1x128xf32> to vector<8x128xf32>
    %526 = arith.mulf %109, %525 : vector<8x128xf32>
    %527 = arith.addf %523, %526 : vector<8x128xf32>
    %528 = arith.mulf %110, %527 : vector<8x128xf32>
    %cst_122 = arith.constant dense<0.000000e+00> : vector<128xf32>
    %529 = vector.multi_reduction <add>, %528, %cst_122 [0] : vector<8x128xf32> to vector<128xf32>
    %530 = vector.shape_cast %529 : vector<128xf32> to vector<1x128xf32>
    %531 = arith.mulf %108, %527 : vector<8x128xf32>
    %532 = vector.extract_strided_slice %514 {offsets = [2, 0], sizes = [1, 128], strides = [1, 1]} : vector<8x128xf32> to vector<1x128xf32>
    %533 = vector.broadcast %532 : vector<1x128xf32> to vector<8x128xf32>
    %534 = arith.mulf %109, %533 : vector<8x128xf32>
    %535 = arith.addf %531, %534 : vector<8x128xf32>
    %536 = arith.mulf %110, %535 : vector<8x128xf32>
    %cst_123 = arith.constant dense<0.000000e+00> : vector<128xf32>
    %537 = vector.multi_reduction <add>, %536, %cst_123 [0] : vector<8x128xf32> to vector<128xf32>
    %538 = vector.shape_cast %537 : vector<128xf32> to vector<1x128xf32>
    %539 = arith.mulf %108, %535 : vector<8x128xf32>
    %540 = vector.extract_strided_slice %514 {offsets = [3, 0], sizes = [1, 128], strides = [1, 1]} : vector<8x128xf32> to vector<1x128xf32>
    %541 = vector.broadcast %540 : vector<1x128xf32> to vector<8x128xf32>
    %542 = arith.mulf %109, %541 : vector<8x128xf32>
    %543 = arith.addf %539, %542 : vector<8x128xf32>
    %544 = arith.mulf %110, %543 : vector<8x128xf32>
    %cst_124 = arith.constant dense<0.000000e+00> : vector<128xf32>
    %545 = vector.multi_reduction <add>, %544, %cst_124 [0] : vector<8x128xf32> to vector<128xf32>
    %546 = vector.shape_cast %545 : vector<128xf32> to vector<1x128xf32>
    %547 = arith.mulf %108, %543 : vector<8x128xf32>
    %548 = vector.extract_strided_slice %514 {offsets = [4, 0], sizes = [1, 128], strides = [1, 1]} : vector<8x128xf32> to vector<1x128xf32>
    %549 = vector.broadcast %548 : vector<1x128xf32> to vector<8x128xf32>
    %550 = arith.mulf %109, %549 : vector<8x128xf32>
    %551 = arith.addf %547, %550 : vector<8x128xf32>
    %552 = arith.mulf %110, %551 : vector<8x128xf32>
    %cst_125 = arith.constant dense<0.000000e+00> : vector<128xf32>
    %553 = vector.multi_reduction <add>, %552, %cst_125 [0] : vector<8x128xf32> to vector<128xf32>
    %554 = vector.shape_cast %553 : vector<128xf32> to vector<1x128xf32>
    %555 = arith.mulf %108, %551 : vector<8x128xf32>
    %556 = vector.extract_strided_slice %514 {offsets = [5, 0], sizes = [1, 128], strides = [1, 1]} : vector<8x128xf32> to vector<1x128xf32>
    %557 = vector.broadcast %556 : vector<1x128xf32> to vector<8x128xf32>
    %558 = arith.mulf %109, %557 : vector<8x128xf32>
    %559 = arith.addf %555, %558 : vector<8x128xf32>
    %560 = arith.mulf %110, %559 : vector<8x128xf32>
    %cst_126 = arith.constant dense<0.000000e+00> : vector<128xf32>
    %561 = vector.multi_reduction <add>, %560, %cst_126 [0] : vector<8x128xf32> to vector<128xf32>
    %562 = vector.shape_cast %561 : vector<128xf32> to vector<1x128xf32>
    %563 = arith.mulf %108, %559 : vector<8x128xf32>
    %564 = vector.extract_strided_slice %514 {offsets = [6, 0], sizes = [1, 128], strides = [1, 1]} : vector<8x128xf32> to vector<1x128xf32>
    %565 = vector.broadcast %564 : vector<1x128xf32> to vector<8x128xf32>
    %566 = arith.mulf %109, %565 : vector<8x128xf32>
    %567 = arith.addf %563, %566 : vector<8x128xf32>
    %568 = arith.mulf %110, %567 : vector<8x128xf32>
    %cst_127 = arith.constant dense<0.000000e+00> : vector<128xf32>
    %569 = vector.multi_reduction <add>, %568, %cst_127 [0] : vector<8x128xf32> to vector<128xf32>
    %570 = vector.shape_cast %569 : vector<128xf32> to vector<1x128xf32>
    %571 = arith.mulf %108, %567 : vector<8x128xf32>
    %572 = vector.extract_strided_slice %514 {offsets = [7, 0], sizes = [1, 128], strides = [1, 1]} : vector<8x128xf32> to vector<1x128xf32>
    %573 = vector.broadcast %572 : vector<1x128xf32> to vector<8x128xf32>
    %574 = arith.mulf %109, %573 : vector<8x128xf32>
    %575 = arith.addf %571, %574 : vector<8x128xf32>
    %576 = arith.mulf %110, %575 : vector<8x128xf32>
    %cst_128 = arith.constant dense<0.000000e+00> : vector<128xf32>
    %577 = vector.multi_reduction <add>, %576, %cst_128 [0] : vector<8x128xf32> to vector<128xf32>
    %578 = vector.shape_cast %577 : vector<128xf32> to vector<1x128xf32>
    %579 = tpu.concatenate %522, %530, %538, %546, %554, %562, %570, %578 in 0 : vector<1x128xf32>, vector<1x128xf32>, vector<1x128xf32>, vector<1x128xf32>, vector<1x128xf32>, vector<1x128xf32>, vector<1x128xf32>, vector<1x128xf32> -> vector<8x128xf32>
    %c48_129 = arith.constant 48 : index
    %c0_130 = arith.constant 0 : index
    %580 = vector.load %arg15[%c48_129, %c0_130] : memref<64x128xf32, #tpu.memory_space<vmem>>, vector<8x128xf32>
    tpu.vector_store %arg15[%c48_129, %c0_130], %579 {strides = array<i32>} : memref<64x128xf32, #tpu.memory_space<vmem>>, vector<8x128xf32>,
    %c56 = arith.constant 56 : index
    %c0_131 = arith.constant 0 : index
    %581 = vector.load %arg14[%c56, %c0_131] : memref<64x128xf32, #tpu.memory_space<vmem>>, vector<8x128xf32>
    %582 = arith.mulf %108, %575 : vector<8x128xf32>
    %583 = vector.extract_strided_slice %581 {offsets = [0, 0], sizes = [1, 128], strides = [1, 1]} : vector<8x128xf32> to vector<1x128xf32>
    %584 = vector.broadcast %583 : vector<1x128xf32> to vector<8x128xf32>
    %585 = arith.mulf %109, %584 : vector<8x128xf32>
    %586 = arith.addf %582, %585 : vector<8x128xf32>
    %587 = arith.mulf %110, %586 : vector<8x128xf32>
    %cst_132 = arith.constant dense<0.000000e+00> : vector<128xf32>
    %588 = vector.multi_reduction <add>, %587, %cst_132 [0] : vector<8x128xf32> to vector<128xf32>
    %589 = vector.shape_cast %588 : vector<128xf32> to vector<1x128xf32>
    %590 = arith.mulf %108, %586 : vector<8x128xf32>
    %591 = vector.extract_strided_slice %581 {offsets = [1, 0], sizes = [1, 128], strides = [1, 1]} : vector<8x128xf32> to vector<1x128xf32>
    %592 = vector.broadcast %591 : vector<1x128xf32> to vector<8x128xf32>
    %593 = arith.mulf %109, %592 : vector<8x128xf32>
    %594 = arith.addf %590, %593 : vector<8x128xf32>
    %595 = arith.mulf %110, %594 : vector<8x128xf32>
    %cst_133 = arith.constant dense<0.000000e+00> : vector<128xf32>
    %596 = vector.multi_reduction <add>, %595, %cst_133 [0] : vector<8x128xf32> to vector<128xf32>
    %597 = vector.shape_cast %596 : vector<128xf32> to vector<1x128xf32>
    %598 = arith.mulf %108, %594 : vector<8x128xf32>
    %599 = vector.extract_strided_slice %581 {offsets = [2, 0], sizes = [1, 128], strides = [1, 1]} : vector<8x128xf32> to vector<1x128xf32>
    %600 = vector.broadcast %599 : vector<1x128xf32> to vector<8x128xf32>
    %601 = arith.mulf %109, %600 : vector<8x128xf32>
    %602 = arith.addf %598, %601 : vector<8x128xf32>
    %603 = arith.mulf %110, %602 : vector<8x128xf32>
    %cst_134 = arith.constant dense<0.000000e+00> : vector<128xf32>
    %604 = vector.multi_reduction <add>, %603, %cst_134 [0] : vector<8x128xf32> to vector<128xf32>
    %605 = vector.shape_cast %604 : vector<128xf32> to vector<1x128xf32>
    %606 = arith.mulf %108, %602 : vector<8x128xf32>
    %607 = vector.extract_strided_slice %581 {offsets = [3, 0], sizes = [1, 128], strides = [1, 1]} : vector<8x128xf32> to vector<1x128xf32>
    %608 = vector.broadcast %607 : vector<1x128xf32> to vector<8x128xf32>
    %609 = arith.mulf %109, %608 : vector<8x128xf32>
    %610 = arith.addf %606, %609 : vector<8x128xf32>
    %611 = arith.mulf %110, %610 : vector<8x128xf32>
    %cst_135 = arith.constant dense<0.000000e+00> : vector<128xf32>
    %612 = vector.multi_reduction <add>, %611, %cst_135 [0] : vector<8x128xf32> to vector<128xf32>
    %613 = vector.shape_cast %612 : vector<128xf32> to vector<1x128xf32>
    %614 = arith.mulf %108, %610 : vector<8x128xf32>
    %615 = vector.extract_strided_slice %581 {offsets = [4, 0], sizes = [1, 128], strides = [1, 1]} : vector<8x128xf32> to vector<1x128xf32>
    %616 = vector.broadcast %615 : vector<1x128xf32> to vector<8x128xf32>
    %617 = arith.mulf %109, %616 : vector<8x128xf32>
    %618 = arith.addf %614, %617 : vector<8x128xf32>
    %619 = arith.mulf %110, %618 : vector<8x128xf32>
    %cst_136 = arith.constant dense<0.000000e+00> : vector<128xf32>
    %620 = vector.multi_reduction <add>, %619, %cst_136 [0] : vector<8x128xf32> to vector<128xf32>
    %621 = vector.shape_cast %620 : vector<128xf32> to vector<1x128xf32>
    %622 = arith.mulf %108, %618 : vector<8x128xf32>
    %623 = vector.extract_strided_slice %581 {offsets = [5, 0], sizes = [1, 128], strides = [1, 1]} : vector<8x128xf32> to vector<1x128xf32>
    %624 = vector.broadcast %623 : vector<1x128xf32> to vector<8x128xf32>
    %625 = arith.mulf %109, %624 : vector<8x128xf32>
    %626 = arith.addf %622, %625 : vector<8x128xf32>
    %627 = arith.mulf %110, %626 : vector<8x128xf32>
    %cst_137 = arith.constant dense<0.000000e+00> : vector<128xf32>
    %628 = vector.multi_reduction <add>, %627, %cst_137 [0] : vector<8x128xf32> to vector<128xf32>
    %629 = vector.shape_cast %628 : vector<128xf32> to vector<1x128xf32>
    %630 = arith.mulf %108, %626 : vector<8x128xf32>
    %631 = vector.extract_strided_slice %581 {offsets = [6, 0], sizes = [1, 128], strides = [1, 1]} : vector<8x128xf32> to vector<1x128xf32>
    %632 = vector.broadcast %631 : vector<1x128xf32> to vector<8x128xf32>
    %633 = arith.mulf %109, %632 : vector<8x128xf32>
    %634 = arith.addf %630, %633 : vector<8x128xf32>
    %635 = arith.mulf %110, %634 : vector<8x128xf32>
    %cst_138 = arith.constant dense<0.000000e+00> : vector<128xf32>
    %636 = vector.multi_reduction <add>, %635, %cst_138 [0] : vector<8x128xf32> to vector<128xf32>
    %637 = vector.shape_cast %636 : vector<128xf32> to vector<1x128xf32>
    %638 = arith.mulf %108, %634 : vector<8x128xf32>
    %639 = vector.extract_strided_slice %581 {offsets = [7, 0], sizes = [1, 128], strides = [1, 1]} : vector<8x128xf32> to vector<1x128xf32>
    %640 = vector.broadcast %639 : vector<1x128xf32> to vector<8x128xf32>
    %641 = arith.mulf %109, %640 : vector<8x128xf32>
    %642 = arith.addf %638, %641 : vector<8x128xf32>
    %643 = arith.mulf %110, %642 : vector<8x128xf32>
    %cst_139 = arith.constant dense<0.000000e+00> : vector<128xf32>
    %644 = vector.multi_reduction <add>, %643, %cst_139 [0] : vector<8x128xf32> to vector<128xf32>
    %645 = vector.shape_cast %644 : vector<128xf32> to vector<1x128xf32>
    %646 = tpu.concatenate %589, %597, %605, %613, %621, %629, %637, %645 in 0 : vector<1x128xf32>, vector<1x128xf32>, vector<1x128xf32>, vector<1x128xf32>, vector<1x128xf32>, vector<1x128xf32>, vector<1x128xf32>, vector<1x128xf32> -> vector<8x128xf32>
    %c56_140 = arith.constant 56 : index
    %c0_141 = arith.constant 0 : index
    %647 = vector.load %arg15[%c56_140, %c0_141] : memref<64x128xf32, #tpu.memory_space<vmem>>, vector<8x128xf32>
    tpu.vector_store %arg15[%c56_140, %c0_141], %646 {strides = array<i32>} : memref<64x128xf32, #tpu.memory_space<vmem>>, vector<8x128xf32>,
    %c0_142 = arith.constant 0 : index
    %c0_143 = arith.constant 0 : index
    %648 = vector.load %arg15[%c0_142, %c0_143] : memref<64x128xf32, #tpu.memory_space<vmem>>, vector<64x128xf32>
    %649 = vector.extract_strided_slice %648 {offsets = [0, 0], sizes = [64, 64], strides = [1, 1]} : vector<64x128xf32> to vector<64x64xf32>
    %650 = vector.extract_strided_slice %648 {offsets = [0, 64], sizes = [64, 64], strides = [1, 1]} : vector<64x128xf32> to vector<64x64xf32>
    %cst_144 = arith.constant dense<0.000000e+00> : vector<64x64xf32>
    %651 = tpu.matmul %101, %650, %cst_144 {dimension_numbers = #tpu.dot_dimension_numbers<[1], [0], [0], [1], [0, 0, 1, 1], [], []>} : vector<64x64xf32>, vector<64x64xf32>, vector<64x64xf32> -> vector<64x64xf32>
    %652 = arith.addf %649, %651 : vector<64x64xf32>
    %653 = vector.extract_strided_slice %652 {offsets = [0, 0], sizes = [64, 32], strides = [1, 1]} : vector<64x64xf32> to vector<64x32xf32>
    %654 = vector.extract_strided_slice %652 {offsets = [0, 32], sizes = [64, 32], strides = [1, 1]} : vector<64x64xf32> to vector<64x32xf32>
    %655 = tpu.concatenate %653, %654 in 0 : vector<64x32xf32>, vector<64x32xf32> -> vector<128x32xf32>
    %c10 = arith.constant 10 : index
    %c0_145 = arith.constant 0 : index
    %656 = vector.load %arg5[%c10, %c0_145] : memref<11x32xf32, #tpu.memory_space<vmem>>, vector<1x32xf32>
    %657 = vector.broadcast %656 : vector<1x32xf32> to vector<128x32xf32>
    %658 = arith.mulf %657, %94 : vector<128x32xf32>
    %659 = arith.addf %655, %658 : vector<128x32xf32>
    %c128 = arith.constant 128 : index
    %c0_146 = arith.constant 0 : index
    %660 = vector.load %arg9[%c128, %c0_146] : memref<192x128xf32, #tpu.memory_space<vmem>>, vector<64x128xf32>
    %cst_147 = arith.constant dense<0.000000e+00> : vector<64x32xf32>
    %661 = tpu.matmul %660, %659, %cst_147 {dimension_numbers = #tpu.dot_dimension_numbers<[1], [0], [0], [1], [0, 0, 1, 1], [], []>} : vector<64x128xf32>, vector<128x32xf32>, vector<64x32xf32> -> vector<64x32xf32>
    %c128_148 = arith.constant 128 : index
    %c0_149 = arith.constant 0 : index
    %662 = vector.load %arg10[%c128_148, %c0_149] : memref<192x32xf32, #tpu.memory_space<vmem>>, vector<64x32xf32>
    %663 = arith.addf %661, %662 : vector<64x32xf32>
    %c96 = arith.constant 96 : index
    %c0_150 = arith.constant 0 : index
    %664 = vector.load %arg4[%c96, %c0_150] : memref<288x32xf32, #tpu.memory_space<vmem>>, vector<32x32xf32>
    %cst_151 = arith.constant dense<0.000000e+00> : vector<64x32xf32>
    %665 = tpu.matmul %74, %664, %cst_151 {dimension_numbers = #tpu.dot_dimension_numbers<[1], [0], [0], [1], [0, 0, 1, 1], [], []>} : vector<64x32xf32>, vector<32x32xf32>, vector<64x32xf32> -> vector<64x32xf32>
    %c4 = arith.constant 4 : index
    %c0_152 = arith.constant 0 : index
    %666 = vector.load %arg5[%c4, %c0_152] : memref<11x32xf32, #tpu.memory_space<vmem>>, vector<1x32xf32>
    %667 = vector.broadcast %666 : vector<1x32xf32> to vector<64x32xf32>
    %668 = arith.addf %665, %667 : vector<64x32xf32>
    %669 = arith.negf %668 : vector<64x32xf32>
    %670 = math.exp %669 : vector<64x32xf32>
    %cst_153 = arith.constant 1.000000e+00 : f32
    %671 = vector.broadcast %cst_153 : f32 to vector<64x32xf32>
    %672 = arith.addf %671, %670 : vector<64x32xf32>
    %673 = arith.divf %671, %672 : vector<64x32xf32>
    %674 = arith.mulf %668, %673 : vector<64x32xf32>
    %c128_154 = arith.constant 128 : index
    %c0_155 = arith.constant 0 : index
    %675 = vector.load %arg4[%c128_154, %c0_155] : memref<288x32xf32, #tpu.memory_space<vmem>>, vector<32x32xf32>
    %cst_156 = arith.constant dense<0.000000e+00> : vector<64x32xf32>
    %676 = tpu.matmul %674, %675, %cst_156 {dimension_numbers = #tpu.dot_dimension_numbers<[1], [0], [0], [1], [0, 0, 1, 1], [], []>} : vector<64x32xf32>, vector<32x32xf32>, vector<64x32xf32> -> vector<64x32xf32>
    %c5 = arith.constant 5 : index
    %c0_157 = arith.constant 0 : index
    %677 = vector.load %arg5[%c5, %c0_157] : memref<11x32xf32, #tpu.memory_space<vmem>>, vector<1x32xf32>
    %678 = vector.broadcast %677 : vector<1x32xf32> to vector<64x32xf32>
    %679 = arith.addf %676, %678 : vector<64x32xf32>
    %c160 = arith.constant 160 : index
    %c0_158 = arith.constant 0 : index
    %680 = vector.load %arg4[%c160, %c0_158] : memref<288x32xf32, #tpu.memory_space<vmem>>, vector<32x32xf32>
    %cst_159 = arith.constant dense<0.000000e+00> : vector<64x32xf32>
    %681 = tpu.matmul %663, %680, %cst_159 {dimension_numbers = #tpu.dot_dimension_numbers<[1], [0], [0], [1], [0, 0, 1, 1], [], []>} : vector<64x32xf32>, vector<32x32xf32>, vector<64x32xf32> -> vector<64x32xf32>
    %c6 = arith.constant 6 : index
    %c0_160 = arith.constant 0 : index
    %682 = vector.load %arg5[%c6, %c0_160] : memref<11x32xf32, #tpu.memory_space<vmem>>, vector<1x32xf32>
    %683 = vector.broadcast %682 : vector<1x32xf32> to vector<64x32xf32>
    %684 = arith.addf %681, %683 : vector<64x32xf32>
    %685 = arith.negf %684 : vector<64x32xf32>
    %686 = math.exp %685 : vector<64x32xf32>
    %cst_161 = arith.constant 1.000000e+00 : f32
    %687 = vector.broadcast %cst_161 : f32 to vector<64x32xf32>
    %688 = arith.addf %687, %686 : vector<64x32xf32>
    %689 = arith.divf %687, %688 : vector<64x32xf32>
    %690 = arith.mulf %684, %689 : vector<64x32xf32>
    %c192 = arith.constant 192 : index
    %c0_162 = arith.constant 0 : index
    %691 = vector.load %arg4[%c192, %c0_162] : memref<288x32xf32, #tpu.memory_space<vmem>>, vector<32x32xf32>
    %cst_163 = arith.constant dense<0.000000e+00> : vector<64x32xf32>
    %692 = tpu.matmul %690, %691, %cst_163 {dimension_numbers = #tpu.dot_dimension_numbers<[1], [0], [0], [1], [0, 0, 1, 1], [], []>} : vector<64x32xf32>, vector<32x32xf32>, vector<64x32xf32> -> vector<64x32xf32>
    %c7 = arith.constant 7 : index
    %c0_164 = arith.constant 0 : index
    %693 = vector.load %arg5[%c7, %c0_164] : memref<11x32xf32, #tpu.memory_space<vmem>>, vector<1x32xf32>
    %694 = vector.broadcast %693 : vector<1x32xf32> to vector<64x32xf32>
    %695 = arith.addf %692, %694 : vector<64x32xf32>
    %696 = arith.mulf %679, %695 : vector<64x32xf32>
    %c224 = arith.constant 224 : index
    %c0_165 = arith.constant 0 : index
    %697 = vector.load %arg4[%c224, %c0_165] : memref<288x32xf32, #tpu.memory_space<vmem>>, vector<32x32xf32>
    %cst_166 = arith.constant dense<0.000000e+00> : vector<64x32xf32>
    %698 = tpu.matmul %696, %697, %cst_166 {dimension_numbers = #tpu.dot_dimension_numbers<[1], [0], [0], [1], [0, 0, 1, 1], [], []>} : vector<64x32xf32>, vector<32x32xf32>, vector<64x32xf32> -> vector<64x32xf32>
    %c8_167 = arith.constant 8 : index
    %c0_168 = arith.constant 0 : index
    %699 = vector.load %arg5[%c8_167, %c0_168] : memref<11x32xf32, #tpu.memory_space<vmem>>, vector<1x32xf32>
    %700 = vector.broadcast %699 : vector<1x32xf32> to vector<64x32xf32>
    %701 = arith.addf %698, %700 : vector<64x32xf32>
    %702 = arith.negf %701 : vector<64x32xf32>
    %703 = math.exp %702 : vector<64x32xf32>
    %cst_169 = arith.constant 1.000000e+00 : f32
    %704 = vector.broadcast %cst_169 : f32 to vector<64x32xf32>
    %705 = arith.addf %704, %703 : vector<64x32xf32>
    %706 = arith.divf %704, %705 : vector<64x32xf32>
    %707 = arith.mulf %701, %706 : vector<64x32xf32>
    %c256 = arith.constant 256 : index
    %c0_170 = arith.constant 0 : index
    %708 = vector.load %arg4[%c256, %c0_170] : memref<288x32xf32, #tpu.memory_space<vmem>>, vector<32x32xf32>
    %cst_171 = arith.constant dense<0.000000e+00> : vector<64x32xf32>
    %709 = tpu.matmul %707, %708, %cst_171 {dimension_numbers = #tpu.dot_dimension_numbers<[1], [0], [0], [1], [0, 0, 1, 1], [], []>} : vector<64x32xf32>, vector<32x32xf32>, vector<64x32xf32> -> vector<64x32xf32>
    %c9 = arith.constant 9 : index
    %c0_172 = arith.constant 0 : index
    %710 = vector.load %arg5[%c9, %c0_172] : memref<11x32xf32, #tpu.memory_space<vmem>>, vector<1x32xf32>
    %711 = vector.broadcast %710 : vector<1x32xf32> to vector<64x32xf32>
    %712 = arith.addf %709, %711 : vector<64x32xf32>
    %c128_173 = arith.constant 128 : index
    %c0_174 = arith.constant 0 : index
    %713 = vector.load %arg11[%c128_173, %c0_174] : memref<256x64xf32, #tpu.memory_space<vmem>>, vector<128x64xf32>
    %c128_175 = arith.constant 128 : index
    %c0_176 = arith.constant 0 : index
    %714 = vector.load %arg12[%c128_175, %c0_176] : memref<256x32xf32, #tpu.memory_space<vmem>>, vector<128x32xf32>
    %cst_177 = arith.constant dense<0.000000e+00> : vector<128x32xf32>
    %715 = tpu.matmul %713, %712, %cst_177 {dimension_numbers = #tpu.dot_dimension_numbers<[1], [0], [0], [1], [0, 0, 1, 1], [], []>} : vector<128x64xf32>, vector<64x32xf32>, vector<128x32xf32> -> vector<128x32xf32>
    %716 = arith.addf %715, %714 : vector<128x32xf32>
    %717 = vector.extract_strided_slice %31 {offsets = [0, 0], sizes = [1, 32], strides = [1, 1]} : vector<2x32xf32> to vector<1x32xf32>
    %718 = vector.extract_strided_slice %716 {offsets = [0, 0], sizes = [64, 32], strides = [1, 1]} : vector<128x32xf32> to vector<64x32xf32>
    %719 = vector.broadcast %717 : vector<1x32xf32> to vector<64x32xf32>
    %720 = arith.mulf %719, %718 : vector<64x32xf32>
    %721 = arith.addf %58, %720 : vector<64x32xf32>
    %722 = vector.extract_strided_slice %31 {offsets = [1, 0], sizes = [1, 32], strides = [1, 1]} : vector<2x32xf32> to vector<1x32xf32>
    %723 = vector.extract_strided_slice %716 {offsets = [64, 0], sizes = [64, 32], strides = [1, 1]} : vector<128x32xf32> to vector<64x32xf32>
    %724 = vector.broadcast %722 : vector<1x32xf32> to vector<64x32xf32>
    %725 = arith.mulf %724, %723 : vector<64x32xf32>
    %726 = arith.addf %67, %725 : vector<64x32xf32>
    %727 = tpu.concatenate %721, %726 in 0 : vector<64x32xf32>, vector<64x32xf32> -> vector<128x32xf32>
    %c0_178 = arith.constant 0 : index
    %c0_179 = arith.constant 0 : index
    %728 = vector.load %arg13[%c0_178, %c0_179] : memref<128x32xf32, #tpu.memory_space<vmem>>, vector<128x32xf32>
    tpu.vector_store %arg13[%c0_178, %c0_179], %727 {strides = array<i32>} : memref<128x32xf32, #tpu.memory_space<vmem>>, vector<128x32xf32>,
    return
  }
  func.func @transform_0(%arg0: i32) -> (i32, i32) {
    %c0_i32 = arith.constant 0 : i32
    %c0_i32_0 = arith.constant 0 : i32
    %c0_i32_1 = arith.constant 0 : i32
    return %c0_i32, %c0_i32_0 : i32, i32
  }
  func.func @transform_1(%arg0: i32) -> (i32, i32) {
    %c0_i32 = arith.constant 0 : i32
    %c0_i32_0 = arith.constant 0 : i32
    %c0_i32_1 = arith.constant 0 : i32
    return %c0_i32, %c0_i32_0 : i32, i32
  }
  func.func @transform_2(%arg0: i32) -> (i32, i32) {
    %c0_i32 = arith.constant 0 : i32
    %c0_i32_0 = arith.constant 0 : i32
    %c0_i32_1 = arith.constant 0 : i32
    return %c0_i32, %c0_i32_0 : i32, i32
  }
  func.func @transform_3(%arg0: i32) -> (i32, i32) {
    %c0_i32 = arith.constant 0 : i32
    %c0_i32_0 = arith.constant 0 : i32
    %c0_i32_1 = arith.constant 0 : i32
    return %c0_i32, %c0_i32_0 : i32, i32
  }
  func.func @transform_4(%arg0: i32) -> (i32, i32) {
    %c0_i32 = arith.constant 0 : i32
    %c0_i32_0 = arith.constant 0 : i32
    %c0_i32_1 = arith.constant 0 : i32
    return %c0_i32, %c0_i32_0 : i32, i32
  }
  func.func @transform_5(%arg0: i32) -> (i32, i32) {
    %c0_i32 = arith.constant 0 : i32
    %c0_i32_0 = arith.constant 0 : i32
    %c0_i32_1 = arith.constant 0 : i32
    return %c0_i32, %c0_i32_0 : i32, i32
  }
  func.func @transform_6(%arg0: i32) -> (i32, i32) {
    %c0_i32 = arith.constant 0 : i32
    %c0_i32_0 = arith.constant 0 : i32
    %c0_i32_1 = arith.constant 0 : i32
    return %c0_i32, %c0_i32_0 : i32, i32
  }
  func.func @transform_7(%arg0: i32) -> (i32, i32) {
    %c0_i32 = arith.constant 0 : i32
    %c0_i32_0 = arith.constant 0 : i32
    %c0_i32_1 = arith.constant 0 : i32
    return %c0_i32, %c0_i32_0 : i32, i32
  }
  func.func @transform_8(%arg0: i32) -> (i32, i32) {
    %c0_i32 = arith.constant 0 : i32
    %c0_i32_0 = arith.constant 0 : i32
    %c0_i32_1 = arith.constant 0 : i32
    return %c0_i32, %c0_i32_0 : i32, i32
  }
  func.func @transform_9(%arg0: i32) -> (i32, i32) {
    %c0_i32 = arith.constant 0 : i32
    %c0_i32_0 = arith.constant 0 : i32
    %c0_i32_1 = arith.constant 0 : i32
    return %c0_i32, %c0_i32_0 : i32, i32
  }
  func.func @transform_10(%arg0: i32) -> (i32, i32) {
    %c0_i32 = arith.constant 0 : i32
    %c0_i32_0 = arith.constant 0 : i32
    %c0_i32_1 = arith.constant 0 : i32
    return %c0_i32, %c0_i32_0 : i32, i32
  }
  func.func @transform_11(%arg0: i32) -> (i32, i32) {
    %c0_i32 = arith.constant 0 : i32
    %c0_i32_0 = arith.constant 0 : i32
    %c0_i32_1 = arith.constant 0 : i32
    return %c0_i32, %c0_i32_0 : i32, i32
  }
  func.func @transform_12(%arg0: i32) -> (i32, i32) {
    %c0_i32 = arith.constant 0 : i32
    %c0_i32_0 = arith.constant 0 : i32
    %c0_i32_1 = arith.constant 0 : i32
    return %c0_i32, %c0_i32_0 : i32, i32
  }
}

</mosaic_0001>

<llo_original>
// kernel: tpu_custom_call.1
$region0: #{tpu_custom_call.1}
  #allocation0 [shape = 'u32[]', space=smem, size = 0x4, offset = 0x4, fixed_abs, tag = 'smem constant byte address 0x4 - core index']
  #allocation1 [shape = 'u32[144,128]{1,0:T(1,128)}', space=vmem, size = 0x12000, scoped, tag = 'internal scratch']
  #allocation2 [shape = 'f32[64,128]{1,0:T(8,128)}', space=vmem, size = 0x8000, scoped, tag = 'scratch operand']
  #allocation3 [shape = 'f32[64,128]{1,0:T(8,128)}', space=vmem, size = 0x8000, scoped, tag = 'scratch operand']
  %s0 = inlined_call_operand.vmem [shape: f32[128,32], index: 0, kind: input, shape index: {}]
  %s1 = inlined_call_operand.vmem [shape: f32[2,256], index: 1, kind: input, shape index: {}]
  %s2 = inlined_call_operand.vmem [shape: f32[256,32], index: 2, kind: input, shape index: {}]
  %s3 = inlined_call_operand.vmem [shape: f32[288,32], index: 3, kind: input, shape index: {}]
  %s4 = inlined_call_operand.vmem [shape: f32[11,32], index: 4, kind: input, shape index: {}]
  %s5 = inlined_call_operand.vmem [shape: f32[32,96], index: 5, kind: input, shape index: {}]
  %s6 = inlined_call_operand.vmem [shape: f32[1,96], index: 6, kind: input, shape index: {}]
  %s7 = inlined_call_operand.vmem [shape: f32[24,128], index: 7, kind: input, shape index: {}]
  %s8 = inlined_call_operand.vmem [shape: f32[192,128], index: 8, kind: input, shape index: {}]
  %s9 = inlined_call_operand.vmem [shape: f32[192,32], index: 9, kind: input, shape index: {}]
  %s10 = inlined_call_operand.vmem [shape: f32[256,64], index: 10, kind: input, shape index: {}]
  %s11 = inlined_call_operand.vmem [shape: f32[256,32], index: 11, kind: input, shape index: {}]
  %s12 = inlined_call_operand.vmem [shape: f32[128,32], index: 12, kind: output, shape index: {}]
  %s13 = sld [smem:[#allocation0]]
  $region58: #{tpu_custom_call.1} parent=0
    _
  %s15 = ssub.s32 1, %s13
  %s16 = scalar_select 0, %s15, %s13
  // Predicated region
  $region2: #{tpu_custom_call.1} parent=0 // pred_check
    _
  $region3: #{tpu_custom_call.1} parent=0 // pred_check_branch
    %18 = sbr.rel (0) target = $region5
  $region4: #{tpu_custom_call.1} parent=0 // pred_region
    _
  $region5: #{tpu_custom_call.1} parent=0 // pred_fallthru
    _
  // Predicated region
  $region6: #{tpu_custom_call.1} parent=0 // pred_check
    _
  $region7: #{tpu_custom_call.1} parent=0 // pred_check_branch
    %20 = sbr.rel (0) target = $region9
  $region8: #{tpu_custom_call.1} parent=0 // pred_region
    _
  $region9: #{tpu_custom_call.1} parent=0 // pred_fallthru
    _
  // Predicated region
  $region10: #{tpu_custom_call.1} parent=0 // pred_check
    _
  $region11: #{tpu_custom_call.1} parent=0 // pred_check_branch
    %22 = sbr.rel (0) target = $region13
  $region12: #{tpu_custom_call.1} parent=0 // pred_region
    _
  $region13: #{tpu_custom_call.1} parent=0 // pred_fallthru
    _
  // Predicated region
  $region14: #{tpu_custom_call.1} parent=0 // pred_check
    _
  $region15: #{tpu_custom_call.1} parent=0 // pred_check_branch
    %24 = sbr.rel (0) target = $region17
  $region16: #{tpu_custom_call.1} parent=0 // pred_region
    _
  $region17: #{tpu_custom_call.1} parent=0 // pred_fallthru
    _
  // Predicated region
  $region18: #{tpu_custom_call.1} parent=0 // pred_check
    _
  $region19: #{tpu_custom_call.1} parent=0 // pred_check_branch
    %26 = sbr.rel (0) target = $region21
  $region20: #{tpu_custom_call.1} parent=0 // pred_region
    _
  $region21: #{tpu_custom_call.1} parent=0 // pred_fallthru
    _
  // Predicated region
  $region22: #{tpu_custom_call.1} parent=0 // pred_check
    _
  $region23: #{tpu_custom_call.1} parent=0 // pred_check_branch
    %28 = sbr.rel (0) target = $region25
  $region24: #{tpu_custom_call.1} parent=0 // pred_region
    _
  $region25: #{tpu_custom_call.1} parent=0 // pred_fallthru
    _
  // Predicated region
  $region26: #{tpu_custom_call.1} parent=0 // pred_check
    _
  $region27: #{tpu_custom_call.1} parent=0 // pred_check_branch
    %30 = sbr.rel (0) target = $region29
  $region28: #{tpu_custom_call.1} parent=0 // pred_region
    _
  $region29: #{tpu_custom_call.1} parent=0 // pred_fallthru
    _
  // Predicated region
  $region30: #{tpu_custom_call.1} parent=0 // pred_check
    _
  $region31: #{tpu_custom_call.1} parent=0 // pred_check_branch
    %32 = sbr.rel (0) target = $region33
  $region32: #{tpu_custom_call.1} parent=0 // pred_region
    _
  $region33: #{tpu_custom_call.1} parent=0 // pred_fallthru
    _
  // Predicated region
  $region34: #{tpu_custom_call.1} parent=0 // pred_check
    _
  $region35: #{tpu_custom_call.1} parent=0 // pred_check_branch
    %34 = sbr.rel (0) target = $region37
  $region36: #{tpu_custom_call.1} parent=0 // pred_region
    _
  $region37: #{tpu_custom_call.1} parent=0 // pred_fallthru
    _
  // Predicated region
  $region38: #{tpu_custom_call.1} parent=0 // pred_check
    _
  $region39: #{tpu_custom_call.1} parent=0 // pred_check_branch
    %36 = sbr.rel (0) target = $region41
  $region40: #{tpu_custom_call.1} parent=0 // pred_region
    _
  $region41: #{tpu_custom_call.1} parent=0 // pred_fallthru
    _
  // Predicated region
  $region42: #{tpu_custom_call.1} parent=0 // pred_check
    _
  $region43: #{tpu_custom_call.1} parent=0 // pred_check_branch
    %38 = sbr.rel (0) target = $region45
  $region44: #{tpu_custom_call.1} parent=0 // pred_region
    _
  $region45: #{tpu_custom_call.1} parent=0 // pred_fallthru
    _
  // Predicated region
  $region46: #{tpu_custom_call.1} parent=0 // pred_check
    _
  $region47: #{tpu_custom_call.1} parent=0 // pred_check_branch
    %40 = sbr.rel (0) target = $region49
  $region48: #{tpu_custom_call.1} parent=0 // pred_region
    _
  $region49: #{tpu_custom_call.1} parent=0 // pred_fallthru
    _
  %v41 = vld [vmem:[%s0] sm:$0xff]
  %v42 = vld [vmem:[%s0 + $0x8] sm:$0xff]
  %v43 = vld [vmem:[%s0 + $0x10] sm:$0xff]
  %v44 = vld [vmem:[%s0 + $0x18] sm:$0xff]
  %v45 = vld [vmem:[%s0 + $0x20] sm:$0xff]
  %v46 = vld [vmem:[%s0 + $0x28] sm:$0xff]
  %v47 = vld [vmem:[%s0 + $0x30] sm:$0xff]
  %v48 = vld [vmem:[%s0 + $0x38] sm:$0xff]
  %v49 = vld [vmem:[%s0 + $0x40] sm:$0xff]
  %v50 = vld [vmem:[%s0 + $0x48] sm:$0xff]
  %v51 = vld [vmem:[%s0 + $0x50] sm:$0xff]
  %v52 = vld [vmem:[%s0 + $0x58] sm:$0xff]
  %v53 = vld [vmem:[%s0 + $0x60] sm:$0xff]
  %v54 = vld [vmem:[%s0 + $0x68] sm:$0xff]
  %v55 = vld [vmem:[%s0 + $0x70] sm:$0xff]
  %v56 = vld [vmem:[%s0 + $0x78] sm:$0xff]
  %v57 = vld [vmem:[%s1] sm:$0xf]
  %v58 = vld [vmem:[%s2] sm:$0xff]
  %v59 = vld [vmem:[%s2 + $0x8] sm:$0xff]
  %v60 = vld [vmem:[%s2 + $0x10] sm:$0xff]
  %v61 = vld [vmem:[%s2 + $0x18] sm:$0xff]
  %v62 = vld [vmem:[%s2 + $0x20] sm:$0xff]
  %v63 = vld [vmem:[%s2 + $0x28] sm:$0xff]
  %v64 = vld [vmem:[%s2 + $0x30] sm:$0xff]
  %v65 = vld [vmem:[%s2 + $0x38] sm:$0xff]
  %v66 = vld [vmem:[%s2 + $0x40] sm:$0xff]
  %v67 = vld [vmem:[%s2 + $0x48] sm:$0xff]
  %v68 = vld [vmem:[%s2 + $0x50] sm:$0xff]
  %v69 = vld [vmem:[%s2 + $0x58] sm:$0xff]
  %v70 = vld [vmem:[%s2 + $0x60] sm:$0xff]
  %v71 = vld [vmem:[%s2 + $0x68] sm:$0xff]
  %v72 = vld [vmem:[%s2 + $0x70] sm:$0xff]
  %v73 = vld [vmem:[%s2 + $0x78] sm:$0xff]
  %v74 = vld [vmem:[%s2 + $0x80] sm:$0xff]
  %v75 = vld [vmem:[%s2 + $0x88] sm:$0xff]
  %v76 = vld [vmem:[%s2 + $0x90] sm:$0xff]
  %v77 = vld [vmem:[%s2 + $0x98] sm:$0xff]
  %v78 = vld [vmem:[%s2 + $0xa0] sm:$0xff]
  %v79 = vld [vmem:[%s2 + $0xa8] sm:$0xff]
  %v80 = vld [vmem:[%s2 + $0xb0] sm:$0xff]
  %v81 = vld [vmem:[%s2 + $0xb8] sm:$0xff]
  %v82 = vld [vmem:[%s2 + $0xc0] sm:$0xff]
  %v83 = vld [vmem:[%s2 + $0xc8] sm:$0xff]
  %v84 = vld [vmem:[%s2 + $0xd0] sm:$0xff]
  %v85 = vld [vmem:[%s2 + $0xd8] sm:$0xff]
  %v86 = vld [vmem:[%s2 + $0xe0] sm:$0xff]
  %v87 = vld [vmem:[%s2 + $0xe8] sm:$0xff]
  %v88 = vld [vmem:[%s2 + $0xf0] sm:$0xff]
  %v89 = vld [vmem:[%s2 + $0xf8] sm:$0xff]
  %v90 = vld [vmem:[%s4] sm:$0x1]
  %v91 = vlaneseq
  %v92 = vshrl.u32 %v91, 7
  %v93 = vsub.s32 0, %v92
  %v94 = vrot.slane %v90, %v93
  %v97 = vunpack.c.l.s4 1983009808
  %v98 = vunpack.c.0.s8 %v97
  %v99 = vlaneseq
  %v100 = vshrl.u32 %v99, 7
  %v101 = vsub.s32 %v98, %v100
  %v102 = vrot.slane %v57, %v101
  %v103 = vcombine.high %v102, %v102
  %106 = vmatprep.subr.mxu0 0.0
  %107 = vmatpush1.msra.mxu0 %v73
  %108 = vmatprep.subr.mxu0 0.0
  %109 = vmatpush1.msra.mxu0 %v72
  %110 = vmatprep.subr.mxu0 0.0
  %111 = vmatpush1.msra.mxu0 %v71
  %112 = vmatprep.subr.mxu0 0.0
  %113 = vmatpush1.msra.mxu0 %v70
  %114 = vmatprep.subr.mxu0 0.0
  %115 = vmatpush1.msra.mxu0 %v69
  %116 = vmatprep.subr.mxu0 0.0
  %117 = vmatpush1.msra.mxu0 %v68
  %118 = vmatprep.subr.mxu0 0.0
  %119 = vmatpush1.msra.mxu0 %v67
  %120 = vmatprep.subr.mxu0 0.0
  %121 = vmatpush1.msra.mxu0 %v66
  %122 = vmatprep.subr.mxu0 0.0
  %123 = vmatpush1.msra.mxu0 %v65
  %124 = vmatprep.subr.mxu0 0.0
  %125 = vmatpush1.msra.mxu0 %v64
  %126 = vmatprep.subr.mxu0 0.0
  %127 = vmatpush1.msra.mxu0 %v63
  %128 = vmatprep.subr.mxu0 0.0
  %129 = vmatpush1.msra.mxu0 %v62
  %130 = vmatprep.subr.mxu0 0.0
  %131 = vmatpush1.msra.mxu0 %v61
  %132 = vmatprep.subr.mxu0 0.0
  %133 = vmatpush1.msra.mxu0 %v60
  %134 = vmatprep.subr.mxu0 0.0
  %135 = vmatpush1.msra.mxu0 %v59
  %136 = vmatprep.subr.mxu0 0.0
  %137 = vmatpush1.msra.mxu0 %v58
  %138 = vmatprep.subr.mxu0 0.0
  %139 = vmatpush2.msra.mxu0 %v89
  %140 = vmatprep.subr.mxu0 0.0
  %141 = vmatpush2.msra.mxu0 %v88
  %142 = vmatprep.subr.mxu0 0.0
  %143 = vmatpush2.msra.mxu0 %v87
  %144 = vmatprep.subr.mxu0 0.0
  %145 = vmatpush2.msra.mxu0 %v86
  %146 = vmatprep.subr.mxu0 0.0
  %147 = vmatpush2.msra.mxu0 %v85
  %148 = vmatprep.subr.mxu0 0.0
  %149 = vmatpush2.msra.mxu0 %v84
  %150 = vmatprep.subr.mxu0 0.0
  %151 = vmatpush2.msra.mxu0 %v83
  %152 = vmatprep.subr.mxu0 0.0
  %153 = vmatpush2.msra.mxu0 %v82
  %154 = vmatprep.subr.mxu0 0.0
  %155 = vmatpush2.msra.mxu0 %v81
  %156 = vmatprep.subr.mxu0 0.0
  %157 = vmatpush2.msra.mxu0 %v80
  %158 = vmatprep.subr.mxu0 0.0
  %159 = vmatpush2.msra.mxu0 %v79
  %160 = vmatprep.subr.mxu0 0.0
  %161 = vmatpush2.msra.mxu0 %v78
  %162 = vmatprep.subr.mxu0 0.0
  %163 = vmatpush2.msra.mxu0 %v77
  %164 = vmatprep.subr.mxu0 0.0
  %165 = vmatpush2.msra.mxu0 %v76
  %166 = vmatprep.subr.mxu0 0.0
  %167 = vmatpush2.msra.mxu0 %v75
  %168 = vmatprep.subr.mxu0 0.0
  %169 = vmatpush2.msra.mxu0 %v74
  %170 = vmatprep.mubr.f32.mxu0 %v103
  %171 = vmatmul.mubr.f32.gmra.mxu0 %v102
  %v172 = vpop.f32.mrf.mxu0
  %v173 = vadd.f32 %v94, %v172
  %v174 = vpop.f32.mrf.mxu0
  %175 = vdwg.mxu0
  %v176 = vxor.u32 %v173, 2147483648
  %v177 = vmul.f32 %v176, 1.442695
  %v178 = vpow.pop %v177
  %v179 = vadd.f32 %v178, 1.0
  %v180 = vrcp.pop %v179
  %v181 = vmul.f32 1.0, %v180
  %v182 = vmul.f32 %v173, %v181
  %v183 = vld [vmem:[%s3] sm:$0xff]
  %v184 = vld [vmem:[%s3 + $0x8] sm:$0xff]
  %v185 = vld [vmem:[%s3 + $0x10] sm:$0xff]
  %v186 = vld [vmem:[%s3 + $0x18] sm:$0xff]
  %v187 = vld [vmem:[%s4 + $0x1] sm:$0x1]
  %v188 = vlaneseq
  %v189 = vshrl.u32 %v188, 7
  %v190 = vsub.s32 0, %v189
  %v191 = vrot.slane %v187, %v190
  %vm192 = vcmask 261120
  %v194 = vsel %vm192, %v182, 0
  %196 = vmatprep.subr.mxu0 0.0
  %197 = vmatpush1.msra.mxu0 0.0
  %198 = vmatprep.subr.mxu0 0.0
  %199 = vmatpush1.msra.mxu0 0.0
  %200 = vmatprep.subr.mxu0 0.0
  %201 = vmatpush1.msra.mxu0 0.0
  %202 = vmatprep.subr.mxu0 0.0
  %203 = vmatpush1.msra.mxu0 0.0
  %204 = vmatprep.subr.mxu0 0.0
  %205 = vmatpush1.msra.mxu0 0.0
  %206 = vmatprep.subr.mxu0 0.0
  %207 = vmatpush1.msra.mxu0 0.0
  %208 = vmatprep.subr.mxu0 0.0
  %209 = vmatpush1.msra.mxu0 0.0
  %210 = vmatprep.subr.mxu0 0.0
  %211 = vmatpush1.msra.mxu0 0.0
  %212 = vmatprep.subr.mxu0 0.0
  %213 = vmatpush1.msra.mxu0 0.0
  %214 = vmatprep.subr.mxu0 0.0
  %215 = vmatpush1.msra.mxu0 0.0
  %216 = vmatprep.subr.mxu0 0.0
  %217 = vmatpush1.msra.mxu0 0.0
  %218 = vmatprep.subr.mxu0 0.0
  %219 = vmatpush1.msra.mxu0 0.0
  %220 = vmatprep.subr.mxu0 0.0
  %221 = vmatpush1.msra.mxu0 %v186
  %222 = vmatprep.subr.mxu0 0.0
  %223 = vmatpush1.msra.mxu0 %v185
  %224 = vmatprep.subr.mxu0 0.0
  %225 = vmatpush1.msra.mxu0 %v184
  %226 = vmatprep.subr.mxu0 0.0
  %227 = vmatpush1.msra.mxu0 %v183
  %228 = vmatprep.subr.mxu0 0.0
  %229 = vmatpush2.msra.mxu0 0.0
  %230 = vmatprep.subr.mxu0 0.0
  %231 = vmatpush2.msra.mxu0 0.0
  %232 = vmatprep.subr.mxu0 0.0
  %233 = vmatpush2.msra.mxu0 0.0
  %234 = vmatprep.subr.mxu0 0.0
  %235 = vmatpush2.msra.mxu0 0.0
  %236 = vmatprep.subr.mxu0 0.0
  %237 = vmatpush2.msra.mxu0 0.0
  %238 = vmatprep.subr.mxu0 0.0
  %239 = vmatpush2.msra.mxu0 0.0
  %240 = vmatprep.subr.mxu0 0.0
  %241 = vmatpush2.msra.mxu0 0.0
  %242 = vmatprep.subr.mxu0 0.0
  %243 = vmatpush2.msra.mxu0 0.0
  %244 = vmatprep.subr.mxu0 0.0
  %245 = vmatpush2.msra.mxu0 0.0
  %246 = vmatprep.subr.mxu0 0.0
  %247 = vmatpush2.msra.mxu0 0.0
  %248 = vmatprep.subr.mxu0 0.0
  %249 = vmatpush2.msra.mxu0 0.0
  %250 = vmatprep.subr.mxu0 0.0
  %251 = vmatpush2.msra.mxu0 0.0
  %252 = vmatprep.subr.mxu0 0.0
  %253 = vmatpush2.msra.mxu0 0.0
  %254 = vmatprep.subr.mxu0 0.0
  %255 = vmatpush2.msra.mxu0 0.0
  %256 = vmatprep.subr.mxu0 0.0
  %257 = vmatpush2.msra.mxu0 0.0
  %258 = vmatprep.subr.mxu0 0.0
  %259 = vmatpush2.msra.mxu0 0.0
  %260 = vmatprep.mubr.f32.mxu0 0.0
  %261 = vmatmul.mubr.f32.gmra.mxu0 %v194
  %v262 = vpop.f32.mrf.mxu0
  %v263 = vadd.f32 %v191, %v262
  %v264 = vpop.f32.mrf.mxu0
  %265 = vdwg.mxu0
  %v266 = vxor.u32 %v263, 2147483648
  %v267 = vmul.f32 %v266, 1.442695
  %v268 = vpow.pop %v267
  %v269 = vadd.f32 %v268, 1.0
  %v270 = vrcp.pop %v269
  %v271 = vmul.f32 1.0, %v270
  %v272 = vmul.f32 %v263, %v271
  %v273 = vld [vmem:[%s5] sm:$0xff]
  %v274 = vld [vmem:[%s5 + $0x8] sm:$0xff]
  %v275 = vld [vmem:[%s5 + $0x10] sm:$0xff]
  %v276 = vld [vmem:[%s5 + $0x18] sm:$0xff]
  %v277 = vld [vmem:[%s6] sm:$0x1]
  %v279 = vlaneseq
  %v280 = vshrl.u32 %v279, 7
  %v281 = vsub.s32 0, %v280
  %v282 = vrot.slane %v277, %v281
  %v285 = vsel %vm192, %v272, 0
  %287 = vmatprep.subr.mxu0 0.0
  %288 = vmatpush1.msra.mxu0 0.0
  %289 = vmatprep.subr.mxu0 0.0
  %290 = vmatpush1.msra.mxu0 0.0
  %291 = vmatprep.subr.mxu0 0.0
  %292 = vmatpush1.msra.mxu0 0.0
  %293 = vmatprep.subr.mxu0 0.0
  %294 = vmatpush1.msra.mxu0 0.0
  %295 = vmatprep.subr.mxu0 0.0
  %296 = vmatpush1.msra.mxu0 0.0
  %297 = vmatprep.subr.mxu0 0.0
  %298 = vmatpush1.msra.mxu0 0.0
  %299 = vmatprep.subr.mxu0 0.0
  %300 = vmatpush1.msra.mxu0 0.0
  %301 = vmatprep.subr.mxu0 0.0
  %302 = vmatpush1.msra.mxu0 0.0
  %303 = vmatprep.subr.mxu0 0.0
  %304 = vmatpush1.msra.mxu0 0.0
  %305 = vmatprep.subr.mxu0 0.0
  %306 = vmatpush1.msra.mxu0 0.0
  %307 = vmatprep.subr.mxu0 0.0
  %308 = vmatpush1.msra.mxu0 0.0
  %309 = vmatprep.subr.mxu0 0.0
  %310 = vmatpush1.msra.mxu0 0.0
  %311 = vmatprep.subr.mxu0 0.0
  %312 = vmatpush1.msra.mxu0 %v276
  %313 = vmatprep.subr.mxu0 0.0
  %314 = vmatpush1.msra.mxu0 %v275
  %315 = vmatprep.subr.mxu0 0.0
  %316 = vmatpush1.msra.mxu0 %v274
  %317 = vmatprep.subr.mxu0 0.0
  %318 = vmatpush1.msra.mxu0 %v273
  %319 = vmatprep.subr.mxu0 0.0
  %320 = vmatpush2.msra.mxu0 0.0
  %321 = vmatprep.subr.mxu0 0.0
  %322 = vmatpush2.msra.mxu0 0.0
  %323 = vmatprep.subr.mxu0 0.0
  %324 = vmatpush2.msra.mxu0 0.0
  %325 = vmatprep.subr.mxu0 0.0
  %326 = vmatpush2.msra.mxu0 0.0
  %327 = vmatprep.subr.mxu0 0.0
  %328 = vmatpush2.msra.mxu0 0.0
  %329 = vmatprep.subr.mxu0 0.0
  %330 = vmatpush2.msra.mxu0 0.0
  %331 = vmatprep.subr.mxu0 0.0
  %332 = vmatpush2.msra.mxu0 0.0
  %333 = vmatprep.subr.mxu0 0.0
  %334 = vmatpush2.msra.mxu0 0.0
  %335 = vmatprep.subr.mxu0 0.0
  %336 = vmatpush2.msra.mxu0 0.0
  %337 = vmatprep.subr.mxu0 0.0
  %338 = vmatpush2.msra.mxu0 0.0
  %339 = vmatprep.subr.mxu0 0.0
  %340 = vmatpush2.msra.mxu0 0.0
  %341 = vmatprep.subr.mxu0 0.0
  %342 = vmatpush2.msra.mxu0 0.0
  %343 = vmatprep.subr.mxu0 0.0
  %344 = vmatpush2.msra.mxu0 0.0
  %345 = vmatprep.subr.mxu0 0.0
  %346 = vmatpush2.msra.mxu0 0.0
  %347 = vmatprep.subr.mxu0 0.0
  %348 = vmatpush2.msra.mxu0 0.0
  %349 = vmatprep.subr.mxu0 0.0
  %350 = vmatpush2.msra.mxu0 0.0
  %351 = vmatprep.mubr.f32.mxu0 0.0
  %352 = vmatmul.mubr.f32.gmra.mxu0 %v285
  %v353 = vpop.f32.mrf.mxu0
  %v354 = vadd.f32 %v282, %v353
  %v355 = vpop.f32.mrf.mxu0
  %356 = vdwg.mxu0
  %v357 = vsel %vm192, %v41, 0.0
  %358 = vadd.xlane.f32.xlu0 %v357
  %v359 = vpop.xlane.xlu0 %358
  %v360 = vsel %vm192, %v42, 0.0
  %361 = vadd.xlane.f32.xlu0 %v360
  %v362 = vpop.xlane.xlu0 %361
  %v363 = vsel %vm192, %v43, 0.0
  %364 = vadd.xlane.f32.xlu0 %v363
  %v365 = vpop.xlane.xlu0 %364
  %v366 = vsel %vm192, %v44, 0.0
  %367 = vadd.xlane.f32.xlu0 %v366
  %v368 = vpop.xlane.xlu0 %367
  %v369 = vsel %vm192, %v45, 0.0
  %370 = vadd.xlane.f32.xlu0 %v369
  %v371 = vpop.xlane.xlu0 %370
  %v372 = vsel %vm192, %v46, 0.0
  %373 = vadd.xlane.f32.xlu0 %v372
  %v374 = vpop.xlane.xlu0 %373
  %v375 = vsel %vm192, %v47, 0.0
  %376 = vadd.xlane.f32.xlu0 %v375
  %v377 = vpop.xlane.xlu0 %376
  %v378 = vsel %vm192, %v48, 0.0
  %379 = vadd.xlane.f32.xlu0 %v378
  %v380 = vpop.xlane.xlu0 %379
  %v381 = vsel %vm192, %v49, 0.0
  %382 = vadd.xlane.f32.xlu0 %v381
  %v383 = vpop.xlane.xlu0 %382
  %v384 = vsel %vm192, %v50, 0.0
  %385 = vadd.xlane.f32.xlu0 %v384
  %v386 = vpop.xlane.xlu0 %385
  %v387 = vsel %vm192, %v51, 0.0
  %388 = vadd.xlane.f32.xlu0 %v387
  %v389 = vpop.xlane.xlu0 %388
  %v390 = vsel %vm192, %v52, 0.0
  %391 = vadd.xlane.f32.xlu0 %v390
  %v392 = vpop.xlane.xlu0 %391
  %v393 = vsel %vm192, %v53, 0.0
  %394 = vadd.xlane.f32.xlu0 %v393
  %v395 = vpop.xlane.xlu0 %394
  %v396 = vsel %vm192, %v54, 0.0
  %397 = vadd.xlane.f32.xlu0 %v396
  %v398 = vpop.xlane.xlu0 %397
  %v399 = vsel %vm192, %v55, 0.0
  %400 = vadd.xlane.f32.xlu0 %v399
  %v401 = vpop.xlane.xlu0 %400
  %v402 = vsel %vm192, %v56, 0.0
  %403 = vadd.xlane.f32.xlu0 %v402
  %v404 = vpop.xlane.xlu0 %403
  %v405 = vrcp.pop 32.0
  %v406 = vmul.f32 %v359, %v405
  %v407 = vmul.f32 %v362, %v405
  %v408 = vmul.f32 %v365, %v405
  %v409 = vmul.f32 %v368, %v405
  %v410 = vmul.f32 %v371, %v405
  %v411 = vmul.f32 %v374, %v405
  %v412 = vmul.f32 %v377, %v405
  %v413 = vmul.f32 %v380, %v405
  %v414 = vmul.f32 %v383, %v405
  %v415 = vmul.f32 %v386, %v405
  %v416 = vmul.f32 %v389, %v405
  %v417 = vmul.f32 %v392, %v405
  %v418 = vmul.f32 %v395, %v405
  %v419 = vmul.f32 %v398, %v405
  %v420 = vmul.f32 %v401, %v405
  %v421 = vmul.f32 %v404, %v405
  %v422 = vsub.f32 %v41, %v406
  %v423 = vsub.f32 %v42, %v407
  %v424 = vsub.f32 %v43, %v408
  %v425 = vsub.f32 %v44, %v409
  %v426 = vsub.f32 %v45, %v410
  %v427 = vsub.f32 %v46, %v411
  %v428 = vsub.f32 %v47, %v412
  %v429 = vsub.f32 %v48, %v413
  %v430 = vsub.f32 %v49, %v414
  %v431 = vsub.f32 %v50, %v415
  %v432 = vsub.f32 %v51, %v416
  %v433 = vsub.f32 %v52, %v417
  %v434 = vsub.f32 %v53, %v418
  %v435 = vsub.f32 %v54, %v419
  %v436 = vsub.f32 %v55, %v420
  %v437 = vsub.f32 %v56, %v421
  %v438 = vmul.f32 %v422, %v422
  %v439 = vmul.f32 %v423, %v423
  %v440 = vmul.f32 %v424, %v424
  %v441 = vmul.f32 %v425, %v425
  %v442 = vmul.f32 %v426, %v426
  %v443 = vmul.f32 %v427, %v427
  %v444 = vmul.f32 %v428, %v428
  %v445 = vmul.f32 %v429, %v429
  %v446 = vmul.f32 %v430, %v430
  %v447 = vmul.f32 %v431, %v431
  %v448 = vmul.f32 %v432, %v432
  %v449 = vmul.f32 %v433, %v433
  %v450 = vmul.f32 %v434, %v434
  %v451 = vmul.f32 %v435, %v435
  %v452 = vmul.f32 %v436, %v436
  %v453 = vmul.f32 %v437, %v437
  %v454 = vsel %vm192, %v438, 0.0
  %455 = vadd.xlane.f32.xlu0 %v454
  %v456 = vpop.xlane.xlu0 %455
  %v457 = vsel %vm192, %v439, 0.0
  %458 = vadd.xlane.f32.xlu0 %v457
  %v459 = vpop.xlane.xlu0 %458
  %v460 = vsel %vm192, %v440, 0.0
  %461 = vadd.xlane.f32.xlu0 %v460
  %v462 = vpop.xlane.xlu0 %461
  %v463 = vsel %vm192, %v441, 0.0
  %464 = vadd.xlane.f32.xlu0 %v463
  %v465 = vpop.xlane.xlu0 %464
  %v466 = vsel %vm192, %v442, 0.0
  %467 = vadd.xlane.f32.xlu0 %v466
  %v468 = vpop.xlane.xlu0 %467
  %v469 = vsel %vm192, %v443, 0.0
  %470 = vadd.xlane.f32.xlu0 %v469
  %v471 = vpop.xlane.xlu0 %470
  %v472 = vsel %vm192, %v444, 0.0
  %473 = vadd.xlane.f32.xlu0 %v472
  %v474 = vpop.xlane.xlu0 %473
  %v475 = vsel %vm192, %v445, 0.0
  %476 = vadd.xlane.f32.xlu0 %v475
  %v477 = vpop.xlane.xlu0 %476
  %v478 = vsel %vm192, %v446, 0.0
  %479 = vadd.xlane.f32.xlu0 %v478
  %v480 = vpop.xlane.xlu0 %479
  %v481 = vsel %vm192, %v447, 0.0
  %482 = vadd.xlane.f32.xlu0 %v481
  %v483 = vpop.xlane.xlu0 %482
  %v484 = vsel %vm192, %v448, 0.0
  %485 = vadd.xlane.f32.xlu0 %v484
  %v486 = vpop.xlane.xlu0 %485
  %v487 = vsel %vm192, %v449, 0.0
  %488 = vadd.xlane.f32.xlu0 %v487
  %v489 = vpop.xlane.xlu0 %488
  %v490 = vsel %vm192, %v450, 0.0
  %491 = vadd.xlane.f32.xlu0 %v490
  %v492 = vpop.xlane.xlu0 %491
  %v493 = vsel %vm192, %v451, 0.0
  %494 = vadd.xlane.f32.xlu0 %v493
  %v495 = vpop.xlane.xlu0 %494
  %v496 = vsel %vm192, %v452, 0.0
  %497 = vadd.xlane.f32.xlu0 %v496
  %v498 = vpop.xlane.xlu0 %497
  %v499 = vsel %vm192, %v453, 0.0
  %500 = vadd.xlane.f32.xlu0 %v499
  %v501 = vpop.xlane.xlu0 %500
  %v502 = vmul.f32 %v456, %v405
  %v503 = vmul.f32 %v459, %v405
  %v504 = vmul.f32 %v462, %v405
  %v505 = vmul.f32 %v465, %v405
  %v506 = vmul.f32 %v468, %v405
  %v507 = vmul.f32 %v471, %v405
  %v508 = vmul.f32 %v474, %v405
  %v509 = vmul.f32 %v477, %v405
  %v510 = vmul.f32 %v480, %v405
  %v511 = vmul.f32 %v483, %v405
  %v512 = vmul.f32 %v486, %v405
  %v513 = vmul.f32 %v489, %v405
  %v514 = vmul.f32 %v492, %v405
  %v515 = vmul.f32 %v495, %v405
  %v516 = vmul.f32 %v498, %v405
  %v517 = vmul.f32 %v501, %v405
  %v518 = vadd.f32 %v502, 1e-06
  %v519 = vadd.f32 %v503, 1e-06
  %v520 = vadd.f32 %v504, 1e-06
  %v521 = vadd.f32 %v505, 1e-06
  %v522 = vadd.f32 %v506, 1e-06
  %v523 = vadd.f32 %v507, 1e-06
  %v524 = vadd.f32 %v508, 1e-06
  %v525 = vadd.f32 %v509, 1e-06
  %v526 = vadd.f32 %v510, 1e-06
  %v527 = vadd.f32 %v511, 1e-06
  %v528 = vadd.f32 %v512, 1e-06
  %v529 = vadd.f32 %v513, 1e-06
  %v530 = vadd.f32 %v514, 1e-06
  %v531 = vadd.f32 %v515, 1e-06
  %v532 = vadd.f32 %v516, 1e-06
  %v533 = vadd.f32 %v517, 1e-06
  %v534 = vrsqrt.pop %v518
  %v535 = vrsqrt.pop %v519
  %v536 = vrsqrt.pop %v520
  %v537 = vrsqrt.pop %v521
  %v538 = vrsqrt.pop %v522
  %v539 = vrsqrt.pop %v523
  %v540 = vrsqrt.pop %v524
  %v541 = vrsqrt.pop %v525
  %v542 = vrsqrt.pop %v526
  %v543 = vrsqrt.pop %v527
  %v544 = vrsqrt.pop %v528
  %v545 = vrsqrt.pop %v529
  %v546 = vrsqrt.pop %v530
  %v547 = vrsqrt.pop %v531
  %v548 = vrsqrt.pop %v532
  %v549 = vrsqrt.pop %v533
  %v550 = vmul.f32 %v422, %v534
  %v551 = vmul.f32 %v423, %v535
  %v552 = vmul.f32 %v424, %v536
  %v553 = vmul.f32 %v425, %v537
  %v554 = vmul.f32 %v426, %v538
  %v555 = vmul.f32 %v427, %v539
  %v556 = vmul.f32 %v428, %v540
  %v557 = vmul.f32 %v429, %v541
  %v558 = vmul.f32 %v430, %v542
  %v559 = vmul.f32 %v431, %v543
  %v560 = vmul.f32 %v432, %v544
  %v561 = vmul.f32 %v433, %v545
  %v562 = vmul.f32 %v434, %v546
  %v563 = vmul.f32 %v435, %v547
  %v564 = vmul.f32 %v436, %v548
  %v565 = vmul.f32 %v437, %v549
  %v566 = vadd.f32 %v354, 1.0
  %v567 = vlaneseq
  %v568 = vshrl.u32 %v567, 7
  %v569 = vsub.s32 0, %v568
  %v570 = vrot.slane %v566, %v569
  %579 = vrot.lane.b32.xlu0 %v550, 32
  %v580 = vpop.permute.xlu0 %579
  %581 = vrot.lane.b32.xlu0 %v551, 32
  %v582 = vpop.permute.xlu0 %581
  %583 = vrot.lane.b32.xlu0 %v552, 32
  %v584 = vpop.permute.xlu0 %583
  %585 = vrot.lane.b32.xlu0 %v553, 32
  %v586 = vpop.permute.xlu0 %585
  %587 = vrot.lane.b32.xlu0 %v554, 32
  %v588 = vpop.permute.xlu0 %587
  %589 = vrot.lane.b32.xlu0 %v555, 32
  %v590 = vpop.permute.xlu0 %589
  %591 = vrot.lane.b32.xlu0 %v556, 32
  %v592 = vpop.permute.xlu0 %591
  %593 = vrot.lane.b32.xlu0 %v557, 32
  %v594 = vpop.permute.xlu0 %593
  %v603 = vmul.f32 %v570, %v580
  %v604 = vmul.f32 %v570, %v582
  %v605 = vmul.f32 %v570, %v584
  %v606 = vmul.f32 %v570, %v586
  %v607 = vmul.f32 %v570, %v588
  %v608 = vmul.f32 %v570, %v590
  %v609 = vmul.f32 %v570, %v592
  %v610 = vmul.f32 %v570, %v594
  %v611 = vlaneseq
  %v612 = vshrl.u32 %v611, 7
  %v613 = vsub.s32 0, %v612
  %v614 = vrot.slane %v354, %v613
  %616 = vrot.lane.b32.xlu0 %v614, 32
  %v617 = vpop.permute.xlu0 %616
  %v619 = vadd.f32 %v603, %v617
  %v620 = vadd.f32 %v604, %v617
  %v621 = vadd.f32 %v605, %v617
  %v622 = vadd.f32 %v606, %v617
  %v623 = vadd.f32 %v607, %v617
  %v624 = vadd.f32 %v608, %v617
  %v625 = vadd.f32 %v609, %v617
  %v626 = vadd.f32 %v610, %v617
  %v627 = vlaneseq
  %v628 = vshrl.u32 %v627, 7
  %v629 = vsub.s32 1, %v628
  %v630 = vrot.slane %v566, %v629
  %639 = vrot.lane.b32.xlu0 %v558, 32
  %v640 = vpop.permute.xlu0 %639
  %641 = vrot.lane.b32.xlu0 %v559, 32
  %v642 = vpop.permute.xlu0 %641
  %643 = vrot.lane.b32.xlu0 %v560, 32
  %v644 = vpop.permute.xlu0 %643
  %645 = vrot.lane.b32.xlu0 %v561, 32
  %v646 = vpop.permute.xlu0 %645
  %647 = vrot.lane.b32.xlu0 %v562, 32
  %v648 = vpop.permute.xlu0 %647
  %649 = vrot.lane.b32.xlu0 %v563, 32
  %v650 = vpop.permute.xlu0 %649
  %651 = vrot.lane.b32.xlu0 %v564, 32
  %v652 = vpop.permute.xlu0 %651
  %653 = vrot.lane.b32.xlu0 %v565, 32
  %v654 = vpop.permute.xlu0 %653
  %v663 = vmul.f32 %v630, %v640
  %v664 = vmul.f32 %v630, %v642
  %v665 = vmul.f32 %v630, %v644
  %v666 = vmul.f32 %v630, %v646
  %v667 = vmul.f32 %v630, %v648
  %v668 = vmul.f32 %v630, %v650
  %v669 = vmul.f32 %v630, %v652
  %v670 = vmul.f32 %v630, %v654
  %v671 = vlaneseq
  %v672 = vshrl.u32 %v671, 7
  %v673 = vsub.s32 1, %v672
  %v674 = vrot.slane %v354, %v673
  %676 = vrot.lane.b32.xlu0 %v674, 32
  %v677 = vpop.permute.xlu0 %676
  %v679 = vadd.f32 %v663, %v677
  %v680 = vadd.f32 %v664, %v677
  %v681 = vadd.f32 %v665, %v677
  %v682 = vadd.f32 %v666, %v677
  %v683 = vadd.f32 %v667, %v677
  %v684 = vadd.f32 %v668, %v677
  %v685 = vadd.f32 %v669, %v677
  %v686 = vadd.f32 %v670, %v677
  %v687 = vld [vmem:[%s8] sm:$0xff]
  %v688 = vld [vmem:[%s8 + $0x8] sm:$0xff]
  %v689 = vld [vmem:[%s8 + $0x10] sm:$0xff]
  %v690 = vld [vmem:[%s8 + $0x18] sm:$0xff]
  %v691 = vld [vmem:[%s8 + $0x20] sm:$0xff]
  %v692 = vld [vmem:[%s8 + $0x28] sm:$0xff]
  %v693 = vld [vmem:[%s8 + $0x30] sm:$0xff]
  %v694 = vld [vmem:[%s8 + $0x38] sm:$0xff]
  %v695 = vld [vmem:[%s8 + $0x40] sm:$0xff]
  %v696 = vld [vmem:[%s8 + $0x48] sm:$0xff]
  %v697 = vld [vmem:[%s8 + $0x50] sm:$0xff]
  %v698 = vld [vmem:[%s8 + $0x58] sm:$0xff]
  %v699 = vld [vmem:[%s8 + $0x60] sm:$0xff]
  %v700 = vld [vmem:[%s8 + $0x68] sm:$0xff]
  %v701 = vld [vmem:[%s8 + $0x70] sm:$0xff]
  %v702 = vld [vmem:[%s8 + $0x78] sm:$0xff]
  %v703 = vld [vmem:[%s9] sm:$0xff]
  %v704 = vld [vmem:[%s9 + $0x8] sm:$0xff]
  %v705 = vld [vmem:[%s9 + $0x10] sm:$0xff]
  %v706 = vld [vmem:[%s9 + $0x18] sm:$0xff]
  %v707 = vld [vmem:[%s9 + $0x20] sm:$0xff]
  %v708 = vld [vmem:[%s9 + $0x28] sm:$0xff]
  %v709 = vld [vmem:[%s9 + $0x30] sm:$0xff]
  %v710 = vld [vmem:[%s9 + $0x38] sm:$0xff]
  %v711 = vld [vmem:[%s9 + $0x40] sm:$0xff]
  %v712 = vld [vmem:[%s9 + $0x48] sm:$0xff]
  %v713 = vld [vmem:[%s9 + $0x50] sm:$0xff]
  %v714 = vld [vmem:[%s9 + $0x58] sm:$0xff]
  %v715 = vld [vmem:[%s9 + $0x60] sm:$0xff]
  %v716 = vld [vmem:[%s9 + $0x68] sm:$0xff]
  %v717 = vld [vmem:[%s9 + $0x70] sm:$0xff]
  %v718 = vld [vmem:[%s9 + $0x78] sm:$0xff]
  %735 = vrot.lane.b32.xlu0 %v619, 96
  %v736 = vpop.permute.xlu0 %735
  %737 = vrot.lane.b32.xlu0 %v620, 96
  %v738 = vpop.permute.xlu0 %737
  %739 = vrot.lane.b32.xlu0 %v621, 96
  %v740 = vpop.permute.xlu0 %739
  %741 = vrot.lane.b32.xlu0 %v622, 96
  %v742 = vpop.permute.xlu0 %741
  %743 = vrot.lane.b32.xlu0 %v623, 96
  %v744 = vpop.permute.xlu0 %743
  %745 = vrot.lane.b32.xlu0 %v624, 96
  %v746 = vpop.permute.xlu0 %745
  %747 = vrot.lane.b32.xlu0 %v625, 96
  %v748 = vpop.permute.xlu0 %747
  %749 = vrot.lane.b32.xlu0 %v626, 96
  %v750 = vpop.permute.xlu0 %749
  %751 = vrot.lane.b32.xlu0 %v679, 96
  %v752 = vpop.permute.xlu0 %751
  %753 = vrot.lane.b32.xlu0 %v680, 96
  %v754 = vpop.permute.xlu0 %753
  %755 = vrot.lane.b32.xlu0 %v681, 96
  %v756 = vpop.permute.xlu0 %755
  %757 = vrot.lane.b32.xlu0 %v682, 96
  %v758 = vpop.permute.xlu0 %757
  %759 = vrot.lane.b32.xlu0 %v683, 96
  %v760 = vpop.permute.xlu0 %759
  %761 = vrot.lane.b32.xlu0 %v684, 96
  %v762 = vpop.permute.xlu0 %761
  %763 = vrot.lane.b32.xlu0 %v685, 96
  %v764 = vpop.permute.xlu0 %763
  %765 = vrot.lane.b32.xlu0 %v686, 96
  %v766 = vpop.permute.xlu0 %765
  %783 = vmatprep.subr.mxu0 0.0
  %784 = vmatpush1.msra.mxu0 %v766
  %785 = vmatprep.subr.mxu0 0.0
  %786 = vmatpush1.msra.mxu0 %v764
  %787 = vmatprep.subr.mxu0 0.0
  %788 = vmatpush1.msra.mxu0 %v762
  %789 = vmatprep.subr.mxu0 0.0
  %790 = vmatpush1.msra.mxu0 %v760
  %791 = vmatprep.subr.mxu0 0.0
  %792 = vmatpush1.msra.mxu0 %v758
  %793 = vmatprep.subr.mxu0 0.0
  %794 = vmatpush1.msra.mxu0 %v756
  %795 = vmatprep.subr.mxu0 0.0
  %796 = vmatpush1.msra.mxu0 %v754
  %797 = vmatprep.subr.mxu0 0.0
  %798 = vmatpush1.msra.mxu0 %v752
  %799 = vmatprep.subr.mxu0 0.0
  %800 = vmatpush1.msra.mxu0 %v750
  %801 = vmatprep.subr.mxu0 0.0
  %802 = vmatpush1.msra.mxu0 %v748
  %803 = vmatprep.subr.mxu0 0.0
  %804 = vmatpush1.msra.mxu0 %v746
  %805 = vmatprep.subr.mxu0 0.0
  %806 = vmatpush1.msra.mxu0 %v744
  %807 = vmatprep.subr.mxu0 0.0
  %808 = vmatpush1.msra.mxu0 %v742
  %809 = vmatprep.subr.mxu0 0.0
  %810 = vmatpush1.msra.mxu0 %v740
  %811 = vmatprep.subr.mxu0 0.0
  %812 = vmatpush1.msra.mxu0 %v738
  %813 = vmatprep.subr.mxu0 0.0
  %814 = vmatpush1.msra.mxu0 %v736
  %815 = vmatprep.subr.mxu0 0.0
  %816 = vmatpush2.msra.mxu0 0.0
  %817 = vmatprep.subr.mxu0 0.0
  %818 = vmatpush2.msra.mxu0 0.0
  %819 = vmatprep.subr.mxu0 0.0
  %820 = vmatpush2.msra.mxu0 0.0
  %821 = vmatprep.subr.mxu0 0.0
  %822 = vmatpush2.msra.mxu0 0.0
  %823 = vmatprep.subr.mxu0 0.0
  %824 = vmatpush2.msra.mxu0 0.0
  %825 = vmatprep.subr.mxu0 0.0
  %826 = vmatpush2.msra.mxu0 0.0
  %827 = vmatprep.subr.mxu0 0.0
  %828 = vmatpush2.msra.mxu0 0.0
  %829 = vmatprep.subr.mxu0 0.0
  %830 = vmatpush2.msra.mxu0 0.0
  %831 = vmatprep.subr.mxu0 0.0
  %832 = vmatpush2.msra.mxu0 0.0
  %833 = vmatprep.subr.mxu0 0.0
  %834 = vmatpush2.msra.mxu0 0.0
  %835 = vmatprep.subr.mxu0 0.0
  %836 = vmatpush2.msra.mxu0 0.0
  %837 = vmatprep.subr.mxu0 0.0
  %838 = vmatpush2.msra.mxu0 0.0
  %839 = vmatprep.subr.mxu0 0.0
  %840 = vmatpush2.msra.mxu0 0.0
  %841 = vmatprep.subr.mxu0 0.0
  %842 = vmatpush2.msra.mxu0 0.0
  %843 = vmatprep.subr.mxu0 0.0
  %844 = vmatpush2.msra.mxu0 0.0
  %845 = vmatprep.subr.mxu0 0.0
  %846 = vmatpush2.msra.mxu0 0.0
  %847 = vmatprep.mubr.f32.mxu0 0.0
  %848 = vmatmul.mubr.f32.gmra.mxu0 %v687
  %v849 = vpop.f32.mrf.mxu0
  %v850 = vadd.f32 %v703, %v849
  %v851 = vpop.f32.mrf.mxu0
  %852 = vmatprep.mubr.f32.mxu0 0.0
  %853 = vmatmul.mubr.f32.gmra.mxu0 %v688
  %v854 = vpop.f32.mrf.mxu0
  %v855 = vadd.f32 %v704, %v854
  %v856 = vpop.f32.mrf.mxu0
  %857 = vmatprep.mubr.f32.mxu0 0.0
  %858 = vmatmul.mubr.f32.gmra.mxu0 %v689
  %v859 = vpop.f32.mrf.mxu0
  %v860 = vadd.f32 %v705, %v859
  %v861 = vpop.f32.mrf.mxu0
  %862 = vmatprep.mubr.f32.mxu0 0.0
  %863 = vmatmul.mubr.f32.gmra.mxu0 %v690
  %v864 = vpop.f32.mrf.mxu0
  %v865 = vadd.f32 %v706, %v864
  %v866 = vpop.f32.mrf.mxu0
  %867 = vmatprep.mubr.f32.mxu0 0.0
  %868 = vmatmul.mubr.f32.gmra.mxu0 %v691
  %v869 = vpop.f32.mrf.mxu0
  %v870 = vadd.f32 %v707, %v869
  %v871 = vpop.f32.mrf.mxu0
  %872 = vmatprep.mubr.f32.mxu0 0.0
  %873 = vmatmul.mubr.f32.gmra.mxu0 %v692
  %v874 = vpop.f32.mrf.mxu0
  %v875 = vadd.f32 %v708, %v874
  %v876 = vpop.f32.mrf.mxu0
  %877 = vmatprep.mubr.f32.mxu0 0.0
  %878 = vmatmul.mubr.f32.gmra.mxu0 %v693
  %v879 = vpop.f32.mrf.mxu0
  %v880 = vadd.f32 %v709, %v879
  %v881 = vpop.f32.mrf.mxu0
  %882 = vmatprep.mubr.f32.mxu0 0.0
  %883 = vmatmul.mubr.f32.gmra.mxu0 %v694
  %v884 = vpop.f32.mrf.mxu0
  %v885 = vadd.f32 %v710, %v884
  %v886 = vpop.f32.mrf.mxu0
  %887 = vmatprep.mubr.f32.mxu0 0.0
  %888 = vmatmul.mubr.f32.gmra.mxu0 %v695
  %v889 = vpop.f32.mrf.mxu0
  %v890 = vadd.f32 %v711, %v889
  %v891 = vpop.f32.mrf.mxu0
  %892 = vmatprep.mubr.f32.mxu0 0.0
  %893 = vmatmul.mubr.f32.gmra.mxu0 %v696
  %v894 = vpop.f32.mrf.mxu0
  %v895 = vadd.f32 %v712, %v894
  %v896 = vpop.f32.mrf.mxu0
  %897 = vmatprep.mubr.f32.mxu0 0.0
  %898 = vmatmul.mubr.f32.gmra.mxu0 %v697
  %v899 = vpop.f32.mrf.mxu0
  %v900 = vadd.f32 %v713, %v899
  %v901 = vpop.f32.mrf.mxu0
  %902 = vmatprep.mubr.f32.mxu0 0.0
  %903 = vmatmul.mubr.f32.gmra.mxu0 %v698
  %v904 = vpop.f32.mrf.mxu0
  %v905 = vadd.f32 %v714, %v904
  %v906 = vpop.f32.mrf.mxu0
  %907 = vmatprep.mubr.f32.mxu0 0.0
  %908 = vmatmul.mubr.f32.gmra.mxu0 %v699
  %v909 = vpop.f32.mrf.mxu0
  %v910 = vadd.f32 %v715, %v909
  %v911 = vpop.f32.mrf.mxu0
  %912 = vmatprep.mubr.f32.mxu0 0.0
  %913 = vmatmul.mubr.f32.gmra.mxu0 %v700
  %v914 = vpop.f32.mrf.mxu0
  %v915 = vadd.f32 %v716, %v914
  %v916 = vpop.f32.mrf.mxu0
  %917 = vmatprep.mubr.f32.mxu0 0.0
  %918 = vmatmul.mubr.f32.gmra.mxu0 %v701
  %v919 = vpop.f32.mrf.mxu0
  %v920 = vadd.f32 %v717, %v919
  %v921 = vpop.f32.mrf.mxu0
  %922 = vmatprep.mubr.f32.mxu0 0.0
  %923 = vmatmul.mubr.f32.gmra.mxu0 %v702
  %v924 = vpop.f32.mrf.mxu0
  %v925 = vadd.f32 %v718, %v924
  %v926 = vpop.f32.mrf.mxu0
  %927 = vdwg.mxu0
  %v928 = vld [vmem:[%s3 + $0x20] sm:$0xff]
  %v929 = vld [vmem:[%s3 + $0x28] sm:$0xff]
  %v930 = vld [vmem:[%s3 + $0x30] sm:$0xff]
  %v931 = vld [vmem:[%s3 + $0x38] sm:$0xff]
  %v932 = vld [vmem:[%s4 + $0x2] sm:$0x1]
  %v933 = vlaneseq
  %v934 = vshrl.u32 %v933, 7
  %v935 = vsub.s32 0, %v934
  %v936 = vrot.slane %v932, %v935
  %v938 = vsel %vm192, %v850, 0
  %v941 = vsel %vm192, %v855, 0
  %v944 = vsel %vm192, %v860, 0
  %v947 = vsel %vm192, %v865, 0
  %v950 = vsel %vm192, %v870, 0
  %v953 = vsel %vm192, %v875, 0
  %v956 = vsel %vm192, %v880, 0
  %v959 = vsel %vm192, %v885, 0
  %961 = vmatprep.subr.mxu0 0.0
  %962 = vmatpush1.msra.mxu0 0.0
  %963 = vmatprep.subr.mxu0 0.0
  %964 = vmatpush1.msra.mxu0 0.0
  %965 = vmatprep.subr.mxu0 0.0
  %966 = vmatpush1.msra.mxu0 0.0
  %967 = vmatprep.subr.mxu0 0.0
  %968 = vmatpush1.msra.mxu0 0.0
  %969 = vmatprep.subr.mxu0 0.0
  %970 = vmatpush1.msra.mxu0 0.0
  %971 = vmatprep.subr.mxu0 0.0
  %972 = vmatpush1.msra.mxu0 0.0
  %973 = vmatprep.subr.mxu0 0.0
  %974 = vmatpush1.msra.mxu0 0.0
  %975 = vmatprep.subr.mxu0 0.0
  %976 = vmatpush1.msra.mxu0 0.0
  %977 = vmatprep.subr.mxu0 0.0
  %978 = vmatpush1.msra.mxu0 0.0
  %979 = vmatprep.subr.mxu0 0.0
  %980 = vmatpush1.msra.mxu0 0.0
  %981 = vmatprep.subr.mxu0 0.0
  %982 = vmatpush1.msra.mxu0 0.0
  %983 = vmatprep.subr.mxu0 0.0
  %984 = vmatpush1.msra.mxu0 0.0
  %985 = vmatprep.subr.mxu0 0.0
  %986 = vmatpush1.msra.mxu0 %v931
  %987 = vmatprep.subr.mxu0 0.0
  %988 = vmatpush1.msra.mxu0 %v930
  %989 = vmatprep.subr.mxu0 0.0
  %990 = vmatpush1.msra.mxu0 %v929
  %991 = vmatprep.subr.mxu0 0.0
  %992 = vmatpush1.msra.mxu0 %v928
  %993 = vmatprep.subr.mxu0 0.0
  %994 = vmatpush2.msra.mxu0 0.0
  %995 = vmatprep.subr.mxu0 0.0
  %996 = vmatpush2.msra.mxu0 0.0
  %997 = vmatprep.subr.mxu0 0.0
  %998 = vmatpush2.msra.mxu0 0.0
  %999 = vmatprep.subr.mxu0 0.0
  %1000 = vmatpush2.msra.mxu0 0.0
  %1001 = vmatprep.subr.mxu0 0.0
  %1002 = vmatpush2.msra.mxu0 0.0
  %1003 = vmatprep.subr.mxu0 0.0
  %1004 = vmatpush2.msra.mxu0 0.0
  %1005 = vmatprep.subr.mxu0 0.0
  %1006 = vmatpush2.msra.mxu0 0.0
  %1007 = vmatprep.subr.mxu0 0.0
  %1008 = vmatpush2.msra.mxu0 0.0
  %1009 = vmatprep.subr.mxu0 0.0
  %1010 = vmatpush2.msra.mxu0 0.0
  %1011 = vmatprep.subr.mxu0 0.0
  %1012 = vmatpush2.msra.mxu0 0.0
  %1013 = vmatprep.subr.mxu0 0.0
  %1014 = vmatpush2.msra.mxu0 0.0
  %1015 = vmatprep.subr.mxu0 0.0
  %1016 = vmatpush2.msra.mxu0 0.0
  %1017 = vmatprep.subr.mxu0 0.0
  %1018 = vmatpush2.msra.mxu0 0.0
  %1019 = vmatprep.subr.mxu0 0.0
  %1020 = vmatpush2.msra.mxu0 0.0
  %1021 = vmatprep.subr.mxu0 0.0
  %1022 = vmatpush2.msra.mxu0 0.0
  %1023 = vmatprep.subr.mxu0 0.0
  %1024 = vmatpush2.msra.mxu0 0.0
  %1025 = vmatprep.mubr.f32.mxu0 0.0
  %1026 = vmatmul.mubr.f32.gmra.mxu0 %v938
  %v1027 = vpop.f32.mrf.mxu0
  %v1028 = vadd.f32 %v936, %v1027
  %v1029 = vpop.f32.mrf.mxu0
  %1030 = vmatprep.mubr.f32.mxu0 0.0
  %1031 = vmatmul.mubr.f32.gmra.mxu0 %v941
  %v1032 = vpop.f32.mrf.mxu0
  %v1033 = vadd.f32 %v936, %v1032
  %v1034 = vpop.f32.mrf.mxu0
  %1035 = vmatprep.mubr.f32.mxu0 0.0
  %1036 = vmatmul.mubr.f32.gmra.mxu0 %v944
  %v1037 = vpop.f32.mrf.mxu0
  %v1038 = vadd.f32 %v936, %v1037
  %v1039 = vpop.f32.mrf.mxu0
  %1040 = vmatprep.mubr.f32.mxu0 0.0
  %1041 = vmatmul.mubr.f32.gmra.mxu0 %v947
  %v1042 = vpop.f32.mrf.mxu0
  %v1043 = vadd.f32 %v936, %v1042
  %v1044 = vpop.f32.mrf.mxu0
  %1045 = vmatprep.mubr.f32.mxu0 0.0
  %1046 = vmatmul.mubr.f32.gmra.mxu0 %v950
  %v1047 = vpop.f32.mrf.mxu0
  %v1048 = vadd.f32 %v936, %v1047
  %v1049 = vpop.f32.mrf.mxu0
  %1050 = vmatprep.mubr.f32.mxu0 0.0
  %1051 = vmatmul.mubr.f32.gmra.mxu0 %v953
  %v1052 = vpop.f32.mrf.mxu0
  %v1053 = vadd.f32 %v936, %v1052
  %v1054 = vpop.f32.mrf.mxu0
  %1055 = vmatprep.mubr.f32.mxu0 0.0
  %1056 = vmatmul.mubr.f32.gmra.mxu0 %v956
  %v1057 = vpop.f32.mrf.mxu0
  %v1058 = vadd.f32 %v936, %v1057
  %v1059 = vpop.f32.mrf.mxu0
  %1060 = vmatprep.mubr.f32.mxu0 0.0
  %1061 = vmatmul.mubr.f32.gmra.mxu0 %v959
  %v1062 = vpop.f32.mrf.mxu0
  %v1063 = vadd.f32 %v936, %v1062
  %v1064 = vpop.f32.mrf.mxu0
  %1065 = vdwg.mxu0
  %v1066 = vxor.u32 %v1028, 2147483648
  %v1067 = vxor.u32 %v1033, 2147483648
  %v1068 = vxor.u32 %v1038, 2147483648
  %v1069 = vxor.u32 %v1043, 2147483648
  %v1070 = vxor.u32 %v1048, 2147483648
  %v1071 = vxor.u32 %v1053, 2147483648
  %v1072 = vxor.u32 %v1058, 2147483648
  %v1073 = vxor.u32 %v1063, 2147483648
  %v1074 = vmul.f32 %v1066, 1.442695
  %v1075 = vpow.pop %v1074
  %v1076 = vmul.f32 %v1067, 1.442695
  %v1077 = vpow.pop %v1076
  %v1078 = vmul.f32 %v1068, 1.442695
  %v1079 = vpow.pop %v1078
  %v1080 = vmul.f32 %v1069, 1.442695
  %v1081 = vpow.pop %v1080
  %v1082 = vmul.f32 %v1070, 1.442695
  %v1083 = vpow.pop %v1082
  %v1084 = vmul.f32 %v1071, 1.442695
  %v1085 = vpow.pop %v1084
  %v1086 = vmul.f32 %v1072, 1.442695
  %v1087 = vpow.pop %v1086
  %v1088 = vmul.f32 %v1073, 1.442695
  %v1089 = vpow.pop %v1088
  %v1090 = vadd.f32 %v1075, 1.0
  %v1091 = vadd.f32 %v1077, 1.0
  %v1092 = vadd.f32 %v1079, 1.0
  %v1093 = vadd.f32 %v1081, 1.0
  %v1094 = vadd.f32 %v1083, 1.0
  %v1095 = vadd.f32 %v1085, 1.0
  %v1096 = vadd.f32 %v1087, 1.0
  %v1097 = vadd.f32 %v1089, 1.0
  %v1098 = vrcp.pop %v1090
  %v1099 = vmul.f32 1.0, %v1098
  %v1100 = vrcp.pop %v1091
  %v1101 = vmul.f32 1.0, %v1100
  %v1102 = vrcp.pop %v1092
  %v1103 = vmul.f32 1.0, %v1102
  %v1104 = vrcp.pop %v1093
  %v1105 = vmul.f32 1.0, %v1104
  %v1106 = vrcp.pop %v1094
  %v1107 = vmul.f32 1.0, %v1106
  %v1108 = vrcp.pop %v1095
  %v1109 = vmul.f32 1.0, %v1108
  %v1110 = vrcp.pop %v1096
  %v1111 = vmul.f32 1.0, %v1110
  %v1112 = vrcp.pop %v1097
  %v1113 = vmul.f32 1.0, %v1112
  %v1114 = vmul.f32 %v1028, %v1099
  %v1115 = vmul.f32 %v1033, %v1101
  %v1116 = vmul.f32 %v1038, %v1103
  %v1117 = vmul.f32 %v1043, %v1105
  %v1118 = vmul.f32 %v1048, %v1107
  %v1119 = vmul.f32 %v1053, %v1109
  %v1120 = vmul.f32 %v1058, %v1111
  %v1121 = vmul.f32 %v1063, %v1113
  %v1122 = vld [vmem:[%s3 + $0x40] sm:$0xff]
  %v1123 = vld [vmem:[%s3 + $0x48] sm:$0xff]
  %v1124 = vld [vmem:[%s3 + $0x50] sm:$0xff]
  %v1125 = vld [vmem:[%s3 + $0x58] sm:$0xff]
  %v1126 = vld [vmem:[%s4 + $0x3] sm:$0x1]
  %v1127 = vlaneseq
  %v1128 = vshrl.u32 %v1127, 7
  %v1129 = vsub.s32 0, %v1128
  %v1130 = vrot.slane %v1126, %v1129
  %v1132 = vsel %vm192, %v1114, 0
  %v1135 = vsel %vm192, %v1115, 0
  %v1138 = vsel %vm192, %v1116, 0
  %v1141 = vsel %vm192, %v1117, 0
  %v1144 = vsel %vm192, %v1118, 0
  %v1147 = vsel %vm192, %v1119, 0
  %v1150 = vsel %vm192, %v1120, 0
  %v1153 = vsel %vm192, %v1121, 0
  %1155 = vmatprep.subr.mxu0 0.0
  %1156 = vmatpush1.msra.mxu0 0.0
  %1157 = vmatprep.subr.mxu0 0.0
  %1158 = vmatpush1.msra.mxu0 0.0
  %1159 = vmatprep.subr.mxu0 0.0
  %1160 = vmatpush1.msra.mxu0 0.0
  %1161 = vmatprep.subr.mxu0 0.0
  %1162 = vmatpush1.msra.mxu0 0.0
  %1163 = vmatprep.subr.mxu0 0.0
  %1164 = vmatpush1.msra.mxu0 0.0
  %1165 = vmatprep.subr.mxu0 0.0
  %1166 = vmatpush1.msra.mxu0 0.0
  %1167 = vmatprep.subr.mxu0 0.0
  %1168 = vmatpush1.msra.mxu0 0.0
  %1169 = vmatprep.subr.mxu0 0.0
  %1170 = vmatpush1.msra.mxu0 0.0
  %1171 = vmatprep.subr.mxu0 0.0
  %1172 = vmatpush1.msra.mxu0 0.0
  %1173 = vmatprep.subr.mxu0 0.0
  %1174 = vmatpush1.msra.mxu0 0.0
  %1175 = vmatprep.subr.mxu0 0.0
  %1176 = vmatpush1.msra.mxu0 0.0
  %1177 = vmatprep.subr.mxu0 0.0
  %1178 = vmatpush1.msra.mxu0 0.0
  %1179 = vmatprep.subr.mxu0 0.0
  %1180 = vmatpush1.msra.mxu0 %v1125
  %1181 = vmatprep.subr.mxu0 0.0
  %1182 = vmatpush1.msra.mxu0 %v1124
  %1183 = vmatprep.subr.mxu0 0.0
  %1184 = vmatpush1.msra.mxu0 %v1123
  %1185 = vmatprep.subr.mxu0 0.0
  %1186 = vmatpush1.msra.mxu0 %v1122
  %1187 = vmatprep.subr.mxu0 0.0
  %1188 = vmatpush2.msra.mxu0 0.0
  %1189 = vmatprep.subr.mxu0 0.0
  %1190 = vmatpush2.msra.mxu0 0.0
  %1191 = vmatprep.subr.mxu0 0.0
  %1192 = vmatpush2.msra.mxu0 0.0
  %1193 = vmatprep.subr.mxu0 0.0
  %1194 = vmatpush2.msra.mxu0 0.0
  %1195 = vmatprep.subr.mxu0 0.0
  %1196 = vmatpush2.msra.mxu0 0.0
  %1197 = vmatprep.subr.mxu0 0.0
  %1198 = vmatpush2.msra.mxu0 0.0
  %1199 = vmatprep.subr.mxu0 0.0
  %1200 = vmatpush2.msra.mxu0 0.0
  %1201 = vmatprep.subr.mxu0 0.0
  %1202 = vmatpush2.msra.mxu0 0.0
  %1203 = vmatprep.subr.mxu0 0.0
  %1204 = vmatpush2.msra.mxu0 0.0
  %1205 = vmatprep.subr.mxu0 0.0
  %1206 = vmatpush2.msra.mxu0 0.0
  %1207 = vmatprep.subr.mxu0 0.0
  %1208 = vmatpush2.msra.mxu0 0.0
  %1209 = vmatprep.subr.mxu0 0.0
  %1210 = vmatpush2.msra.mxu0 0.0
  %1211 = vmatprep.subr.mxu0 0.0
  %1212 = vmatpush2.msra.mxu0 0.0
  %1213 = vmatprep.subr.mxu0 0.0
  %1214 = vmatpush2.msra.mxu0 0.0
  %1215 = vmatprep.subr.mxu0 0.0
  %1216 = vmatpush2.msra.mxu0 0.0
  %1217 = vmatprep.subr.mxu0 0.0
  %1218 = vmatpush2.msra.mxu0 0.0
  %1219 = vmatprep.mubr.f32.mxu0 0.0
  %1220 = vmatmul.mubr.f32.gmra.mxu0 %v1132
  %v1221 = vpop.f32.mrf.mxu0
  %v1222 = vadd.f32 %v1130, %v1221
  %v1223 = vpop.f32.mrf.mxu0
  %1224 = vmatprep.mubr.f32.mxu0 0.0
  %1225 = vmatmul.mubr.f32.gmra.mxu0 %v1135
  %v1226 = vpop.f32.mrf.mxu0
  %v1227 = vadd.f32 %v1130, %v1226
  %v1228 = vpop.f32.mrf.mxu0
  %1229 = vmatprep.mubr.f32.mxu0 0.0
  %1230 = vmatmul.mubr.f32.gmra.mxu0 %v1138
  %v1231 = vpop.f32.mrf.mxu0
  %v1232 = vadd.f32 %v1130, %v1231
  %v1233 = vpop.f32.mrf.mxu0
  %1234 = vmatprep.mubr.f32.mxu0 0.0
  %1235 = vmatmul.mubr.f32.gmra.mxu0 %v1141
  %v1236 = vpop.f32.mrf.mxu0
  %v1237 = vadd.f32 %v1130, %v1236
  %v1238 = vpop.f32.mrf.mxu0
  %1239 = vmatprep.mubr.f32.mxu0 0.0
  %1240 = vmatmul.mubr.f32.gmra.mxu0 %v1144
  %v1241 = vpop.f32.mrf.mxu0
  %v1242 = vadd.f32 %v1130, %v1241
  %v1243 = vpop.f32.mrf.mxu0
  %1244 = vmatprep.mubr.f32.mxu0 0.0
  %1245 = vmatmul.mubr.f32.gmra.mxu0 %v1147
  %v1246 = vpop.f32.mrf.mxu0
  %v1247 = vadd.f32 %v1130, %v1246
  %v1248 = vpop.f32.mrf.mxu0
  %1249 = vmatprep.mubr.f32.mxu0 0.0
  %1250 = vmatmul.mubr.f32.gmra.mxu0 %v1150
  %v1251 = vpop.f32.mrf.mxu0
  %v1252 = vadd.f32 %v1130, %v1251
  %v1253 = vpop.f32.mrf.mxu0
  %1254 = vmatprep.mubr.f32.mxu0 0.0
  %1255 = vmatmul.mubr.f32.gmra.mxu0 %v1153
  %v1256 = vpop.f32.mrf.mxu0
  %v1257 = vadd.f32 %v1130, %v1256
  %v1258 = vpop.f32.mrf.mxu0
  %1259 = vdwg.mxu0
  %v1260 = vld [vmem:[%s10] sm:$0xff]
  %v1261 = vld [vmem:[%s10 + $0x8] sm:$0xff]
  %v1262 = vld [vmem:[%s10 + $0x10] sm:$0xff]
  %v1263 = vld [vmem:[%s10 + $0x18] sm:$0xff]
  %v1264 = vld [vmem:[%s10 + $0x20] sm:$0xff]
  %v1265 = vld [vmem:[%s10 + $0x28] sm:$0xff]
  %v1266 = vld [vmem:[%s10 + $0x30] sm:$0xff]
  %v1267 = vld [vmem:[%s10 + $0x38] sm:$0xff]
  %v1268 = vld [vmem:[%s10 + $0x40] sm:$0xff]
  %v1269 = vld [vmem:[%s10 + $0x48] sm:$0xff]
  %v1270 = vld [vmem:[%s10 + $0x50] sm:$0xff]
  %v1271 = vld [vmem:[%s10 + $0x58] sm:$0xff]
  %v1272 = vld [vmem:[%s10 + $0x60] sm:$0xff]
  %v1273 = vld [vmem:[%s10 + $0x68] sm:$0xff]
  %v1274 = vld [vmem:[%s10 + $0x70] sm:$0xff]
  %v1275 = vld [vmem:[%s10 + $0x78] sm:$0xff]
  %v1276 = vld [vmem:[%s11] sm:$0xff]
  %v1277 = vld [vmem:[%s11 + $0x8] sm:$0xff]
  %v1278 = vld [vmem:[%s11 + $0x10] sm:$0xff]
  %v1279 = vld [vmem:[%s11 + $0x18] sm:$0xff]
  %v1280 = vld [vmem:[%s11 + $0x20] sm:$0xff]
  %v1281 = vld [vmem:[%s11 + $0x28] sm:$0xff]
  %v1282 = vld [vmem:[%s11 + $0x30] sm:$0xff]
  %v1283 = vld [vmem:[%s11 + $0x38] sm:$0xff]
  %v1284 = vld [vmem:[%s11 + $0x40] sm:$0xff]
  %v1285 = vld [vmem:[%s11 + $0x48] sm:$0xff]
  %v1286 = vld [vmem:[%s11 + $0x50] sm:$0xff]
  %v1287 = vld [vmem:[%s11 + $0x58] sm:$0xff]
  %v1288 = vld [vmem:[%s11 + $0x60] sm:$0xff]
  %v1289 = vld [vmem:[%s11 + $0x68] sm:$0xff]
  %v1290 = vld [vmem:[%s11 + $0x70] sm:$0xff]
  %v1291 = vld [vmem:[%s11 + $0x78] sm:$0xff]
  %vm1292 = vcmask 523264
  %v1294 = vsel %vm1292, %v1260, 0
  %v1297 = vsel %vm1292, %v1261, 0
  %v1300 = vsel %vm1292, %v1262, 0
  %v1303 = vsel %vm1292, %v1263, 0
  %v1306 = vsel %vm1292, %v1264, 0
  %v1309 = vsel %vm1292, %v1265, 0
  %v1312 = vsel %vm1292, %v1266, 0
  %v1315 = vsel %vm1292, %v1267, 0
  %v1318 = vsel %vm1292, %v1268, 0
  %v1321 = vsel %vm1292, %v1269, 0
  %v1324 = vsel %vm1292, %v1270, 0
  %v1327 = vsel %vm1292, %v1271, 0
  %v1330 = vsel %vm1292, %v1272, 0
  %v1333 = vsel %vm1292, %v1273, 0
  %v1336 = vsel %vm1292, %v1274, 0
  %v1339 = vsel %vm1292, %v1275, 0
  %1341 = vmatprep.subr.mxu0 0.0
  %1342 = vmatpush1.msra.mxu0 0.0
  %1343 = vmatprep.subr.mxu0 0.0
  %1344 = vmatpush1.msra.mxu0 0.0
  %1345 = vmatprep.subr.mxu0 0.0
  %1346 = vmatpush1.msra.mxu0 0.0
  %1347 = vmatprep.subr.mxu0 0.0
  %1348 = vmatpush1.msra.mxu0 0.0
  %1349 = vmatprep.subr.mxu0 0.0
  %1350 = vmatpush1.msra.mxu0 0.0
  %1351 = vmatprep.subr.mxu0 0.0
  %1352 = vmatpush1.msra.mxu0 0.0
  %1353 = vmatprep.subr.mxu0 0.0
  %1354 = vmatpush1.msra.mxu0 0.0
  %1355 = vmatprep.subr.mxu0 0.0
  %1356 = vmatpush1.msra.mxu0 0.0
  %1357 = vmatprep.subr.mxu0 0.0
  %1358 = vmatpush1.msra.mxu0 %v1257
  %1359 = vmatprep.subr.mxu0 0.0
  %1360 = vmatpush1.msra.mxu0 %v1252
  %1361 = vmatprep.subr.mxu0 0.0
  %1362 = vmatpush1.msra.mxu0 %v1247
  %1363 = vmatprep.subr.mxu0 0.0
  %1364 = vmatpush1.msra.mxu0 %v1242
  %1365 = vmatprep.subr.mxu0 0.0
  %1366 = vmatpush1.msra.mxu0 %v1237
  %1367 = vmatprep.subr.mxu0 0.0
  %1368 = vmatpush1.msra.mxu0 %v1232
  %1369 = vmatprep.subr.mxu0 0.0
  %1370 = vmatpush1.msra.mxu0 %v1227
  %1371 = vmatprep.subr.mxu0 0.0
  %1372 = vmatpush1.msra.mxu0 %v1222
  %1373 = vmatprep.subr.mxu0 0.0
  %1374 = vmatpush2.msra.mxu0 0.0
  %1375 = vmatprep.subr.mxu0 0.0
  %1376 = vmatpush2.msra.mxu0 0.0
  %1377 = vmatprep.subr.mxu0 0.0
  %1378 = vmatpush2.msra.mxu0 0.0
  %1379 = vmatprep.subr.mxu0 0.0
  %1380 = vmatpush2.msra.mxu0 0.0
  %1381 = vmatprep.subr.mxu0 0.0
  %1382 = vmatpush2.msra.mxu0 0.0
  %1383 = vmatprep.subr.mxu0 0.0
  %1384 = vmatpush2.msra.mxu0 0.0
  %1385 = vmatprep.subr.mxu0 0.0
  %1386 = vmatpush2.msra.mxu0 0.0
  %1387 = vmatprep.subr.mxu0 0.0
  %1388 = vmatpush2.msra.mxu0 0.0
  %1389 = vmatprep.subr.mxu0 0.0
  %1390 = vmatpush2.msra.mxu0 0.0
  %1391 = vmatprep.subr.mxu0 0.0
  %1392 = vmatpush2.msra.mxu0 0.0
  %1393 = vmatprep.subr.mxu0 0.0
  %1394 = vmatpush2.msra.mxu0 0.0
  %1395 = vmatprep.subr.mxu0 0.0
  %1396 = vmatpush2.msra.mxu0 0.0
  %1397 = vmatprep.subr.mxu0 0.0
  %1398 = vmatpush2.msra.mxu0 0.0
  %1399 = vmatprep.subr.mxu0 0.0
  %1400 = vmatpush2.msra.mxu0 0.0
  %1401 = vmatprep.subr.mxu0 0.0
  %1402 = vmatpush2.msra.mxu0 0.0
  %1403 = vmatprep.subr.mxu0 0.0
  %1404 = vmatpush2.msra.mxu0 0.0
  %1405 = vmatprep.mubr.f32.mxu0 0.0
  %1406 = vmatmul.mubr.f32.gmra.mxu0 %v1294
  %v1407 = vpop.f32.mrf.mxu0
  %v1408 = vadd.f32 %v1276, %v1407
  %v1409 = vpop.f32.mrf.mxu0
  %1410 = vmatprep.mubr.f32.mxu0 0.0
  %1411 = vmatmul.mubr.f32.gmra.mxu0 %v1297
  %v1412 = vpop.f32.mrf.mxu0
  %v1413 = vadd.f32 %v1277, %v1412
  %v1414 = vpop.f32.mrf.mxu0
  %1415 = vmatprep.mubr.f32.mxu0 0.0
  %1416 = vmatmul.mubr.f32.gmra.mxu0 %v1300
  %v1417 = vpop.f32.mrf.mxu0
  %v1418 = vadd.f32 %v1278, %v1417
  %v1419 = vpop.f32.mrf.mxu0
  %1420 = vmatprep.mubr.f32.mxu0 0.0
  %1421 = vmatmul.mubr.f32.gmra.mxu0 %v1303
  %v1422 = vpop.f32.mrf.mxu0
  %v1423 = vadd.f32 %v1279, %v1422
  %v1424 = vpop.f32.mrf.mxu0
  %1425 = vmatprep.mubr.f32.mxu0 0.0
  %1426 = vmatmul.mubr.f32.gmra.mxu0 %v1306
  %v1427 = vpop.f32.mrf.mxu0
  %v1428 = vadd.f32 %v1280, %v1427
  %v1429 = vpop.f32.mrf.mxu0
  %1430 = vmatprep.mubr.f32.mxu0 0.0
  %1431 = vmatmul.mubr.f32.gmra.mxu0 %v1309
  %v1432 = vpop.f32.mrf.mxu0
  %v1433 = vadd.f32 %v1281, %v1432
  %v1434 = vpop.f32.mrf.mxu0
  %1435 = vmatprep.mubr.f32.mxu0 0.0
  %1436 = vmatmul.mubr.f32.gmra.mxu0 %v1312
  %v1437 = vpop.f32.mrf.mxu0
  %v1438 = vadd.f32 %v1282, %v1437
  %v1439 = vpop.f32.mrf.mxu0
  %1440 = vmatprep.mubr.f32.mxu0 0.0
  %1441 = vmatmul.mubr.f32.gmra.mxu0 %v1315
  %v1442 = vpop.f32.mrf.mxu0
  %v1443 = vadd.f32 %v1283, %v1442
  %v1444 = vpop.f32.mrf.mxu0
  %1445 = vmatprep.mubr.f32.mxu0 0.0
  %1446 = vmatmul.mubr.f32.gmra.mxu0 %v1318
  %v1447 = vpop.f32.mrf.mxu0
  %v1448 = vadd.f32 %v1284, %v1447
  %v1449 = vpop.f32.mrf.mxu0
  %1450 = vmatprep.mubr.f32.mxu0 0.0
  %1451 = vmatmul.mubr.f32.gmra.mxu0 %v1321
  %v1452 = vpop.f32.mrf.mxu0
  %v1453 = vadd.f32 %v1285, %v1452
  %v1454 = vpop.f32.mrf.mxu0
  %1455 = vmatprep.mubr.f32.mxu0 0.0
  %1456 = vmatmul.mubr.f32.gmra.mxu0 %v1324
  %v1457 = vpop.f32.mrf.mxu0
  %v1458 = vadd.f32 %v1286, %v1457
  %v1459 = vpop.f32.mrf.mxu0
  %1460 = vmatprep.mubr.f32.mxu0 0.0
  %1461 = vmatmul.mubr.f32.gmra.mxu0 %v1327
  %v1462 = vpop.f32.mrf.mxu0
  %v1463 = vadd.f32 %v1287, %v1462
  %v1464 = vpop.f32.mrf.mxu0
  %1465 = vmatprep.mubr.f32.mxu0 0.0
  %1466 = vmatmul.mubr.f32.gmra.mxu0 %v1330
  %v1467 = vpop.f32.mrf.mxu0
  %v1468 = vadd.f32 %v1288, %v1467
  %v1469 = vpop.f32.mrf.mxu0
  %1470 = vmatprep.mubr.f32.mxu0 0.0
  %1471 = vmatmul.mubr.f32.gmra.mxu0 %v1333
  %v1472 = vpop.f32.mrf.mxu0
  %v1473 = vadd.f32 %v1289, %v1472
  %v1474 = vpop.f32.mrf.mxu0
  %1475 = vmatprep.mubr.f32.mxu0 0.0
  %1476 = vmatmul.mubr.f32.gmra.mxu0 %v1336
  %v1477 = vpop.f32.mrf.mxu0
  %v1478 = vadd.f32 %v1290, %v1477
  %v1479 = vpop.f32.mrf.mxu0
  %1480 = vmatprep.mubr.f32.mxu0 0.0
  %1481 = vmatmul.mubr.f32.gmra.mxu0 %v1339
  %v1482 = vpop.f32.mrf.mxu0
  %v1483 = vadd.f32 %v1291, %v1482
  %v1484 = vpop.f32.mrf.mxu0
  %1485 = vdwg.mxu0
  %v1486 = vlaneseq
  %v1487 = vshrl.u32 %v1486, 7
  %v1488 = vadd.s32 %v1487, 8
  %v1489 = vadd.s32 %v1487, 16
  %v1490 = vadd.s32 %v1487, 24
  %v1491 = vadd.s32 %v1487, 32
  %v1492 = vadd.s32 %v1487, 40
  %v1493 = vadd.s32 %v1487, 48
  %v1494 = vadd.s32 %v1487, 56
  %v1495 = vlaneseq
  %v1496 = vand.u32 %v1495, 127
  %v1497 = vadd.s32 %v1487, %v1496
  %v1498 = vadd.s32 %v1488, %v1496
  %v1499 = vadd.s32 %v1489, %v1496
  %v1500 = vadd.s32 %v1490, %v1496
  %v1501 = vadd.s32 %v1491, %v1496
  %v1502 = vadd.s32 %v1492, %v1496
  %v1503 = vadd.s32 %v1493, %v1496
  %v1504 = vadd.s32 %v1494, %v1496
  %vm1505 = vcmp.eq.s32.totalorder %v1497, 63
  %vm1506 = vcmp.eq.s32.totalorder %v1498, 63
  %vm1507 = vcmp.eq.s32.totalorder %v1499, 63
  %vm1508 = vcmp.eq.s32.totalorder %v1500, 63
  %vm1509 = vcmp.eq.s32.totalorder %v1501, 63
  %vm1510 = vcmp.eq.s32.totalorder %v1502, 63
  %vm1511 = vcmp.eq.s32.totalorder %v1503, 63
  %vm1512 = vcmp.eq.s32.totalorder %v1504, 63
  %v1513 = vsel %vm1505, 1, 0
  %v1514 = vsel %vm1506, 1, 0
  %v1515 = vsel %vm1507, 1, 0
  %v1516 = vsel %vm1508, 1, 0
  %v1517 = vsel %vm1509, 1, 0
  %v1518 = vsel %vm1510, 1, 0
  %v1519 = vsel %vm1511, 1, 0
  %v1520 = vsel %vm1512, 1, 0
  %v1521 = vcvt.s32.f32 %v1513
  %v1522 = vcvt.s32.f32 %v1514
  %v1523 = vcvt.s32.f32 %v1515
  %v1524 = vcvt.s32.f32 %v1516
  %v1525 = vcvt.s32.f32 %v1517
  %v1526 = vcvt.s32.f32 %v1518
  %v1527 = vcvt.s32.f32 %v1519
  %v1528 = vcvt.s32.f32 %v1520
  %1537 = vrot.lane.b32.xlu0 %v1448, 32
  %v1538 = vpop.permute.xlu0 %1537
  %1539 = vrot.lane.b32.xlu0 %v1453, 32
  %v1540 = vpop.permute.xlu0 %1539
  %1541 = vrot.lane.b32.xlu0 %v1458, 32
  %v1542 = vpop.permute.xlu0 %1541
  %1543 = vrot.lane.b32.xlu0 %v1463, 32
  %v1544 = vpop.permute.xlu0 %1543
  %1545 = vrot.lane.b32.xlu0 %v1468, 32
  %v1546 = vpop.permute.xlu0 %1545
  %1547 = vrot.lane.b32.xlu0 %v1473, 32
  %v1548 = vpop.permute.xlu0 %1547
  %1549 = vrot.lane.b32.xlu0 %v1478, 32
  %v1550 = vpop.permute.xlu0 %1549
  %1551 = vrot.lane.b32.xlu0 %v1483, 32
  %v1552 = vpop.permute.xlu0 %1551
  %v1561 = vsel %vm192, %v1408, %v1538
  %v1562 = vsel %vm192, %v1413, %v1540
  %v1563 = vsel %vm192, %v1418, %v1542
  %v1564 = vsel %vm192, %v1423, %v1544
  %v1565 = vsel %vm192, %v1428, %v1546
  %v1566 = vsel %vm192, %v1433, %v1548
  %v1567 = vsel %vm192, %v1438, %v1550
  %v1568 = vsel %vm192, %v1443, %v1552
  %v1570 = vsel %vm1292, %v1521, 0
  %v1573 = vsel %vm1292, %v1522, 0
  %v1576 = vsel %vm1292, %v1523, 0
  %v1579 = vsel %vm1292, %v1524, 0
  %v1582 = vsel %vm1292, %v1525, 0
  %v1585 = vsel %vm1292, %v1526, 0
  %v1588 = vsel %vm1292, %v1527, 0
  %v1591 = vsel %vm1292, %v1528, 0
  %1593 = vmatprep.subr.mxu0 0.0
  %1594 = vmatpush1.msra.mxu0 0.0
  %1595 = vmatprep.subr.mxu0 0.0
  %1596 = vmatpush1.msra.mxu0 0.0
  %1597 = vmatprep.subr.mxu0 0.0
  %1598 = vmatpush1.msra.mxu0 0.0
  %1599 = vmatprep.subr.mxu0 0.0
  %1600 = vmatpush1.msra.mxu0 0.0
  %1601 = vmatprep.subr.mxu0 0.0
  %1602 = vmatpush1.msra.mxu0 0.0
  %1603 = vmatprep.subr.mxu0 0.0
  %1604 = vmatpush1.msra.mxu0 0.0
  %1605 = vmatprep.subr.mxu0 0.0
  %1606 = vmatpush1.msra.mxu0 0.0
  %1607 = vmatprep.subr.mxu0 0.0
  %1608 = vmatpush1.msra.mxu0 0.0
  %1609 = vmatprep.subr.mxu0 0.0
  %1610 = vmatpush1.msra.mxu0 %v1568
  %1611 = vmatprep.subr.mxu0 0.0
  %1612 = vmatpush1.msra.mxu0 %v1567
  %1613 = vmatprep.subr.mxu0 0.0
  %1614 = vmatpush1.msra.mxu0 %v1566
  %1615 = vmatprep.subr.mxu0 0.0
  %1616 = vmatpush1.msra.mxu0 %v1565
  %1617 = vmatprep.subr.mxu0 0.0
  %1618 = vmatpush1.msra.mxu0 %v1564
  %1619 = vmatprep.subr.mxu0 0.0
  %1620 = vmatpush1.msra.mxu0 %v1563
  %1621 = vmatprep.subr.mxu0 0.0
  %1622 = vmatpush1.msra.mxu0 %v1562
  %1623 = vmatprep.subr.mxu0 0.0
  %1624 = vmatpush1.msra.mxu0 %v1561
  %1625 = vmatprep.subr.mxu0 0.0
  %1626 = vmatpush2.msra.mxu0 0.0
  %1627 = vmatprep.subr.mxu0 0.0
  %1628 = vmatpush2.msra.mxu0 0.0
  %1629 = vmatprep.subr.mxu0 0.0
  %1630 = vmatpush2.msra.mxu0 0.0
  %1631 = vmatprep.subr.mxu0 0.0
  %1632 = vmatpush2.msra.mxu0 0.0
  %1633 = vmatprep.subr.mxu0 0.0
  %1634 = vmatpush2.msra.mxu0 0.0
  %1635 = vmatprep.subr.mxu0 0.0
  %1636 = vmatpush2.msra.mxu0 0.0
  %1637 = vmatprep.subr.mxu0 0.0
  %1638 = vmatpush2.msra.mxu0 0.0
  %1639 = vmatprep.subr.mxu0 0.0
  %1640 = vmatpush2.msra.mxu0 0.0
  %1641 = vmatprep.subr.mxu0 0.0
  %1642 = vmatpush2.msra.mxu0 0.0
  %1643 = vmatprep.subr.mxu0 0.0
  %1644 = vmatpush2.msra.mxu0 0.0
  %1645 = vmatprep.subr.mxu0 0.0
  %1646 = vmatpush2.msra.mxu0 0.0
  %1647 = vmatprep.subr.mxu0 0.0
  %1648 = vmatpush2.msra.mxu0 0.0
  %1649 = vmatprep.subr.mxu0 0.0
  %1650 = vmatpush2.msra.mxu0 0.0
  %1651 = vmatprep.subr.mxu0 0.0
  %1652 = vmatpush2.msra.mxu0 0.0
  %1653 = vmatprep.subr.mxu0 0.0
  %1654 = vmatpush2.msra.mxu0 0.0
  %1655 = vmatprep.subr.mxu0 0.0
  %1656 = vmatpush2.msra.mxu0 0.0
  %1657 = vmatprep.mubr.f32.mxu0 0.0
  %1658 = vmatmul.mubr.f32.gmra.mxu0 %v1570
  %v1659 = vpop.f32.mrf.mxu0
  %v1660 = vadd.f32 0.0, %v1659
  %v1661 = vpop.f32.mrf.mxu0
  %1662 = vmatprep.mubr.f32.mxu0 0.0
  %1663 = vmatmul.mubr.f32.gmra.mxu0 %v1573
  %v1664 = vpop.f32.mrf.mxu0
  %v1665 = vadd.f32 0.0, %v1664
  %v1666 = vpop.f32.mrf.mxu0
  %1667 = vmatprep.mubr.f32.mxu0 0.0
  %1668 = vmatmul.mubr.f32.gmra.mxu0 %v1576
  %v1669 = vpop.f32.mrf.mxu0
  %v1670 = vadd.f32 0.0, %v1669
  %v1671 = vpop.f32.mrf.mxu0
  %1672 = vmatprep.mubr.f32.mxu0 0.0
  %1673 = vmatmul.mubr.f32.gmra.mxu0 %v1579
  %v1674 = vpop.f32.mrf.mxu0
  %v1675 = vadd.f32 0.0, %v1674
  %v1676 = vpop.f32.mrf.mxu0
  %1677 = vmatprep.mubr.f32.mxu0 0.0
  %1678 = vmatmul.mubr.f32.gmra.mxu0 %v1582
  %v1679 = vpop.f32.mrf.mxu0
  %v1680 = vadd.f32 0.0, %v1679
  %v1681 = vpop.f32.mrf.mxu0
  %1682 = vmatprep.mubr.f32.mxu0 0.0
  %1683 = vmatmul.mubr.f32.gmra.mxu0 %v1585
  %v1684 = vpop.f32.mrf.mxu0
  %v1685 = vadd.f32 0.0, %v1684
  %v1686 = vpop.f32.mrf.mxu0
  %1687 = vmatprep.mubr.f32.mxu0 0.0
  %1688 = vmatmul.mubr.f32.gmra.mxu0 %v1588
  %v1689 = vpop.f32.mrf.mxu0
  %v1690 = vadd.f32 0.0, %v1689
  %v1691 = vpop.f32.mrf.mxu0
  %1692 = vmatprep.mubr.f32.mxu0 0.0
  %1693 = vmatmul.mubr.f32.gmra.mxu0 %v1591
  %v1694 = vpop.f32.mrf.mxu0
  %v1695 = vadd.f32 0.0, %v1694
  %v1696 = vpop.f32.mrf.mxu0
  %1697 = vdwg.mxu0
  %1706 = vrot.lane.b32.xlu0 %v1660, 64
  %v1707 = vpop.permute.xlu0 %1706
  %1708 = vrot.lane.b32.xlu0 %v1665, 64
  %v1709 = vpop.permute.xlu0 %1708
  %1710 = vrot.lane.b32.xlu0 %v1670, 64
  %v1711 = vpop.permute.xlu0 %1710
  %1712 = vrot.lane.b32.xlu0 %v1675, 64
  %v1713 = vpop.permute.xlu0 %1712
  %1714 = vrot.lane.b32.xlu0 %v1680, 64
  %v1715 = vpop.permute.xlu0 %1714
  %1716 = vrot.lane.b32.xlu0 %v1685, 64
  %v1717 = vpop.permute.xlu0 %1716
  %1718 = vrot.lane.b32.xlu0 %v1690, 64
  %v1719 = vpop.permute.xlu0 %1718
  %1720 = vrot.lane.b32.xlu0 %v1695, 64
  %v1721 = vpop.permute.xlu0 %1720
  %v1730 = vsel %vm1292, %v1561, %v1707
  %v1731 = vsel %vm1292, %v1562, %v1709
  %v1732 = vsel %vm1292, %v1563, %v1711
  %v1733 = vsel %vm1292, %v1564, %v1713
  %v1734 = vsel %vm1292, %v1565, %v1715
  %v1735 = vsel %vm1292, %v1566, %v1717
  %v1736 = vsel %vm1292, %v1567, %v1719
  %v1737 = vsel %vm1292, %v1568, %v1721
  %1738 = vst [vmem:[#allocation2] sm:$0xff] %v1730
  %1739 = vst [vmem:[#allocation2 + $0x8] sm:$0xff] %v1731
  %1740 = vst [vmem:[#allocation2 + $0x10] sm:$0xff] %v1732
  %1741 = vst [vmem:[#allocation2 + $0x18] sm:$0xff] %v1733
  %1742 = vst [vmem:[#allocation2 + $0x20] sm:$0xff] %v1734
  %1743 = vst [vmem:[#allocation2 + $0x28] sm:$0xff] %v1735
  %1744 = vst [vmem:[#allocation2 + $0x30] sm:$0xff] %v1736
  %1745 = vst [vmem:[#allocation2 + $0x38] sm:$0xff] %v1737
  %v1746 = vld [vmem:[%s7] sm:$0xff]
  %v1747 = vld [vmem:[%s7 + $0x8] sm:$0xff]
  %v1748 = vld [vmem:[%s7 + $0x10] sm:$0xff]
  %v1749 = vld [vmem:[#allocation2] sm:$0xff]
  %v1750 = vmul.f32 %v1746, 0.0
  %v1751 = vlaneseq
  %v1752 = vshrl.u32 %v1751, 7
  %v1753 = vsub.s32 0, %v1752
  %v1754 = vrot.slane %v1749, %v1753
  %v1755 = vmul.f32 %v1747, %v1754
  %v1756 = vadd.f32 %v1750, %v1755
  %v1757 = vmul.f32 %v1748, %v1756
  %v1758 = vrot.slane %v1757, 4
  %v1759 = vadd.f32 %v1757, %v1758
  %v1760 = vrot.slane %v1759, 2
  %v1761 = vadd.f32 %v1759, %v1760
  %v1762 = vrot.slane %v1761, 1
  %v1763 = vadd.f32 %v1761, %v1762
  %v1764 = vmul.f32 %v1746, %v1756
  %v1765 = vlaneseq
  %v1766 = vshrl.u32 %v1765, 7
  %v1767 = vsub.s32 1, %v1766
  %v1768 = vrot.slane %v1749, %v1767
  %v1769 = vmul.f32 %v1747, %v1768
  %v1770 = vadd.f32 %v1764, %v1769
  %v1771 = vmul.f32 %v1748, %v1770
  %v1772 = vrot.slane %v1771, 4
  %v1773 = vadd.f32 %v1771, %v1772
  %v1774 = vrot.slane %v1773, 2
  %v1775 = vadd.f32 %v1773, %v1774
  %v1776 = vrot.slane %v1775, 1
  %v1777 = vadd.f32 %v1775, %v1776
  %v1778 = vmul.f32 %v1746, %v1770
  %v1779 = vlaneseq
  %v1780 = vshrl.u32 %v1779, 7
  %v1781 = vsub.s32 2, %v1780
  %v1782 = vrot.slane %v1749, %v1781
  %v1783 = vmul.f32 %v1747, %v1782
  %v1784 = vadd.f32 %v1778, %v1783
  %v1785 = vmul.f32 %v1748, %v1784
  %v1786 = vrot.slane %v1785, 4
  %v1787 = vadd.f32 %v1785, %v1786
  %v1788 = vrot.slane %v1787, 2
  %v1789 = vadd.f32 %v1787, %v1788
  %v1790 = vrot.slane %v1789, 1
  %v1791 = vadd.f32 %v1789, %v1790
  %v1792 = vmul.f32 %v1746, %v1784
  %v1793 = vlaneseq
  %v1794 = vshrl.u32 %v1793, 7
  %v1795 = vsub.s32 3, %v1794
  %v1796 = vrot.slane %v1749, %v1795
  %v1797 = vmul.f32 %v1747, %v1796
  %v1798 = vadd.f32 %v1792, %v1797
  %v1799 = vmul.f32 %v1748, %v1798
  %v1800 = vrot.slane %v1799, 4
  %v1801 = vadd.f32 %v1799, %v1800
  %v1802 = vrot.slane %v1801, 2
  %v1803 = vadd.f32 %v1801, %v1802
  %v1804 = vrot.slane %v1803, 1
  %v1805 = vadd.f32 %v1803, %v1804
  %v1806 = vmul.f32 %v1746, %v1798
  %v1807 = vlaneseq
  %v1808 = vshrl.u32 %v1807, 7
  %v1809 = vsub.s32 4, %v1808
  %v1810 = vrot.slane %v1749, %v1809
  %v1811 = vmul.f32 %v1747, %v1810
  %v1812 = vadd.f32 %v1806, %v1811
  %v1813 = vmul.f32 %v1748, %v1812
  %v1814 = vrot.slane %v1813, 4
  %v1815 = vadd.f32 %v1813, %v1814
  %v1816 = vrot.slane %v1815, 2
  %v1817 = vadd.f32 %v1815, %v1816
  %v1818 = vrot.slane %v1817, 1
  %v1819 = vadd.f32 %v1817, %v1818
  %v1820 = vmul.f32 %v1746, %v1812
  %v1821 = vlaneseq
  %v1822 = vshrl.u32 %v1821, 7
  %v1823 = vsub.s32 5, %v1822
  %v1824 = vrot.slane %v1749, %v1823
  %v1825 = vmul.f32 %v1747, %v1824
  %v1826 = vadd.f32 %v1820, %v1825
  %v1827 = vmul.f32 %v1748, %v1826
  %v1828 = vrot.slane %v1827, 4
  %v1829 = vadd.f32 %v1827, %v1828
  %v1830 = vrot.slane %v1829, 2
  %v1831 = vadd.f32 %v1829, %v1830
  %v1832 = vrot.slane %v1831, 1
  %v1833 = vadd.f32 %v1831, %v1832
  %v1834 = vmul.f32 %v1746, %v1826
  %v1835 = vlaneseq
  %v1836 = vshrl.u32 %v1835, 7
  %v1837 = vsub.s32 6, %v1836
  %v1838 = vrot.slane %v1749, %v1837
  %v1839 = vmul.f32 %v1747, %v1838
  %v1840 = vadd.f32 %v1834, %v1839
  %v1841 = vmul.f32 %v1748, %v1840
  %v1842 = vrot.slane %v1841, 4
  %v1843 = vadd.f32 %v1841, %v1842
  %v1844 = vrot.slane %v1843, 2
  %v1845 = vadd.f32 %v1843, %v1844
  %v1846 = vrot.slane %v1845, 1
  %v1847 = vadd.f32 %v1845, %v1846
  %v1848 = vmul.f32 %v1746, %v1840
  %v1849 = vlaneseq
  %v1850 = vshrl.u32 %v1849, 7
  %v1851 = vsub.s32 7, %v1850
  %v1852 = vrot.slane %v1749, %v1851
  %v1853 = vmul.f32 %v1747, %v1852
  %v1854 = vadd.f32 %v1848, %v1853
  %v1855 = vmul.f32 %v1748, %v1854
  %v1856 = vrot.slane %v1855, 4
  %v1857 = vadd.f32 %v1855, %v1856
  %v1858 = vrot.slane %v1857, 2
  %v1859 = vadd.f32 %v1857, %v1858
  %v1860 = vrot.slane %v1859, 1
  %v1861 = vadd.f32 %v1859, %v1860
  %vm1862 = vcmask 1040384
  %v1863 = vsel %vm1862, %v1763, %v1777
  %vm1864 = vcmask 1041408
  %v1865 = vsel %vm1864, %v1863, %v1791
  %vm1866 = vcmask 1042432
  %v1867 = vsel %vm1866, %v1865, %v1805
  %vm1868 = vcmask 1043456
  %v1869 = vsel %vm1868, %v1867, %v1819
  %vm1870 = vcmask 1044480
  %v1871 = vsel %vm1870, %v1869, %v1833
  %vm1872 = vcmask 1045504
  %v1873 = vsel %vm1872, %v1871, %v1847
  %vm1874 = vcmask 1046528
  %v1875 = vsel %vm1874, %v1873, %v1861
  %1876 = vst [vmem:[#allocation3] sm:$0xff] %v1875
  %v1877 = vld [vmem:[#allocation2 + $0x8] sm:$0xff]
  %v1878 = vmul.f32 %v1746, %v1854
  %v1879 = vlaneseq
  %v1880 = vshrl.u32 %v1879, 7
  %v1881 = vsub.s32 0, %v1880
  %v1882 = vrot.slane %v1877, %v1881
  %v1883 = vmul.f32 %v1747, %v1882
  %v1884 = vadd.f32 %v1878, %v1883
  %v1885 = vmul.f32 %v1748, %v1884
  %v1886 = vrot.slane %v1885, 4
  %v1887 = vadd.f32 %v1885, %v1886
  %v1888 = vrot.slane %v1887, 2
  %v1889 = vadd.f32 %v1887, %v1888
  %v1890 = vrot.slane %v1889, 1
  %v1891 = vadd.f32 %v1889, %v1890
  %v1892 = vmul.f32 %v1746, %v1884
  %v1893 = vlaneseq
  %v1894 = vshrl.u32 %v1893, 7
  %v1895 = vsub.s32 1, %v1894
  %v1896 = vrot.slane %v1877, %v1895
  %v1897 = vmul.f32 %v1747, %v1896
  %v1898 = vadd.f32 %v1892, %v1897
  %v1899 = vmul.f32 %v1748, %v1898
  %v1900 = vrot.slane %v1899, 4
  %v1901 = vadd.f32 %v1899, %v1900
  %v1902 = vrot.slane %v1901, 2
  %v1903 = vadd.f32 %v1901, %v1902
  %v1904 = vrot.slane %v1903, 1
  %v1905 = vadd.f32 %v1903, %v1904
  %v1906 = vmul.f32 %v1746, %v1898
  %v1907 = vlaneseq
  %v1908 = vshrl.u32 %v1907, 7
  %v1909 = vsub.s32 2, %v1908
  %v1910 = vrot.slane %v1877, %v1909
  %v1911 = vmul.f32 %v1747, %v1910
  %v1912 = vadd.f32 %v1906, %v1911
  %v1913 = vmul.f32 %v1748, %v1912
  %v1914 = vrot.slane %v1913, 4
  %v1915 = vadd.f32 %v1913, %v1914
  %v1916 = vrot.slane %v1915, 2
  %v1917 = vadd.f32 %v1915, %v1916
  %v1918 = vrot.slane %v1917, 1
  %v1919 = vadd.f32 %v1917, %v1918
  %v1920 = vmul.f32 %v1746, %v1912
  %v1921 = vlaneseq
  %v1922 = vshrl.u32 %v1921, 7
  %v1923 = vsub.s32 3, %v1922
  %v1924 = vrot.slane %v1877, %v1923
  %v1925 = vmul.f32 %v1747, %v1924
  %v1926 = vadd.f32 %v1920, %v1925
  %v1927 = vmul.f32 %v1748, %v1926
  %v1928 = vrot.slane %v1927, 4
  %v1929 = vadd.f32 %v1927, %v1928
  %v1930 = vrot.slane %v1929, 2
  %v1931 = vadd.f32 %v1929, %v1930
  %v1932 = vrot.slane %v1931, 1
  %v1933 = vadd.f32 %v1931, %v1932
  %v1934 = vmul.f32 %v1746, %v1926
  %v1935 = vlaneseq
  %v1936 = vshrl.u32 %v1935, 7
  %v1937 = vsub.s32 4, %v1936
  %v1938 = vrot.slane %v1877, %v1937
  %v1939 = vmul.f32 %v1747, %v1938
  %v1940 = vadd.f32 %v1934, %v1939
  %v1941 = vmul.f32 %v1748, %v1940
  %v1942 = vrot.slane %v1941, 4
  %v1943 = vadd.f32 %v1941, %v1942
  %v1944 = vrot.slane %v1943, 2
  %v1945 = vadd.f32 %v1943, %v1944
  %v1946 = vrot.slane %v1945, 1
  %v1947 = vadd.f32 %v1945, %v1946
  %v1948 = vmul.f32 %v1746, %v1940
  %v1949 = vlaneseq
  %v1950 = vshrl.u32 %v1949, 7
  %v1951 = vsub.s32 5, %v1950
  %v1952 = vrot.slane %v1877, %v1951
  %v1953 = vmul.f32 %v1747, %v1952
  %v1954 = vadd.f32 %v1948, %v1953
  %v1955 = vmul.f32 %v1748, %v1954
  %v1956 = vrot.slane %v1955, 4
  %v1957 = vadd.f32 %v1955, %v1956
  %v1958 = vrot.slane %v1957, 2
  %v1959 = vadd.f32 %v1957, %v1958
  %v1960 = vrot.slane %v1959, 1
  %v1961 = vadd.f32 %v1959, %v1960
  %v1962 = vmul.f32 %v1746, %v1954
  %v1963 = vlaneseq
  %v1964 = vshrl.u32 %v1963, 7
  %v1965 = vsub.s32 6, %v1964
  %v1966 = vrot.slane %v1877, %v1965
  %v1967 = vmul.f32 %v1747, %v1966
  %v1968 = vadd.f32 %v1962, %v1967
  %v1969 = vmul.f32 %v1748, %v1968
  %v1970 = vrot.slane %v1969, 4
  %v1971 = vadd.f32 %v1969, %v1970
  %v1972 = vrot.slane %v1971, 2
  %v1973 = vadd.f32 %v1971, %v1972
  %v1974 = vrot.slane %v1973, 1
  %v1975 = vadd.f32 %v1973, %v1974
  %v1976 = vmul.f32 %v1746, %v1968
  %v1977 = vlaneseq
  %v1978 = vshrl.u32 %v1977, 7
  %v1979 = vsub.s32 7, %v1978
  %v1980 = vrot.slane %v1877, %v1979
  %v1981 = vmul.f32 %v1747, %v1980
  %v1982 = vadd.f32 %v1976, %v1981
  %v1983 = vmul.f32 %v1748, %v1982
  %v1984 = vrot.slane %v1983, 4
  %v1985 = vadd.f32 %v1983, %v1984
  %v1986 = vrot.slane %v1985, 2
  %v1987 = vadd.f32 %v1985, %v1986
  %v1988 = vrot.slane %v1987, 1
  %v1989 = vadd.f32 %v1987, %v1988
  %v1990 = vsel %vm1862, %v1891, %v1905
  %v1991 = vsel %vm1864, %v1990, %v1919
  %v1992 = vsel %vm1866, %v1991, %v1933
  %v1993 = vsel %vm1868, %v1992, %v1947
  %v1994 = vsel %vm1870, %v1993, %v1961
  %v1995 = vsel %vm1872, %v1994, %v1975
  %v1996 = vsel %vm1874, %v1995, %v1989
  %1997 = vst [vmem:[#allocation3 + $0x8] sm:$0xff] %v1996
  %v1998 = vld [vmem:[#allocation2 + $0x10] sm:$0xff]
  %v1999 = vmul.f32 %v1746, %v1982
  %v2000 = vlaneseq
  %v2001 = vshrl.u32 %v2000, 7
  %v2002 = vsub.s32 0, %v2001
  %v2003 = vrot.slane %v1998, %v2002
  %v2004 = vmul.f32 %v1747, %v2003
  %v2005 = vadd.f32 %v1999, %v2004
  %v2006 = vmul.f32 %v1748, %v2005
  %v2007 = vrot.slane %v2006, 4
  %v2008 = vadd.f32 %v2006, %v2007
  %v2009 = vrot.slane %v2008, 2
  %v2010 = vadd.f32 %v2008, %v2009
  %v2011 = vrot.slane %v2010, 1
  %v2012 = vadd.f32 %v2010, %v2011
  %v2013 = vmul.f32 %v1746, %v2005
  %v2014 = vlaneseq
  %v2015 = vshrl.u32 %v2014, 7
  %v2016 = vsub.s32 1, %v2015
  %v2017 = vrot.slane %v1998, %v2016
  %v2018 = vmul.f32 %v1747, %v2017
  %v2019 = vadd.f32 %v2013, %v2018
  %v2020 = vmul.f32 %v1748, %v2019
  %v2021 = vrot.slane %v2020, 4
  %v2022 = vadd.f32 %v2020, %v2021
  %v2023 = vrot.slane %v2022, 2
  %v2024 = vadd.f32 %v2022, %v2023
  %v2025 = vrot.slane %v2024, 1
  %v2026 = vadd.f32 %v2024, %v2025
  %v2027 = vmul.f32 %v1746, %v2019
  %v2028 = vlaneseq
  %v2029 = vshrl.u32 %v2028, 7
  %v2030 = vsub.s32 2, %v2029
  %v2031 = vrot.slane %v1998, %v2030
  %v2032 = vmul.f32 %v1747, %v2031
  %v2033 = vadd.f32 %v2027, %v2032
  %v2034 = vmul.f32 %v1748, %v2033
  %v2035 = vrot.slane %v2034, 4
  %v2036 = vadd.f32 %v2034, %v2035
  %v2037 = vrot.slane %v2036, 2
  %v2038 = vadd.f32 %v2036, %v2037
  %v2039 = vrot.slane %v2038, 1
  %v2040 = vadd.f32 %v2038, %v2039
  %v2041 = vmul.f32 %v1746, %v2033
  %v2042 = vlaneseq
  %v2043 = vshrl.u32 %v2042, 7
  %v2044 = vsub.s32 3, %v2043
  %v2045 = vrot.slane %v1998, %v2044
  %v2046 = vmul.f32 %v1747, %v2045
  %v2047 = vadd.f32 %v2041, %v2046
  %v2048 = vmul.f32 %v1748, %v2047
  %v2049 = vrot.slane %v2048, 4
  %v2050 = vadd.f32 %v2048, %v2049
  %v2051 = vrot.slane %v2050, 2
  %v2052 = vadd.f32 %v2050, %v2051
  %v2053 = vrot.slane %v2052, 1
  %v2054 = vadd.f32 %v2052, %v2053
  %v2055 = vmul.f32 %v1746, %v2047
  %v2056 = vlaneseq
  %v2057 = vshrl.u32 %v2056, 7
  %v2058 = vsub.s32 4, %v2057
  %v2059 = vrot.slane %v1998, %v2058
  %v2060 = vmul.f32 %v1747, %v2059
  %v2061 = vadd.f32 %v2055, %v2060
  %v2062 = vmul.f32 %v1748, %v2061
  %v2063 = vrot.slane %v2062, 4
  %v2064 = vadd.f32 %v2062, %v2063
  %v2065 = vrot.slane %v2064, 2
  %v2066 = vadd.f32 %v2064, %v2065
  %v2067 = vrot.slane %v2066, 1
  %v2068 = vadd.f32 %v2066, %v2067
  %v2069 = vmul.f32 %v1746, %v2061
  %v2070 = vlaneseq
  %v2071 = vshrl.u32 %v2070, 7
  %v2072 = vsub.s32 5, %v2071
  %v2073 = vrot.slane %v1998, %v2072
  %v2074 = vmul.f32 %v1747, %v2073
  %v2075 = vadd.f32 %v2069, %v2074
  %v2076 = vmul.f32 %v1748, %v2075
  %v2077 = vrot.slane %v2076, 4
  %v2078 = vadd.f32 %v2076, %v2077
  %v2079 = vrot.slane %v2078, 2
  %v2080 = vadd.f32 %v2078, %v2079
  %v2081 = vrot.slane %v2080, 1
  %v2082 = vadd.f32 %v2080, %v2081
  %v2083 = vmul.f32 %v1746, %v2075
  %v2084 = vlaneseq
  %v2085 = vshrl.u32 %v2084, 7
  %v2086 = vsub.s32 6, %v2085
  %v2087 = vrot.slane %v1998, %v2086
  %v2088 = vmul.f32 %v1747, %v2087
  %v2089 = vadd.f32 %v2083, %v2088
  %v2090 = vmul.f32 %v1748, %v2089
  %v2091 = vrot.slane %v2090, 4
  %v2092 = vadd.f32 %v2090, %v2091
  %v2093 = vrot.slane %v2092, 2
  %v2094 = vadd.f32 %v2092, %v2093
  %v2095 = vrot.slane %v2094, 1
  %v2096 = vadd.f32 %v2094, %v2095
  %v2097 = vmul.f32 %v1746, %v2089
  %v2098 = vlaneseq
  %v2099 = vshrl.u32 %v2098, 7
  %v2100 = vsub.s32 7, %v2099
  %v2101 = vrot.slane %v1998, %v2100
  %v2102 = vmul.f32 %v1747, %v2101
  %v2103 = vadd.f32 %v2097, %v2102
  %v2104 = vmul.f32 %v1748, %v2103
  %v2105 = vrot.slane %v2104, 4
  %v2106 = vadd.f32 %v2104, %v2105
  %v2107 = vrot.slane %v2106, 2
  %v2108 = vadd.f32 %v2106, %v2107
  %v2109 = vrot.slane %v2108, 1
  %v2110 = vadd.f32 %v2108, %v2109
  %v2111 = vsel %vm1862, %v2012, %v2026
  %v2112 = vsel %vm1864, %v2111, %v2040
  %v2113 = vsel %vm1866, %v2112, %v2054
  %v2114 = vsel %vm1868, %v2113, %v2068
  %v2115 = vsel %vm1870, %v2114, %v2082
  %v2116 = vsel %vm1872, %v2115, %v2096
  %v2117 = vsel %vm1874, %v2116, %v2110
  %2118 = vst [vmem:[#allocation3 + $0x10] sm:$0xff] %v2117
  %v2119 = vld [vmem:[#allocation2 + $0x18] sm:$0xff]
  %v2120 = vmul.f32 %v1746, %v2103
  %v2121 = vlaneseq
  %v2122 = vshrl.u32 %v2121, 7
  %v2123 = vsub.s32 0, %v2122
  %v2124 = vrot.slane %v2119, %v2123
  %v2125 = vmul.f32 %v1747, %v2124
  %v2126 = vadd.f32 %v2120, %v2125
  %v2127 = vmul.f32 %v1748, %v2126
  %v2128 = vrot.slane %v2127, 4
  %v2129 = vadd.f32 %v2127, %v2128
  %v2130 = vrot.slane %v2129, 2
  %v2131 = vadd.f32 %v2129, %v2130
  %v2132 = vrot.slane %v2131, 1
  %v2133 = vadd.f32 %v2131, %v2132
  %v2134 = vmul.f32 %v1746, %v2126
  %v2135 = vlaneseq
  %v2136 = vshrl.u32 %v2135, 7
  %v2137 = vsub.s32 1, %v2136
  %v2138 = vrot.slane %v2119, %v2137
  %v2139 = vmul.f32 %v1747, %v2138
  %v2140 = vadd.f32 %v2134, %v2139
  %v2141 = vmul.f32 %v1748, %v2140
  %v2142 = vrot.slane %v2141, 4
  %v2143 = vadd.f32 %v2141, %v2142
  %v2144 = vrot.slane %v2143, 2
  %v2145 = vadd.f32 %v2143, %v2144
  %v2146 = vrot.slane %v2145, 1
  %v2147 = vadd.f32 %v2145, %v2146
  %v2148 = vmul.f32 %v1746, %v2140
  %v2149 = vlaneseq
  %v2150 = vshrl.u32 %v2149, 7
  %v2151 = vsub.s32 2, %v2150
  %v2152 = vrot.slane %v2119, %v2151
  %v2153 = vmul.f32 %v1747, %v2152
  %v2154 = vadd.f32 %v2148, %v2153
  %v2155 = vmul.f32 %v1748, %v2154
  %v2156 = vrot.slane %v2155, 4
  %v2157 = vadd.f32 %v2155, %v2156
  %v2158 = vrot.slane %v2157, 2
  %v2159 = vadd.f32 %v2157, %v2158
  %v2160 = vrot.slane %v2159, 1
  %v2161 = vadd.f32 %v2159, %v2160
  %v2162 = vmul.f32 %v1746, %v2154
  %v2163 = vlaneseq
  %v2164 = vshrl.u32 %v2163, 7
  %v2165 = vsub.s32 3, %v2164
  %v2166 = vrot.slane %v2119, %v2165
  %v2167 = vmul.f32 %v1747, %v2166
  %v2168 = vadd.f32 %v2162, %v2167
  %v2169 = vmul.f32 %v1748, %v2168
  %v2170 = vrot.slane %v2169, 4
  %v2171 = vadd.f32 %v2169, %v2170
  %v2172 = vrot.slane %v2171, 2
  %v2173 = vadd.f32 %v2171, %v2172
  %v2174 = vrot.slane %v2173, 1
  %v2175 = vadd.f32 %v2173, %v2174
  %v2176 = vmul.f32 %v1746, %v2168
  %v2177 = vlaneseq
  %v2178 = vshrl.u32 %v2177, 7
  %v2179 = vsub.s32 4, %v2178
  %v2180 = vrot.slane %v2119, %v2179
  %v2181 = vmul.f32 %v1747, %v2180
  %v2182 = vadd.f32 %v2176, %v2181
  %v2183 = vmul.f32 %v1748, %v2182
  %v2184 = vrot.slane %v2183, 4
  %v2185 = vadd.f32 %v2183, %v2184
  %v2186 = vrot.slane %v2185, 2
  %v2187 = vadd.f32 %v2185, %v2186
  %v2188 = vrot.slane %v2187, 1
  %v2189 = vadd.f32 %v2187, %v2188
  %v2190 = vmul.f32 %v1746, %v2182
  %v2191 = vlaneseq
  %v2192 = vshrl.u32 %v2191, 7
  %v2193 = vsub.s32 5, %v2192
  %v2194 = vrot.slane %v2119, %v2193
  %v2195 = vmul.f32 %v1747, %v2194
  %v2196 = vadd.f32 %v2190, %v2195
  %v2197 = vmul.f32 %v1748, %v2196
  %v2198 = vrot.slane %v2197, 4
  %v2199 = vadd.f32 %v2197, %v2198
  %v2200 = vrot.slane %v2199, 2
  %v2201 = vadd.f32 %v2199, %v2200
  %v2202 = vrot.slane %v2201, 1
  %v2203 = vadd.f32 %v2201, %v2202
  %v2204 = vmul.f32 %v1746, %v2196
  %v2205 = vlaneseq
  %v2206 = vshrl.u32 %v2205, 7
  %v2207 = vsub.s32 6, %v2206
  %v2208 = vrot.slane %v2119, %v2207
  %v2209 = vmul.f32 %v1747, %v2208
  %v2210 = vadd.f32 %v2204, %v2209
  %v2211 = vmul.f32 %v1748, %v2210
  %v2212 = vrot.slane %v2211, 4
  %v2213 = vadd.f32 %v2211, %v2212
  %v2214 = vrot.slane %v2213, 2
  %v2215 = vadd.f32 %v2213, %v2214
  %v2216 = vrot.slane %v2215, 1
  %v2217 = vadd.f32 %v2215, %v2216
  %v2218 = vmul.f32 %v1746, %v2210
  %v2219 = vlaneseq
  %v2220 = vshrl.u32 %v2219, 7
  %v2221 = vsub.s32 7, %v2220
  %v2222 = vrot.slane %v2119, %v2221
  %v2223 = vmul.f32 %v1747, %v2222
  %v2224 = vadd.f32 %v2218, %v2223
  %v2225 = vmul.f32 %v1748, %v2224
  %v2226 = vrot.slane %v2225, 4
  %v2227 = vadd.f32 %v2225, %v2226
  %v2228 = vrot.slane %v2227, 2
  %v2229 = vadd.f32 %v2227, %v2228
  %v2230 = vrot.slane %v2229, 1
  %v2231 = vadd.f32 %v2229, %v2230
  %v2232 = vsel %vm1862, %v2133, %v2147
  %v2233 = vsel %vm1864, %v2232, %v2161
  %v2234 = vsel %vm1866, %v2233, %v2175
  %v2235 = vsel %vm1868, %v2234, %v2189
  %v2236 = vsel %vm1870, %v2235, %v2203
  %v2237 = vsel %vm1872, %v2236, %v2217
  %v2238 = vsel %vm1874, %v2237, %v2231
  %2239 = vst [vmem:[#allocation3 + $0x18] sm:$0xff] %v2238
  %v2240 = vld [vmem:[#allocation2 + $0x20] sm:$0xff]
  %v2241 = vmul.f32 %v1746, %v2224
  %v2242 = vlaneseq
  %v2243 = vshrl.u32 %v2242, 7
  %v2244 = vsub.s32 0, %v2243
  %v2245 = vrot.slane %v2240, %v2244
  %v2246 = vmul.f32 %v1747, %v2245
  %v2247 = vadd.f32 %v2241, %v2246
  %v2248 = vmul.f32 %v1748, %v2247
  %v2249 = vrot.slane %v2248, 4
  %v2250 = vadd.f32 %v2248, %v2249
  %v2251 = vrot.slane %v2250, 2
  %v2252 = vadd.f32 %v2250, %v2251
  %v2253 = vrot.slane %v2252, 1
  %v2254 = vadd.f32 %v2252, %v2253
  %v2255 = vmul.f32 %v1746, %v2247
  %v2256 = vlaneseq
  %v2257 = vshrl.u32 %v2256, 7
  %v2258 = vsub.s32 1, %v2257
  %v2259 = vrot.slane %v2240, %v2258
  %v2260 = vmul.f32 %v1747, %v2259
  %v2261 = vadd.f32 %v2255, %v2260
  %v2262 = vmul.f32 %v1748, %v2261
  %v2263 = vrot.slane %v2262, 4
  %v2264 = vadd.f32 %v2262, %v2263
  %v2265 = vrot.slane %v2264, 2
  %v2266 = vadd.f32 %v2264, %v2265
  %v2267 = vrot.slane %v2266, 1
  %v2268 = vadd.f32 %v2266, %v2267
  %v2269 = vmul.f32 %v1746, %v2261
  %v2270 = vlaneseq
  %v2271 = vshrl.u32 %v2270, 7
  %v2272 = vsub.s32 2, %v2271
  %v2273 = vrot.slane %v2240, %v2272
  %v2274 = vmul.f32 %v1747, %v2273
  %v2275 = vadd.f32 %v2269, %v2274
  %v2276 = vmul.f32 %v1748, %v2275
  %v2277 = vrot.slane %v2276, 4
  %v2278 = vadd.f32 %v2276, %v2277
  %v2279 = vrot.slane %v2278, 2
  %v2280 = vadd.f32 %v2278, %v2279
  %v2281 = vrot.slane %v2280, 1
  %v2282 = vadd.f32 %v2280, %v2281
  %v2283 = vmul.f32 %v1746, %v2275
  %v2284 = vlaneseq
  %v2285 = vshrl.u32 %v2284, 7
  %v2286 = vsub.s32 3, %v2285
  %v2287 = vrot.slane %v2240, %v2286
  %v2288 = vmul.f32 %v1747, %v2287
  %v2289 = vadd.f32 %v2283, %v2288
  %v2290 = vmul.f32 %v1748, %v2289
  %v2291 = vrot.slane %v2290, 4
  %v2292 = vadd.f32 %v2290, %v2291
  %v2293 = vrot.slane %v2292, 2
  %v2294 = vadd.f32 %v2292, %v2293
  %v2295 = vrot.slane %v2294, 1
  %v2296 = vadd.f32 %v2294, %v2295
  %v2297 = vmul.f32 %v1746, %v2289
  %v2298 = vlaneseq
  %v2299 = vshrl.u32 %v2298, 7
  %v2300 = vsub.s32 4, %v2299
  %v2301 = vrot.slane %v2240, %v2300
  %v2302 = vmul.f32 %v1747, %v2301
  %v2303 = vadd.f32 %v2297, %v2302
  %v2304 = vmul.f32 %v1748, %v2303
  %v2305 = vrot.slane %v2304, 4
  %v2306 = vadd.f32 %v2304, %v2305
  %v2307 = vrot.slane %v2306, 2
  %v2308 = vadd.f32 %v2306, %v2307
  %v2309 = vrot.slane %v2308, 1
  %v2310 = vadd.f32 %v2308, %v2309
  %v2311 = vmul.f32 %v1746, %v2303
  %v2312 = vlaneseq
  %v2313 = vshrl.u32 %v2312, 7
  %v2314 = vsub.s32 5, %v2313
  %v2315 = vrot.slane %v2240, %v2314
  %v2316 = vmul.f32 %v1747, %v2315
  %v2317 = vadd.f32 %v2311, %v2316
  %v2318 = vmul.f32 %v1748, %v2317
  %v2319 = vrot.slane %v2318, 4
  %v2320 = vadd.f32 %v2318, %v2319
  %v2321 = vrot.slane %v2320, 2
  %v2322 = vadd.f32 %v2320, %v2321
  %v2323 = vrot.slane %v2322, 1
  %v2324 = vadd.f32 %v2322, %v2323
  %v2325 = vmul.f32 %v1746, %v2317
  %v2326 = vlaneseq
  %v2327 = vshrl.u32 %v2326, 7
  %v2328 = vsub.s32 6, %v2327
  %v2329 = vrot.slane %v2240, %v2328
  %v2330 = vmul.f32 %v1747, %v2329
  %v2331 = vadd.f32 %v2325, %v2330
  %v2332 = vmul.f32 %v1748, %v2331
  %v2333 = vrot.slane %v2332, 4
  %v2334 = vadd.f32 %v2332, %v2333
  %v2335 = vrot.slane %v2334, 2
  %v2336 = vadd.f32 %v2334, %v2335
  %v2337 = vrot.slane %v2336, 1
  %v2338 = vadd.f32 %v2336, %v2337
  %v2339 = vmul.f32 %v1746, %v2331
  %v2340 = vlaneseq
  %v2341 = vshrl.u32 %v2340, 7
  %v2342 = vsub.s32 7, %v2341
  %v2343 = vrot.slane %v2240, %v2342
  %v2344 = vmul.f32 %v1747, %v2343
  %v2345 = vadd.f32 %v2339, %v2344
  %v2346 = vmul.f32 %v1748, %v2345
  %v2347 = vrot.slane %v2346, 4
  %v2348 = vadd.f32 %v2346, %v2347
  %v2349 = vrot.slane %v2348, 2
  %v2350 = vadd.f32 %v2348, %v2349
  %v2351 = vrot.slane %v2350, 1
  %v2352 = vadd.f32 %v2350, %v2351
  %v2353 = vsel %vm1862, %v2254, %v2268
  %v2354 = vsel %vm1864, %v2353, %v2282
  %v2355 = vsel %vm1866, %v2354, %v2296
  %v2356 = vsel %vm1868, %v2355, %v2310
  %v2357 = vsel %vm1870, %v2356, %v2324
  %v2358 = vsel %vm1872, %v2357, %v2338
  %v2359 = vsel %vm1874, %v2358, %v2352
  %2360 = vst [vmem:[#allocation3 + $0x20] sm:$0xff] %v2359
  %v2361 = vld [vmem:[#allocation2 + $0x28] sm:$0xff]
  %v2362 = vmul.f32 %v1746, %v2345
  %v2363 = vlaneseq
  %v2364 = vshrl.u32 %v2363, 7
  %v2365 = vsub.s32 0, %v2364
  %v2366 = vrot.slane %v2361, %v2365
  %v2367 = vmul.f32 %v1747, %v2366
  %v2368 = vadd.f32 %v2362, %v2367
  %v2369 = vmul.f32 %v1748, %v2368
  %v2370 = vrot.slane %v2369, 4
  %v2371 = vadd.f32 %v2369, %v2370
  %v2372 = vrot.slane %v2371, 2
  %v2373 = vadd.f32 %v2371, %v2372
  %v2374 = vrot.slane %v2373, 1
  %v2375 = vadd.f32 %v2373, %v2374
  %v2376 = vmul.f32 %v1746, %v2368
  %v2377 = vlaneseq
  %v2378 = vshrl.u32 %v2377, 7
  %v2379 = vsub.s32 1, %v2378
  %v2380 = vrot.slane %v2361, %v2379
  %v2381 = vmul.f32 %v1747, %v2380
  %v2382 = vadd.f32 %v2376, %v2381
  %v2383 = vmul.f32 %v1748, %v2382
  %v2384 = vrot.slane %v2383, 4
  %v2385 = vadd.f32 %v2383, %v2384
  %v2386 = vrot.slane %v2385, 2
  %v2387 = vadd.f32 %v2385, %v2386
  %v2388 = vrot.slane %v2387, 1
  %v2389 = vadd.f32 %v2387, %v2388
  %v2390 = vmul.f32 %v1746, %v2382
  %v2391 = vlaneseq
  %v2392 = vshrl.u32 %v2391, 7
  %v2393 = vsub.s32 2, %v2392
  %v2394 = vrot.slane %v2361, %v2393
  %v2395 = vmul.f32 %v1747, %v2394
  %v2396 = vadd.f32 %v2390, %v2395
  %v2397 = vmul.f32 %v1748, %v2396
  %v2398 = vrot.slane %v2397, 4
  %v2399 = vadd.f32 %v2397, %v2398
  %v2400 = vrot.slane %v2399, 2
  %v2401 = vadd.f32 %v2399, %v2400
  %v2402 = vrot.slane %v2401, 1
  %v2403 = vadd.f32 %v2401, %v2402
  %v2404 = vmul.f32 %v1746, %v2396
  %v2405 = vlaneseq
  %v2406 = vshrl.u32 %v2405, 7
  %v2407 = vsub.s32 3, %v2406
  %v2408 = vrot.slane %v2361, %v2407
  %v2409 = vmul.f32 %v1747, %v2408
  %v2410 = vadd.f32 %v2404, %v2409
  %v2411 = vmul.f32 %v1748, %v2410
  %v2412 = vrot.slane %v2411, 4
  %v2413 = vadd.f32 %v2411, %v2412
  %v2414 = vrot.slane %v2413, 2
  %v2415 = vadd.f32 %v2413, %v2414
  %v2416 = vrot.slane %v2415, 1
  %v2417 = vadd.f32 %v2415, %v2416
  %v2418 = vmul.f32 %v1746, %v2410
  %v2419 = vlaneseq
  %v2420 = vshrl.u32 %v2419, 7
  %v2421 = vsub.s32 4, %v2420
  %v2422 = vrot.slane %v2361, %v2421
  %v2423 = vmul.f32 %v1747, %v2422
  %v2424 = vadd.f32 %v2418, %v2423
  %v2425 = vmul.f32 %v1748, %v2424
  %v2426 = vrot.slane %v2425, 4
  %v2427 = vadd.f32 %v2425, %v2426
  %v2428 = vrot.slane %v2427, 2
  %v2429 = vadd.f32 %v2427, %v2428
  %v2430 = vrot.slane %v2429, 1
  %v2431 = vadd.f32 %v2429, %v2430
  %v2432 = vmul.f32 %v1746, %v2424
  %v2433 = vlaneseq
  %v2434 = vshrl.u32 %v2433, 7
  %v2435 = vsub.s32 5, %v2434
  %v2436 = vrot.slane %v2361, %v2435
  %v2437 = vmul.f32 %v1747, %v2436
  %v2438 = vadd.f32 %v2432, %v2437
  %v2439 = vmul.f32 %v1748, %v2438
  %v2440 = vrot.slane %v2439, 4
  %v2441 = vadd.f32 %v2439, %v2440
  %v2442 = vrot.slane %v2441, 2
  %v2443 = vadd.f32 %v2441, %v2442
  %v2444 = vrot.slane %v2443, 1
  %v2445 = vadd.f32 %v2443, %v2444
  %v2446 = vmul.f32 %v1746, %v2438
  %v2447 = vlaneseq
  %v2448 = vshrl.u32 %v2447, 7
  %v2449 = vsub.s32 6, %v2448
  %v2450 = vrot.slane %v2361, %v2449
  %v2451 = vmul.f32 %v1747, %v2450
  %v2452 = vadd.f32 %v2446, %v2451
  %v2453 = vmul.f32 %v1748, %v2452
  %v2454 = vrot.slane %v2453, 4
  %v2455 = vadd.f32 %v2453, %v2454
  %v2456 = vrot.slane %v2455, 2
  %v2457 = vadd.f32 %v2455, %v2456
  %v2458 = vrot.slane %v2457, 1
  %v2459 = vadd.f32 %v2457, %v2458
  %v2460 = vmul.f32 %v1746, %v2452
  %v2461 = vlaneseq
  %v2462 = vshrl.u32 %v2461, 7
  %v2463 = vsub.s32 7, %v2462
  %v2464 = vrot.slane %v2361, %v2463
  %v2465 = vmul.f32 %v1747, %v2464
  %v2466 = vadd.f32 %v2460, %v2465
  %v2467 = vmul.f32 %v1748, %v2466
  %v2468 = vrot.slane %v2467, 4
  %v2469 = vadd.f32 %v2467, %v2468
  %v2470 = vrot.slane %v2469, 2
  %v2471 = vadd.f32 %v2469, %v2470
  %v2472 = vrot.slane %v2471, 1
  %v2473 = vadd.f32 %v2471, %v2472
  %v2474 = vsel %vm1862, %v2375, %v2389
  %v2475 = vsel %vm1864, %v2474, %v2403
  %v2476 = vsel %vm1866, %v2475, %v2417
  %v2477 = vsel %vm1868, %v2476, %v2431
  %v2478 = vsel %vm1870, %v2477, %v2445
  %v2479 = vsel %vm1872, %v2478, %v2459
  %v2480 = vsel %vm1874, %v2479, %v2473
  %2481 = vst [vmem:[#allocation3 + $0x28] sm:$0xff] %v2480
  %v2482 = vld [vmem:[#allocation2 + $0x30] sm:$0xff]
  %v2483 = vmul.f32 %v1746, %v2466
  %v2484 = vlaneseq
  %v2485 = vshrl.u32 %v2484, 7
  %v2486 = vsub.s32 0, %v2485
  %v2487 = vrot.slane %v2482, %v2486
  %v2488 = vmul.f32 %v1747, %v2487
  %v2489 = vadd.f32 %v2483, %v2488
  %v2490 = vmul.f32 %v1748, %v2489
  %v2491 = vrot.slane %v2490, 4
  %v2492 = vadd.f32 %v2490, %v2491
  %v2493 = vrot.slane %v2492, 2
  %v2494 = vadd.f32 %v2492, %v2493
  %v2495 = vrot.slane %v2494, 1
  %v2496 = vadd.f32 %v2494, %v2495
  %v2497 = vmul.f32 %v1746, %v2489
  %v2498 = vlaneseq
  %v2499 = vshrl.u32 %v2498, 7
  %v2500 = vsub.s32 1, %v2499
  %v2501 = vrot.slane %v2482, %v2500
  %v2502 = vmul.f32 %v1747, %v2501
  %v2503 = vadd.f32 %v2497, %v2502
  %v2504 = vmul.f32 %v1748, %v2503
  %v2505 = vrot.slane %v2504, 4
  %v2506 = vadd.f32 %v2504, %v2505
  %v2507 = vrot.slane %v2506, 2
  %v2508 = vadd.f32 %v2506, %v2507
  %v2509 = vrot.slane %v2508, 1
  %v2510 = vadd.f32 %v2508, %v2509
  %v2511 = vmul.f32 %v1746, %v2503
  %v2512 = vlaneseq
  %v2513 = vshrl.u32 %v2512, 7
  %v2514 = vsub.s32 2, %v2513
  %v2515 = vrot.slane %v2482, %v2514
  %v2516 = vmul.f32 %v1747, %v2515
  %v2517 = vadd.f32 %v2511, %v2516
  %v2518 = vmul.f32 %v1748, %v2517
  %v2519 = vrot.slane %v2518, 4
  %v2520 = vadd.f32 %v2518, %v2519
  %v2521 = vrot.slane %v2520, 2
  %v2522 = vadd.f32 %v2520, %v2521
  %v2523 = vrot.slane %v2522, 1
  %v2524 = vadd.f32 %v2522, %v2523
  %v2525 = vmul.f32 %v1746, %v2517
  %v2526 = vlaneseq
  %v2527 = vshrl.u32 %v2526, 7
  %v2528 = vsub.s32 3, %v2527
  %v2529 = vrot.slane %v2482, %v2528
  %v2530 = vmul.f32 %v1747, %v2529
  %v2531 = vadd.f32 %v2525, %v2530
  %v2532 = vmul.f32 %v1748, %v2531
  %v2533 = vrot.slane %v2532, 4
  %v2534 = vadd.f32 %v2532, %v2533
  %v2535 = vrot.slane %v2534, 2
  %v2536 = vadd.f32 %v2534, %v2535
  %v2537 = vrot.slane %v2536, 1
  %v2538 = vadd.f32 %v2536, %v2537
  %v2539 = vmul.f32 %v1746, %v2531
  %v2540 = vlaneseq
  %v2541 = vshrl.u32 %v2540, 7
  %v2542 = vsub.s32 4, %v2541
  %v2543 = vrot.slane %v2482, %v2542
  %v2544 = vmul.f32 %v1747, %v2543
  %v2545 = vadd.f32 %v2539, %v2544
  %v2546 = vmul.f32 %v1748, %v2545
  %v2547 = vrot.slane %v2546, 4
  %v2548 = vadd.f32 %v2546, %v2547
  %v2549 = vrot.slane %v2548, 2
  %v2550 = vadd.f32 %v2548, %v2549
  %v2551 = vrot.slane %v2550, 1
  %v2552 = vadd.f32 %v2550, %v2551
  %v2553 = vmul.f32 %v1746, %v2545
  %v2554 = vlaneseq
  %v2555 = vshrl.u32 %v2554, 7
  %v2556 = vsub.s32 5, %v2555
  %v2557 = vrot.slane %v2482, %v2556
  %v2558 = vmul.f32 %v1747, %v2557
  %v2559 = vadd.f32 %v2553, %v2558
  %v2560 = vmul.f32 %v1748, %v2559
  %v2561 = vrot.slane %v2560, 4
  %v2562 = vadd.f32 %v2560, %v2561
  %v2563 = vrot.slane %v2562, 2
  %v2564 = vadd.f32 %v2562, %v2563
  %v2565 = vrot.slane %v2564, 1
  %v2566 = vadd.f32 %v2564, %v2565
  %v2567 = vmul.f32 %v1746, %v2559
  %v2568 = vlaneseq
  %v2569 = vshrl.u32 %v2568, 7
  %v2570 = vsub.s32 6, %v2569
  %v2571 = vrot.slane %v2482, %v2570
  %v2572 = vmul.f32 %v1747, %v2571
  %v2573 = vadd.f32 %v2567, %v2572
  %v2574 = vmul.f32 %v1748, %v2573
  %v2575 = vrot.slane %v2574, 4
  %v2576 = vadd.f32 %v2574, %v2575
  %v2577 = vrot.slane %v2576, 2
  %v2578 = vadd.f32 %v2576, %v2577
  %v2579 = vrot.slane %v2578, 1
  %v2580 = vadd.f32 %v2578, %v2579
  %v2581 = vmul.f32 %v1746, %v2573
  %v2582 = vlaneseq
  %v2583 = vshrl.u32 %v2582, 7
  %v2584 = vsub.s32 7, %v2583
  %v2585 = vrot.slane %v2482, %v2584
  %v2586 = vmul.f32 %v1747, %v2585
  %v2587 = vadd.f32 %v2581, %v2586
  %v2588 = vmul.f32 %v1748, %v2587
  %v2589 = vrot.slane %v2588, 4
  %v2590 = vadd.f32 %v2588, %v2589
  %v2591 = vrot.slane %v2590, 2
  %v2592 = vadd.f32 %v2590, %v2591
  %v2593 = vrot.slane %v2592, 1
  %v2594 = vadd.f32 %v2592, %v2593
  %v2595 = vsel %vm1862, %v2496, %v2510
  %v2596 = vsel %vm1864, %v2595, %v2524
  %v2597 = vsel %vm1866, %v2596, %v2538
  %v2598 = vsel %vm1868, %v2597, %v2552
  %v2599 = vsel %vm1870, %v2598, %v2566
  %v2600 = vsel %vm1872, %v2599, %v2580
  %v2601 = vsel %vm1874, %v2600, %v2594
  %2602 = vst [vmem:[#allocation3 + $0x30] sm:$0xff] %v2601
  %v2603 = vld [vmem:[#allocation2 + $0x38] sm:$0xff]
  %v2604 = vmul.f32 %v1746, %v2587
  %v2605 = vlaneseq
  %v2606 = vshrl.u32 %v2605, 7
  %v2607 = vsub.s32 0, %v2606
  %v2608 = vrot.slane %v2603, %v2607
  %v2609 = vmul.f32 %v1747, %v2608
  %v2610 = vadd.f32 %v2604, %v2609
  %v2611 = vmul.f32 %v1748, %v2610
  %v2612 = vrot.slane %v2611, 4
  %v2613 = vadd.f32 %v2611, %v2612
  %v2614 = vrot.slane %v2613, 2
  %v2615 = vadd.f32 %v2613, %v2614
  %v2616 = vrot.slane %v2615, 1
  %v2617 = vadd.f32 %v2615, %v2616
  %v2618 = vmul.f32 %v1746, %v2610
  %v2619 = vlaneseq
  %v2620 = vshrl.u32 %v2619, 7
  %v2621 = vsub.s32 1, %v2620
  %v2622 = vrot.slane %v2603, %v2621
  %v2623 = vmul.f32 %v1747, %v2622
  %v2624 = vadd.f32 %v2618, %v2623
  %v2625 = vmul.f32 %v1748, %v2624
  %v2626 = vrot.slane %v2625, 4
  %v2627 = vadd.f32 %v2625, %v2626
  %v2628 = vrot.slane %v2627, 2
  %v2629 = vadd.f32 %v2627, %v2628
  %v2630 = vrot.slane %v2629, 1
  %v2631 = vadd.f32 %v2629, %v2630
  %v2632 = vmul.f32 %v1746, %v2624
  %v2633 = vlaneseq
  %v2634 = vshrl.u32 %v2633, 7
  %v2635 = vsub.s32 2, %v2634
  %v2636 = vrot.slane %v2603, %v2635
  %v2637 = vmul.f32 %v1747, %v2636
  %v2638 = vadd.f32 %v2632, %v2637
  %v2639 = vmul.f32 %v1748, %v2638
  %v2640 = vrot.slane %v2639, 4
  %v2641 = vadd.f32 %v2639, %v2640
  %v2642 = vrot.slane %v2641, 2
  %v2643 = vadd.f32 %v2641, %v2642
  %v2644 = vrot.slane %v2643, 1
  %v2645 = vadd.f32 %v2643, %v2644
  %v2646 = vmul.f32 %v1746, %v2638
  %v2647 = vlaneseq
  %v2648 = vshrl.u32 %v2647, 7
  %v2649 = vsub.s32 3, %v2648
  %v2650 = vrot.slane %v2603, %v2649
  %v2651 = vmul.f32 %v1747, %v2650
  %v2652 = vadd.f32 %v2646, %v2651
  %v2653 = vmul.f32 %v1748, %v2652
  %v2654 = vrot.slane %v2653, 4
  %v2655 = vadd.f32 %v2653, %v2654
  %v2656 = vrot.slane %v2655, 2
  %v2657 = vadd.f32 %v2655, %v2656
  %v2658 = vrot.slane %v2657, 1
  %v2659 = vadd.f32 %v2657, %v2658
  %v2660 = vmul.f32 %v1746, %v2652
  %v2661 = vlaneseq
  %v2662 = vshrl.u32 %v2661, 7
  %v2663 = vsub.s32 4, %v2662
  %v2664 = vrot.slane %v2603, %v2663
  %v2665 = vmul.f32 %v1747, %v2664
  %v2666 = vadd.f32 %v2660, %v2665
  %v2667 = vmul.f32 %v1748, %v2666
  %v2668 = vrot.slane %v2667, 4
  %v2669 = vadd.f32 %v2667, %v2668
  %v2670 = vrot.slane %v2669, 2
  %v2671 = vadd.f32 %v2669, %v2670
  %v2672 = vrot.slane %v2671, 1
  %v2673 = vadd.f32 %v2671, %v2672
  %v2674 = vmul.f32 %v1746, %v2666
  %v2675 = vlaneseq
  %v2676 = vshrl.u32 %v2675, 7
  %v2677 = vsub.s32 5, %v2676
  %v2678 = vrot.slane %v2603, %v2677
  %v2679 = vmul.f32 %v1747, %v2678
  %v2680 = vadd.f32 %v2674, %v2679
  %v2681 = vmul.f32 %v1748, %v2680
  %v2682 = vrot.slane %v2681, 4
  %v2683 = vadd.f32 %v2681, %v2682
  %v2684 = vrot.slane %v2683, 2
  %v2685 = vadd.f32 %v2683, %v2684
  %v2686 = vrot.slane %v2685, 1
  %v2687 = vadd.f32 %v2685, %v2686
  %v2688 = vmul.f32 %v1746, %v2680
  %v2689 = vlaneseq
  %v2690 = vshrl.u32 %v2689, 7
  %v2691 = vsub.s32 6, %v2690
  %v2692 = vrot.slane %v2603, %v2691
  %v2693 = vmul.f32 %v1747, %v2692
  %v2694 = vadd.f32 %v2688, %v2693
  %v2695 = vmul.f32 %v1748, %v2694
  %v2696 = vrot.slane %v2695, 4
  %v2697 = vadd.f32 %v2695, %v2696
  %v2698 = vrot.slane %v2697, 2
  %v2699 = vadd.f32 %v2697, %v2698
  %v2700 = vrot.slane %v2699, 1
  %v2701 = vadd.f32 %v2699, %v2700
  %v2702 = vmul.f32 %v1746, %v2694
  %v2703 = vlaneseq
  %v2704 = vshrl.u32 %v2703, 7
  %v2705 = vsub.s32 7, %v2704
  %v2706 = vrot.slane %v2603, %v2705
  %v2707 = vmul.f32 %v1747, %v2706
  %v2708 = vadd.f32 %v2702, %v2707
  %v2709 = vmul.f32 %v1748, %v2708
  %v2710 = vrot.slane %v2709, 4
  %v2711 = vadd.f32 %v2709, %v2710
  %v2712 = vrot.slane %v2711, 2
  %v2713 = vadd.f32 %v2711, %v2712
  %v2714 = vrot.slane %v2713, 1
  %v2715 = vadd.f32 %v2713, %v2714
  %v2716 = vsel %vm1862, %v2617, %v2631
  %v2717 = vsel %vm1864, %v2716, %v2645
  %v2718 = vsel %vm1866, %v2717, %v2659
  %v2719 = vsel %vm1868, %v2718, %v2673
  %v2720 = vsel %vm1870, %v2719, %v2687
  %v2721 = vsel %vm1872, %v2720, %v2701
  %v2722 = vsel %vm1874, %v2721, %v2715
  %2723 = vst [vmem:[#allocation3 + $0x38] sm:$0xff] %v2722
  %v2724 = vld [vmem:[#allocation3] sm:$0xff]
  %v2725 = vld [vmem:[#allocation3 + $0x8] sm:$0xff]
  %v2726 = vld [vmem:[#allocation3 + $0x10] sm:$0xff]
  %v2727 = vld [vmem:[#allocation3 + $0x18] sm:$0xff]
  %v2728 = vld [vmem:[#allocation3 + $0x20] sm:$0xff]
  %v2729 = vld [vmem:[#allocation3 + $0x28] sm:$0xff]
  %v2730 = vld [vmem:[#allocation3 + $0x30] sm:$0xff]
  %v2731 = vld [vmem:[#allocation3 + $0x38] sm:$0xff]
  %2740 = vrot.lane.b32.xlu0 %v2724, 64
  %v2741 = vpop.permute.xlu0 %2740
  %2742 = vrot.lane.b32.xlu0 %v2725, 64
  %v2743 = vpop.permute.xlu0 %2742
  %2744 = vrot.lane.b32.xlu0 %v2726, 64
  %v2745 = vpop.permute.xlu0 %2744
  %2746 = vrot.lane.b32.xlu0 %v2727, 64
  %v2747 = vpop.permute.xlu0 %2746
  %2748 = vrot.lane.b32.xlu0 %v2728, 64
  %v2749 = vpop.permute.xlu0 %2748
  %2750 = vrot.lane.b32.xlu0 %v2729, 64
  %v2751 = vpop.permute.xlu0 %2750
  %2752 = vrot.lane.b32.xlu0 %v2730, 64
  %v2753 = vpop.permute.xlu0 %2752
  %2754 = vrot.lane.b32.xlu0 %v2731, 64
  %v2755 = vpop.permute.xlu0 %2754
  %2764 = vmatprep.subr.mxu0 0.0
  %2765 = vmatpush1.msra.mxu0 0.0
  %2766 = vmatprep.subr.mxu0 0.0
  %2767 = vmatpush1.msra.mxu0 0.0
  %2768 = vmatprep.subr.mxu0 0.0
  %2769 = vmatpush1.msra.mxu0 0.0
  %2770 = vmatprep.subr.mxu0 0.0
  %2771 = vmatpush1.msra.mxu0 0.0
  %2772 = vmatprep.subr.mxu0 0.0
  %2773 = vmatpush1.msra.mxu0 0.0
  %2774 = vmatprep.subr.mxu0 0.0
  %2775 = vmatpush1.msra.mxu0 0.0
  %2776 = vmatprep.subr.mxu0 0.0
  %2777 = vmatpush1.msra.mxu0 0.0
  %2778 = vmatprep.subr.mxu0 0.0
  %2779 = vmatpush1.msra.mxu0 0.0
  %2780 = vmatprep.subr.mxu0 0.0
  %2781 = vmatpush1.msra.mxu0 %v2755
  %2782 = vmatprep.subr.mxu0 0.0
  %2783 = vmatpush1.msra.mxu0 %v2753
  %2784 = vmatprep.subr.mxu0 0.0
  %2785 = vmatpush1.msra.mxu0 %v2751
  %2786 = vmatprep.subr.mxu0 0.0
  %2787 = vmatpush1.msra.mxu0 %v2749
  %2788 = vmatprep.subr.mxu0 0.0
  %2789 = vmatpush1.msra.mxu0 %v2747
  %2790 = vmatprep.subr.mxu0 0.0
  %2791 = vmatpush1.msra.mxu0 %v2745
  %2792 = vmatprep.subr.mxu0 0.0
  %2793 = vmatpush1.msra.mxu0 %v2743
  %2794 = vmatprep.subr.mxu0 0.0
  %2795 = vmatpush1.msra.mxu0 %v2741
  %2796 = vmatprep.subr.mxu0 0.0
  %2797 = vmatpush2.msra.mxu0 0.0
  %2798 = vmatprep.subr.mxu0 0.0
  %2799 = vmatpush2.msra.mxu0 0.0
  %2800 = vmatprep.subr.mxu0 0.0
  %2801 = vmatpush2.msra.mxu0 0.0
  %2802 = vmatprep.subr.mxu0 0.0
  %2803 = vmatpush2.msra.mxu0 0.0
  %2804 = vmatprep.subr.mxu0 0.0
  %2805 = vmatpush2.msra.mxu0 0.0
  %2806 = vmatprep.subr.mxu0 0.0
  %2807 = vmatpush2.msra.mxu0 0.0
  %2808 = vmatprep.subr.mxu0 0.0
  %2809 = vmatpush2.msra.mxu0 0.0
  %2810 = vmatprep.subr.mxu0 0.0
  %2811 = vmatpush2.msra.mxu0 0.0
  %2812 = vmatprep.subr.mxu0 0.0
  %2813 = vmatpush2.msra.mxu0 0.0
  %2814 = vmatprep.subr.mxu0 0.0
  %2815 = vmatpush2.msra.mxu0 0.0
  %2816 = vmatprep.subr.mxu0 0.0
  %2817 = vmatpush2.msra.mxu0 0.0
  %2818 = vmatprep.subr.mxu0 0.0
  %2819 = vmatpush2.msra.mxu0 0.0
  %2820 = vmatprep.subr.mxu0 0.0
  %2821 = vmatpush2.msra.mxu0 0.0
  %2822 = vmatprep.subr.mxu0 0.0
  %2823 = vmatpush2.msra.mxu0 0.0
  %2824 = vmatprep.subr.mxu0 0.0
  %2825 = vmatpush2.msra.mxu0 0.0
  %2826 = vmatprep.subr.mxu0 0.0
  %2827 = vmatpush2.msra.mxu0 0.0
  %2828 = vmatprep.mubr.f32.mxu0 0.0
  %2829 = vmatmul.mubr.f32.gmra.mxu0 %v1570
  %v2830 = vpop.f32.mrf.mxu0
  %v2831 = vadd.f32 0.0, %v2830
  %v2832 = vpop.f32.mrf.mxu0
  %2833 = vmatprep.mubr.f32.mxu0 0.0
  %2834 = vmatmul.mubr.f32.gmra.mxu0 %v1573
  %v2835 = vpop.f32.mrf.mxu0
  %v2836 = vadd.f32 0.0, %v2835
  %v2837 = vpop.f32.mrf.mxu0
  %2838 = vmatprep.mubr.f32.mxu0 0.0
  %2839 = vmatmul.mubr.f32.gmra.mxu0 %v1576
  %v2840 = vpop.f32.mrf.mxu0
  %v2841 = vadd.f32 0.0, %v2840
  %v2842 = vpop.f32.mrf.mxu0
  %2843 = vmatprep.mubr.f32.mxu0 0.0
  %2844 = vmatmul.mubr.f32.gmra.mxu0 %v1579
  %v2845 = vpop.f32.mrf.mxu0
  %v2846 = vadd.f32 0.0, %v2845
  %v2847 = vpop.f32.mrf.mxu0
  %2848 = vmatprep.mubr.f32.mxu0 0.0
  %2849 = vmatmul.mubr.f32.gmra.mxu0 %v1582
  %v2850 = vpop.f32.mrf.mxu0
  %v2851 = vadd.f32 0.0, %v2850
  %v2852 = vpop.f32.mrf.mxu0
  %2853 = vmatprep.mubr.f32.mxu0 0.0
  %2854 = vmatmul.mubr.f32.gmra.mxu0 %v1585
  %v2855 = vpop.f32.mrf.mxu0
  %v2856 = vadd.f32 0.0, %v2855
  %v2857 = vpop.f32.mrf.mxu0
  %2858 = vmatprep.mubr.f32.mxu0 0.0
  %2859 = vmatmul.mubr.f32.gmra.mxu0 %v1588
  %v2860 = vpop.f32.mrf.mxu0
  %v2861 = vadd.f32 0.0, %v2860
  %v2862 = vpop.f32.mrf.mxu0
  %2863 = vmatprep.mubr.f32.mxu0 0.0
  %2864 = vmatmul.mubr.f32.gmra.mxu0 %v1591
  %v2865 = vpop.f32.mrf.mxu0
  %v2866 = vadd.f32 0.0, %v2865
  %v2867 = vpop.f32.mrf.mxu0
  %2868 = vdwg.mxu0
  %v2869 = vadd.f32 %v2724, %v2831
  %v2870 = vadd.f32 %v2725, %v2836
  %v2871 = vadd.f32 %v2726, %v2841
  %v2872 = vadd.f32 %v2727, %v2846
  %v2873 = vadd.f32 %v2728, %v2851
  %v2874 = vadd.f32 %v2729, %v2856
  %v2875 = vadd.f32 %v2730, %v2861
  %v2876 = vadd.f32 %v2731, %v2866
  %2885 = vrot.lane.b32.xlu0 %v2869, 96
  %v2886 = vpop.permute.xlu0 %2885
  %2887 = vrot.lane.b32.xlu0 %v2870, 96
  %v2888 = vpop.permute.xlu0 %2887
  %2889 = vrot.lane.b32.xlu0 %v2871, 96
  %v2890 = vpop.permute.xlu0 %2889
  %2891 = vrot.lane.b32.xlu0 %v2872, 96
  %v2892 = vpop.permute.xlu0 %2891
  %2893 = vrot.lane.b32.xlu0 %v2873, 96
  %v2894 = vpop.permute.xlu0 %2893
  %2895 = vrot.lane.b32.xlu0 %v2874, 96
  %v2896 = vpop.permute.xlu0 %2895
  %2897 = vrot.lane.b32.xlu0 %v2875, 96
  %v2898 = vpop.permute.xlu0 %2897
  %2899 = vrot.lane.b32.xlu0 %v2876, 96
  %v2900 = vpop.permute.xlu0 %2899
  %v2909 = vld [vmem:[%s4 + $0xa] sm:$0x1]
  %v2910 = vlaneseq
  %v2911 = vshrl.u32 %v2910, 7
  %v2912 = vsub.s32 0, %v2911
  %v2913 = vrot.slane %v2909, %v2912
  %v2914 = vmul.f32 %v2913, %v1408
  %v2915 = vmul.f32 %v2913, %v1413
  %v2916 = vmul.f32 %v2913, %v1418
  %v2917 = vmul.f32 %v2913, %v1423
  %v2918 = vmul.f32 %v2913, %v1428
  %v2919 = vmul.f32 %v2913, %v1433
  %v2920 = vmul.f32 %v2913, %v1438
  %v2921 = vmul.f32 %v2913, %v1443
  %v2922 = vmul.f32 %v2913, %v1448
  %v2923 = vmul.f32 %v2913, %v1453
  %v2924 = vmul.f32 %v2913, %v1458
  %v2925 = vmul.f32 %v2913, %v1463
  %v2926 = vmul.f32 %v2913, %v1468
  %v2927 = vmul.f32 %v2913, %v1473
  %v2928 = vmul.f32 %v2913, %v1478
  %v2929 = vmul.f32 %v2913, %v1483
  %v2930 = vadd.f32 %v2869, %v2914
  %v2931 = vadd.f32 %v2870, %v2915
  %v2932 = vadd.f32 %v2871, %v2916
  %v2933 = vadd.f32 %v2872, %v2917
  %v2934 = vadd.f32 %v2873, %v2918
  %v2935 = vadd.f32 %v2874, %v2919
  %v2936 = vadd.f32 %v2875, %v2920
  %v2937 = vadd.f32 %v2876, %v2921
  %v2938 = vadd.f32 %v2886, %v2922
  %v2939 = vadd.f32 %v2888, %v2923
  %v2940 = vadd.f32 %v2890, %v2924
  %v2941 = vadd.f32 %v2892, %v2925
  %v2942 = vadd.f32 %v2894, %v2926
  %v2943 = vadd.f32 %v2896, %v2927
  %v2944 = vadd.f32 %v2898, %v2928
  %v2945 = vadd.f32 %v2900, %v2929
  %v2946 = vld [vmem:[%s8 + $0x80] sm:$0xff]
  %v2947 = vld [vmem:[%s8 + $0x88] sm:$0xff]
  %v2948 = vld [vmem:[%s8 + $0x90] sm:$0xff]
  %v2949 = vld [vmem:[%s8 + $0x98] sm:$0xff]
  %v2950 = vld [vmem:[%s8 + $0xa0] sm:$0xff]
  %v2951 = vld [vmem:[%s8 + $0xa8] sm:$0xff]
  %v2952 = vld [vmem:[%s8 + $0xb0] sm:$0xff]
  %v2953 = vld [vmem:[%s8 + $0xb8] sm:$0xff]
  %v2954 = vld [vmem:[%s9 + $0x80] sm:$0xff]
  %v2955 = vld [vmem:[%s9 + $0x88] sm:$0xff]
  %v2956 = vld [vmem:[%s9 + $0x90] sm:$0xff]
  %v2957 = vld [vmem:[%s9 + $0x98] sm:$0xff]
  %v2958 = vld [vmem:[%s9 + $0xa0] sm:$0xff]
  %v2959 = vld [vmem:[%s9 + $0xa8] sm:$0xff]
  %v2960 = vld [vmem:[%s9 + $0xb0] sm:$0xff]
  %v2961 = vld [vmem:[%s9 + $0xb8] sm:$0xff]
  %2962 = vmatprep.subr.mxu0 0.0
  %2963 = vmatpush1.msra.mxu0 %v2945
  %2964 = vmatprep.subr.mxu0 0.0
  %2965 = vmatpush1.msra.mxu0 %v2944
  %2966 = vmatprep.subr.mxu0 0.0
  %2967 = vmatpush1.msra.mxu0 %v2943
  %2968 = vmatprep.subr.mxu0 0.0
  %2969 = vmatpush1.msra.mxu0 %v2942
  %2970 = vmatprep.subr.mxu0 0.0
  %2971 = vmatpush1.msra.mxu0 %v2941
  %2972 = vmatprep.subr.mxu0 0.0
  %2973 = vmatpush1.msra.mxu0 %v2940
  %2974 = vmatprep.subr.mxu0 0.0
  %2975 = vmatpush1.msra.mxu0 %v2939
  %2976 = vmatprep.subr.mxu0 0.0
  %2977 = vmatpush1.msra.mxu0 %v2938
  %2978 = vmatprep.subr.mxu0 0.0
  %2979 = vmatpush1.msra.mxu0 %v2937
  %2980 = vmatprep.subr.mxu0 0.0
  %2981 = vmatpush1.msra.mxu0 %v2936
  %2982 = vmatprep.subr.mxu0 0.0
  %2983 = vmatpush1.msra.mxu0 %v2935
  %2984 = vmatprep.subr.mxu0 0.0
  %2985 = vmatpush1.msra.mxu0 %v2934
  %2986 = vmatprep.subr.mxu0 0.0
  %2987 = vmatpush1.msra.mxu0 %v2933
  %2988 = vmatprep.subr.mxu0 0.0
  %2989 = vmatpush1.msra.mxu0 %v2932
  %2990 = vmatprep.subr.mxu0 0.0
  %2991 = vmatpush1.msra.mxu0 %v2931
  %2992 = vmatprep.subr.mxu0 0.0
  %2993 = vmatpush1.msra.mxu0 %v2930
  %2994 = vmatprep.subr.mxu0 0.0
  %2995 = vmatpush2.msra.mxu0 0.0
  %2996 = vmatprep.subr.mxu0 0.0
  %2997 = vmatpush2.msra.mxu0 0.0
  %2998 = vmatprep.subr.mxu0 0.0
  %2999 = vmatpush2.msra.mxu0 0.0
  %3000 = vmatprep.subr.mxu0 0.0
  %3001 = vmatpush2.msra.mxu0 0.0
  %3002 = vmatprep.subr.mxu0 0.0
  %3003 = vmatpush2.msra.mxu0 0.0
  %3004 = vmatprep.subr.mxu0 0.0
  %3005 = vmatpush2.msra.mxu0 0.0
  %3006 = vmatprep.subr.mxu0 0.0
  %3007 = vmatpush2.msra.mxu0 0.0
  %3008 = vmatprep.subr.mxu0 0.0
  %3009 = vmatpush2.msra.mxu0 0.0
  %3010 = vmatprep.subr.mxu0 0.0
  %3011 = vmatpush2.msra.mxu0 0.0
  %3012 = vmatprep.subr.mxu0 0.0
  %3013 = vmatpush2.msra.mxu0 0.0
  %3014 = vmatprep.subr.mxu0 0.0
  %3015 = vmatpush2.msra.mxu0 0.0
  %3016 = vmatprep.subr.mxu0 0.0
  %3017 = vmatpush2.msra.mxu0 0.0
  %3018 = vmatprep.subr.mxu0 0.0
  %3019 = vmatpush2.msra.mxu0 0.0
  %3020 = vmatprep.subr.mxu0 0.0
  %3021 = vmatpush2.msra.mxu0 0.0
  %3022 = vmatprep.subr.mxu0 0.0
  %3023 = vmatpush2.msra.mxu0 0.0
  %3024 = vmatprep.subr.mxu0 0.0
  %3025 = vmatpush2.msra.mxu0 0.0
  %3026 = vmatprep.mubr.f32.mxu0 0.0
  %3027 = vmatmul.mubr.f32.gmra.mxu0 %v2946
  %v3028 = vpop.f32.mrf.mxu0
  %v3029 = vadd.f32 %v2954, %v3028
  %v3030 = vpop.f32.mrf.mxu0
  %3031 = vmatprep.mubr.f32.mxu0 0.0
  %3032 = vmatmul.mubr.f32.gmra.mxu0 %v2947
  %v3033 = vpop.f32.mrf.mxu0
  %v3034 = vadd.f32 %v2955, %v3033
  %v3035 = vpop.f32.mrf.mxu0
  %3036 = vmatprep.mubr.f32.mxu0 0.0
  %3037 = vmatmul.mubr.f32.gmra.mxu0 %v2948
  %v3038 = vpop.f32.mrf.mxu0
  %v3039 = vadd.f32 %v2956, %v3038
  %v3040 = vpop.f32.mrf.mxu0
  %3041 = vmatprep.mubr.f32.mxu0 0.0
  %3042 = vmatmul.mubr.f32.gmra.mxu0 %v2949
  %v3043 = vpop.f32.mrf.mxu0
  %v3044 = vadd.f32 %v2957, %v3043
  %v3045 = vpop.f32.mrf.mxu0
  %3046 = vmatprep.mubr.f32.mxu0 0.0
  %3047 = vmatmul.mubr.f32.gmra.mxu0 %v2950
  %v3048 = vpop.f32.mrf.mxu0
  %v3049 = vadd.f32 %v2958, %v3048
  %v3050 = vpop.f32.mrf.mxu0
  %3051 = vmatprep.mubr.f32.mxu0 0.0
  %3052 = vmatmul.mubr.f32.gmra.mxu0 %v2951
  %v3053 = vpop.f32.mrf.mxu0
  %v3054 = vadd.f32 %v2959, %v3053
  %v3055 = vpop.f32.mrf.mxu0
  %3056 = vmatprep.mubr.f32.mxu0 0.0
  %3057 = vmatmul.mubr.f32.gmra.mxu0 %v2952
  %v3058 = vpop.f32.mrf.mxu0
  %v3059 = vadd.f32 %v2960, %v3058
  %v3060 = vpop.f32.mrf.mxu0
  %3061 = vmatprep.mubr.f32.mxu0 0.0
  %3062 = vmatmul.mubr.f32.gmra.mxu0 %v2953
  %v3063 = vpop.f32.mrf.mxu0
  %v3064 = vadd.f32 %v2961, %v3063
  %v3065 = vpop.f32.mrf.mxu0
  %3066 = vdwg.mxu0
  %v3067 = vld [vmem:[%s3 + $0x60] sm:$0xff]
  %v3068 = vld [vmem:[%s3 + $0x68] sm:$0xff]
  %v3069 = vld [vmem:[%s3 + $0x70] sm:$0xff]
  %v3070 = vld [vmem:[%s3 + $0x78] sm:$0xff]
  %v3071 = vld [vmem:[%s4 + $0x4] sm:$0x1]
  %v3072 = vlaneseq
  %v3073 = vshrl.u32 %v3072, 7
  %v3074 = vsub.s32 0, %v3073
  %v3075 = vrot.slane %v3071, %v3074
  %v3077 = vsel %vm192, %v890, 0
  %v3080 = vsel %vm192, %v895, 0
  %v3083 = vsel %vm192, %v900, 0
  %v3086 = vsel %vm192, %v905, 0
  %v3089 = vsel %vm192, %v910, 0
  %v3092 = vsel %vm192, %v915, 0
  %v3095 = vsel %vm192, %v920, 0
  %v3098 = vsel %vm192, %v925, 0
  %3100 = vmatprep.subr.mxu0 0.0
  %3101 = vmatpush1.msra.mxu0 0.0
  %3102 = vmatprep.subr.mxu0 0.0
  %3103 = vmatpush1.msra.mxu0 0.0
  %3104 = vmatprep.subr.mxu0 0.0
  %3105 = vmatpush1.msra.mxu0 0.0
  %3106 = vmatprep.subr.mxu0 0.0
  %3107 = vmatpush1.msra.mxu0 0.0
  %3108 = vmatprep.subr.mxu0 0.0
  %3109 = vmatpush1.msra.mxu0 0.0
  %3110 = vmatprep.subr.mxu0 0.0
  %3111 = vmatpush1.msra.mxu0 0.0
  %3112 = vmatprep.subr.mxu0 0.0
  %3113 = vmatpush1.msra.mxu0 0.0
  %3114 = vmatprep.subr.mxu0 0.0
  %3115 = vmatpush1.msra.mxu0 0.0
  %3116 = vmatprep.subr.mxu0 0.0
  %3117 = vmatpush1.msra.mxu0 0.0
  %3118 = vmatprep.subr.mxu0 0.0
  %3119 = vmatpush1.msra.mxu0 0.0
  %3120 = vmatprep.subr.mxu0 0.0
  %3121 = vmatpush1.msra.mxu0 0.0
  %3122 = vmatprep.subr.mxu0 0.0
  %3123 = vmatpush1.msra.mxu0 0.0
  %3124 = vmatprep.subr.mxu0 0.0
  %3125 = vmatpush1.msra.mxu0 %v3070
  %3126 = vmatprep.subr.mxu0 0.0
  %3127 = vmatpush1.msra.mxu0 %v3069
  %3128 = vmatprep.subr.mxu0 0.0
  %3129 = vmatpush1.msra.mxu0 %v3068
  %3130 = vmatprep.subr.mxu0 0.0
  %3131 = vmatpush1.msra.mxu0 %v3067
  %3132 = vmatprep.subr.mxu0 0.0
  %3133 = vmatpush2.msra.mxu0 0.0
  %3134 = vmatprep.subr.mxu0 0.0
  %3135 = vmatpush2.msra.mxu0 0.0
  %3136 = vmatprep.subr.mxu0 0.0
  %3137 = vmatpush2.msra.mxu0 0.0
  %3138 = vmatprep.subr.mxu0 0.0
  %3139 = vmatpush2.msra.mxu0 0.0
  %3140 = vmatprep.subr.mxu0 0.0
  %3141 = vmatpush2.msra.mxu0 0.0
  %3142 = vmatprep.subr.mxu0 0.0
  %3143 = vmatpush2.msra.mxu0 0.0
  %3144 = vmatprep.subr.mxu0 0.0
  %3145 = vmatpush2.msra.mxu0 0.0
  %3146 = vmatprep.subr.mxu0 0.0
  %3147 = vmatpush2.msra.mxu0 0.0
  %3148 = vmatprep.subr.mxu0 0.0
  %3149 = vmatpush2.msra.mxu0 0.0
  %3150 = vmatprep.subr.mxu0 0.0
  %3151 = vmatpush2.msra.mxu0 0.0
  %3152 = vmatprep.subr.mxu0 0.0
  %3153 = vmatpush2.msra.mxu0 0.0
  %3154 = vmatprep.subr.mxu0 0.0
  %3155 = vmatpush2.msra.mxu0 0.0
  %3156 = vmatprep.subr.mxu0 0.0
  %3157 = vmatpush2.msra.mxu0 0.0
  %3158 = vmatprep.subr.mxu0 0.0
  %3159 = vmatpush2.msra.mxu0 0.0
  %3160 = vmatprep.subr.mxu0 0.0
  %3161 = vmatpush2.msra.mxu0 0.0
  %3162 = vmatprep.subr.mxu0 0.0
  %3163 = vmatpush2.msra.mxu0 0.0
  %3164 = vmatprep.mubr.f32.mxu0 0.0
  %3165 = vmatmul.mubr.f32.gmra.mxu0 %v3077
  %v3166 = vpop.f32.mrf.mxu0
  %v3167 = vadd.f32 %v3075, %v3166
  %v3168 = vpop.f32.mrf.mxu0
  %3169 = vmatprep.mubr.f32.mxu0 0.0
  %3170 = vmatmul.mubr.f32.gmra.mxu0 %v3080
  %v3171 = vpop.f32.mrf.mxu0
  %v3172 = vadd.f32 %v3075, %v3171
  %v3173 = vpop.f32.mrf.mxu0
  %3174 = vmatprep.mubr.f32.mxu0 0.0
  %3175 = vmatmul.mubr.f32.gmra.mxu0 %v3083
  %v3176 = vpop.f32.mrf.mxu0
  %v3177 = vadd.f32 %v3075, %v3176
  %v3178 = vpop.f32.mrf.mxu0
  %3179 = vmatprep.mubr.f32.mxu0 0.0
  %3180 = vmatmul.mubr.f32.gmra.mxu0 %v3086
  %v3181 = vpop.f32.mrf.mxu0
  %v3182 = vadd.f32 %v3075, %v3181
  %v3183 = vpop.f32.mrf.mxu0
  %3184 = vmatprep.mubr.f32.mxu0 0.0
  %3185 = vmatmul.mubr.f32.gmra.mxu0 %v3089
  %v3186 = vpop.f32.mrf.mxu0
  %v3187 = vadd.f32 %v3075, %v3186
  %v3188 = vpop.f32.mrf.mxu0
  %3189 = vmatprep.mubr.f32.mxu0 0.0
  %3190 = vmatmul.mubr.f32.gmra.mxu0 %v3092
  %v3191 = vpop.f32.mrf.mxu0
  %v3192 = vadd.f32 %v3075, %v3191
  %v3193 = vpop.f32.mrf.mxu0
  %3194 = vmatprep.mubr.f32.mxu0 0.0
  %3195 = vmatmul.mubr.f32.gmra.mxu0 %v3095
  %v3196 = vpop.f32.mrf.mxu0
  %v3197 = vadd.f32 %v3075, %v3196
  %v3198 = vpop.f32.mrf.mxu0
  %3199 = vmatprep.mubr.f32.mxu0 0.0
  %3200 = vmatmul.mubr.f32.gmra.mxu0 %v3098
  %v3201 = vpop.f32.mrf.mxu0
  %v3202 = vadd.f32 %v3075, %v3201
  %v3203 = vpop.f32.mrf.mxu0
  %3204 = vdwg.mxu0
  %v3205 = vxor.u32 %v3167, 2147483648
  %v3206 = vxor.u32 %v3172, 2147483648
  %v3207 = vxor.u32 %v3177, 2147483648
  %v3208 = vxor.u32 %v3182, 2147483648
  %v3209 = vxor.u32 %v3187, 2147483648
  %v3210 = vxor.u32 %v3192, 2147483648
  %v3211 = vxor.u32 %v3197, 2147483648
  %v3212 = vxor.u32 %v3202, 2147483648
  %v3213 = vmul.f32 %v3205, 1.442695
  %v3214 = vpow.pop %v3213
  %v3215 = vmul.f32 %v3206, 1.442695
  %v3216 = vpow.pop %v3215
  %v3217 = vmul.f32 %v3207, 1.442695
  %v3218 = vpow.pop %v3217
  %v3219 = vmul.f32 %v3208, 1.442695
  %v3220 = vpow.pop %v3219
  %v3221 = vmul.f32 %v3209, 1.442695
  %v3222 = vpow.pop %v3221
  %v3223 = vmul.f32 %v3210, 1.442695
  %v3224 = vpow.pop %v3223
  %v3225 = vmul.f32 %v3211, 1.442695
  %v3226 = vpow.pop %v3225
  %v3227 = vmul.f32 %v3212, 1.442695
  %v3228 = vpow.pop %v3227
  %v3229 = vadd.f32 %v3214, 1.0
  %v3230 = vadd.f32 %v3216, 1.0
  %v3231 = vadd.f32 %v3218, 1.0
  %v3232 = vadd.f32 %v3220, 1.0
  %v3233 = vadd.f32 %v3222, 1.0
  %v3234 = vadd.f32 %v3224, 1.0
  %v3235 = vadd.f32 %v3226, 1.0
  %v3236 = vadd.f32 %v3228, 1.0
  %v3237 = vrcp.pop %v3229
  %v3238 = vmul.f32 1.0, %v3237
  %v3239 = vrcp.pop %v3230
  %v3240 = vmul.f32 1.0, %v3239
  %v3241 = vrcp.pop %v3231
  %v3242 = vmul.f32 1.0, %v3241
  %v3243 = vrcp.pop %v3232
  %v3244 = vmul.f32 1.0, %v3243
  %v3245 = vrcp.pop %v3233
  %v3246 = vmul.f32 1.0, %v3245
  %v3247 = vrcp.pop %v3234
  %v3248 = vmul.f32 1.0, %v3247
  %v3249 = vrcp.pop %v3235
  %v3250 = vmul.f32 1.0, %v3249
  %v3251 = vrcp.pop %v3236
  %v3252 = vmul.f32 1.0, %v3251
  %v3253 = vmul.f32 %v3167, %v3238
  %v3254 = vmul.f32 %v3172, %v3240
  %v3255 = vmul.f32 %v3177, %v3242
  %v3256 = vmul.f32 %v3182, %v3244
  %v3257 = vmul.f32 %v3187, %v3246
  %v3258 = vmul.f32 %v3192, %v3248
  %v3259 = vmul.f32 %v3197, %v3250
  %v3260 = vmul.f32 %v3202, %v3252
  %v3261 = vld [vmem:[%s3 + $0x80] sm:$0xff]
  %v3262 = vld [vmem:[%s3 + $0x88] sm:$0xff]
  %v3263 = vld [vmem:[%s3 + $0x90] sm:$0xff]
  %v3264 = vld [vmem:[%s3 + $0x98] sm:$0xff]
  %v3265 = vld [vmem:[%s4 + $0x5] sm:$0x1]
  %v3266 = vlaneseq
  %v3267 = vshrl.u32 %v3266, 7
  %v3268 = vsub.s32 0, %v3267
  %v3269 = vrot.slane %v3265, %v3268
  %v3271 = vsel %vm192, %v3253, 0
  %v3274 = vsel %vm192, %v3254, 0
  %v3277 = vsel %vm192, %v3255, 0
  %v3280 = vsel %vm192, %v3256, 0
  %v3283 = vsel %vm192, %v3257, 0
  %v3286 = vsel %vm192, %v3258, 0
  %v3289 = vsel %vm192, %v3259, 0
  %v3292 = vsel %vm192, %v3260, 0
  %3294 = vmatprep.subr.mxu0 0.0
  %3295 = vmatpush1.msra.mxu0 0.0
  %3296 = vmatprep.subr.mxu0 0.0
  %3297 = vmatpush1.msra.mxu0 0.0
  %3298 = vmatprep.subr.mxu0 0.0
  %3299 = vmatpush1.msra.mxu0 0.0
  %3300 = vmatprep.subr.mxu0 0.0
  %3301 = vmatpush1.msra.mxu0 0.0
  %3302 = vmatprep.subr.mxu0 0.0
  %3303 = vmatpush1.msra.mxu0 0.0
  %3304 = vmatprep.subr.mxu0 0.0
  %3305 = vmatpush1.msra.mxu0 0.0
  %3306 = vmatprep.subr.mxu0 0.0
  %3307 = vmatpush1.msra.mxu0 0.0
  %3308 = vmatprep.subr.mxu0 0.0
  %3309 = vmatpush1.msra.mxu0 0.0
  %3310 = vmatprep.subr.mxu0 0.0
  %3311 = vmatpush1.msra.mxu0 0.0
  %3312 = vmatprep.subr.mxu0 0.0
  %3313 = vmatpush1.msra.mxu0 0.0
  %3314 = vmatprep.subr.mxu0 0.0
  %3315 = vmatpush1.msra.mxu0 0.0
  %3316 = vmatprep.subr.mxu0 0.0
  %3317 = vmatpush1.msra.mxu0 0.0
  %3318 = vmatprep.subr.mxu0 0.0
  %3319 = vmatpush1.msra.mxu0 %v3264
  %3320 = vmatprep.subr.mxu0 0.0
  %3321 = vmatpush1.msra.mxu0 %v3263
  %3322 = vmatprep.subr.mxu0 0.0
  %3323 = vmatpush1.msra.mxu0 %v3262
  %3324 = vmatprep.subr.mxu0 0.0
  %3325 = vmatpush1.msra.mxu0 %v3261
  %3326 = vmatprep.subr.mxu0 0.0
  %3327 = vmatpush2.msra.mxu0 0.0
  %3328 = vmatprep.subr.mxu0 0.0
  %3329 = vmatpush2.msra.mxu0 0.0
  %3330 = vmatprep.subr.mxu0 0.0
  %3331 = vmatpush2.msra.mxu0 0.0
  %3332 = vmatprep.subr.mxu0 0.0
  %3333 = vmatpush2.msra.mxu0 0.0
  %3334 = vmatprep.subr.mxu0 0.0
  %3335 = vmatpush2.msra.mxu0 0.0
  %3336 = vmatprep.subr.mxu0 0.0
  %3337 = vmatpush2.msra.mxu0 0.0
  %3338 = vmatprep.subr.mxu0 0.0
  %3339 = vmatpush2.msra.mxu0 0.0
  %3340 = vmatprep.subr.mxu0 0.0
  %3341 = vmatpush2.msra.mxu0 0.0
  %3342 = vmatprep.subr.mxu0 0.0
  %3343 = vmatpush2.msra.mxu0 0.0
  %3344 = vmatprep.subr.mxu0 0.0
  %3345 = vmatpush2.msra.mxu0 0.0
  %3346 = vmatprep.subr.mxu0 0.0
  %3347 = vmatpush2.msra.mxu0 0.0
  %3348 = vmatprep.subr.mxu0 0.0
  %3349 = vmatpush2.msra.mxu0 0.0
  %3350 = vmatprep.subr.mxu0 0.0
  %3351 = vmatpush2.msra.mxu0 0.0
  %3352 = vmatprep.subr.mxu0 0.0
  %3353 = vmatpush2.msra.mxu0 0.0
  %3354 = vmatprep.subr.mxu0 0.0
  %3355 = vmatpush2.msra.mxu0 0.0
  %3356 = vmatprep.subr.mxu0 0.0
  %3357 = vmatpush2.msra.mxu0 0.0
  %3358 = vmatprep.mubr.f32.mxu0 0.0
  %3359 = vmatmul.mubr.f32.gmra.mxu0 %v3271
  %v3360 = vpop.f32.mrf.mxu0
  %v3361 = vadd.f32 %v3269, %v3360
  %v3362 = vpop.f32.mrf.mxu0
  %3363 = vmatprep.mubr.f32.mxu0 0.0
  %3364 = vmatmul.mubr.f32.gmra.mxu0 %v3274
  %v3365 = vpop.f32.mrf.mxu0
  %v3366 = vadd.f32 %v3269, %v3365
  %v3367 = vpop.f32.mrf.mxu0
  %3368 = vmatprep.mubr.f32.mxu0 0.0
  %3369 = vmatmul.mubr.f32.gmra.mxu0 %v3277
  %v3370 = vpop.f32.mrf.mxu0
  %v3371 = vadd.f32 %v3269, %v3370
  %v3372 = vpop.f32.mrf.mxu0
  %3373 = vmatprep.mubr.f32.mxu0 0.0
  %3374 = vmatmul.mubr.f32.gmra.mxu0 %v3280
  %v3375 = vpop.f32.mrf.mxu0
  %v3376 = vadd.f32 %v3269, %v3375
  %v3377 = vpop.f32.mrf.mxu0
  %3378 = vmatprep.mubr.f32.mxu0 0.0
  %3379 = vmatmul.mubr.f32.gmra.mxu0 %v3283
  %v3380 = vpop.f32.mrf.mxu0
  %v3381 = vadd.f32 %v3269, %v3380
  %v3382 = vpop.f32.mrf.mxu0
  %3383 = vmatprep.mubr.f32.mxu0 0.0
  %3384 = vmatmul.mubr.f32.gmra.mxu0 %v3286
  %v3385 = vpop.f32.mrf.mxu0
  %v3386 = vadd.f32 %v3269, %v3385
  %v3387 = vpop.f32.mrf.mxu0
  %3388 = vmatprep.mubr.f32.mxu0 0.0
  %3389 = vmatmul.mubr.f32.gmra.mxu0 %v3289
  %v3390 = vpop.f32.mrf.mxu0
  %v3391 = vadd.f32 %v3269, %v3390
  %v3392 = vpop.f32.mrf.mxu0
  %3393 = vmatprep.mubr.f32.mxu0 0.0
  %3394 = vmatmul.mubr.f32.gmra.mxu0 %v3292
  %v3395 = vpop.f32.mrf.mxu0
  %v3396 = vadd.f32 %v3269, %v3395
  %v3397 = vpop.f32.mrf.mxu0
  %3398 = vdwg.mxu0
  %v3399 = vld [vmem:[%s3 + $0xa0] sm:$0xff]
  %v3400 = vld [vmem:[%s3 + $0xa8] sm:$0xff]
  %v3401 = vld [vmem:[%s3 + $0xb0] sm:$0xff]
  %v3402 = vld [vmem:[%s3 + $0xb8] sm:$0xff]
  %v3403 = vld [vmem:[%s4 + $0x6] sm:$0x1]
  %v3404 = vlaneseq
  %v3405 = vshrl.u32 %v3404, 7
  %v3406 = vsub.s32 0, %v3405
  %v3407 = vrot.slane %v3403, %v3406
  %v3409 = vsel %vm192, %v3029, 0
  %v3412 = vsel %vm192, %v3034, 0
  %v3415 = vsel %vm192, %v3039, 0
  %v3418 = vsel %vm192, %v3044, 0
  %v3421 = vsel %vm192, %v3049, 0
  %v3424 = vsel %vm192, %v3054, 0
  %v3427 = vsel %vm192, %v3059, 0
  %v3430 = vsel %vm192, %v3064, 0
  %3432 = vmatprep.subr.mxu0 0.0
  %3433 = vmatpush1.msra.mxu0 0.0
  %3434 = vmatprep.subr.mxu0 0.0
  %3435 = vmatpush1.msra.mxu0 0.0
  %3436 = vmatprep.subr.mxu0 0.0
  %3437 = vmatpush1.msra.mxu0 0.0
  %3438 = vmatprep.subr.mxu0 0.0
  %3439 = vmatpush1.msra.mxu0 0.0
  %3440 = vmatprep.subr.mxu0 0.0
  %3441 = vmatpush1.msra.mxu0 0.0
  %3442 = vmatprep.subr.mxu0 0.0
  %3443 = vmatpush1.msra.mxu0 0.0
  %3444 = vmatprep.subr.mxu0 0.0
  %3445 = vmatpush1.msra.mxu0 0.0
  %3446 = vmatprep.subr.mxu0 0.0
  %3447 = vmatpush1.msra.mxu0 0.0
  %3448 = vmatprep.subr.mxu0 0.0
  %3449 = vmatpush1.msra.mxu0 0.0
  %3450 = vmatprep.subr.mxu0 0.0
  %3451 = vmatpush1.msra.mxu0 0.0
  %3452 = vmatprep.subr.mxu0 0.0
  %3453 = vmatpush1.msra.mxu0 0.0
  %3454 = vmatprep.subr.mxu0 0.0
  %3455 = vmatpush1.msra.mxu0 0.0
  %3456 = vmatprep.subr.mxu0 0.0
  %3457 = vmatpush1.msra.mxu0 %v3402
  %3458 = vmatprep.subr.mxu0 0.0
  %3459 = vmatpush1.msra.mxu0 %v3401
  %3460 = vmatprep.subr.mxu0 0.0
  %3461 = vmatpush1.msra.mxu0 %v3400
  %3462 = vmatprep.subr.mxu0 0.0
  %3463 = vmatpush1.msra.mxu0 %v3399
  %3464 = vmatprep.subr.mxu0 0.0
  %3465 = vmatpush2.msra.mxu0 0.0
  %3466 = vmatprep.subr.mxu0 0.0
  %3467 = vmatpush2.msra.mxu0 0.0
  %3468 = vmatprep.subr.mxu0 0.0
  %3469 = vmatpush2.msra.mxu0 0.0
  %3470 = vmatprep.subr.mxu0 0.0
  %3471 = vmatpush2.msra.mxu0 0.0
  %3472 = vmatprep.subr.mxu0 0.0
  %3473 = vmatpush2.msra.mxu0 0.0
  %3474 = vmatprep.subr.mxu0 0.0
  %3475 = vmatpush2.msra.mxu0 0.0
  %3476 = vmatprep.subr.mxu0 0.0
  %3477 = vmatpush2.msra.mxu0 0.0
  %3478 = vmatprep.subr.mxu0 0.0
  %3479 = vmatpush2.msra.mxu0 0.0
  %3480 = vmatprep.subr.mxu0 0.0
  %3481 = vmatpush2.msra.mxu0 0.0
  %3482 = vmatprep.subr.mxu0 0.0
  %3483 = vmatpush2.msra.mxu0 0.0
  %3484 = vmatprep.subr.mxu0 0.0
  %3485 = vmatpush2.msra.mxu0 0.0
  %3486 = vmatprep.subr.mxu0 0.0
  %3487 = vmatpush2.msra.mxu0 0.0
  %3488 = vmatprep.subr.mxu0 0.0
  %3489 = vmatpush2.msra.mxu0 0.0
  %3490 = vmatprep.subr.mxu0 0.0
  %3491 = vmatpush2.msra.mxu0 0.0
  %3492 = vmatprep.subr.mxu0 0.0
  %3493 = vmatpush2.msra.mxu0 0.0
  %3494 = vmatprep.subr.mxu0 0.0
  %3495 = vmatpush2.msra.mxu0 0.0
  %3496 = vmatprep.mubr.f32.mxu0 0.0
  %3497 = vmatmul.mubr.f32.gmra.mxu0 %v3409
  %v3498 = vpop.f32.mrf.mxu0
  %v3499 = vadd.f32 %v3407, %v3498
  %v3500 = vpop.f32.mrf.mxu0
  %3501 = vmatprep.mubr.f32.mxu0 0.0
  %3502 = vmatmul.mubr.f32.gmra.mxu0 %v3412
  %v3503 = vpop.f32.mrf.mxu0
  %v3504 = vadd.f32 %v3407, %v3503
  %v3505 = vpop.f32.mrf.mxu0
  %3506 = vmatprep.mubr.f32.mxu0 0.0
  %3507 = vmatmul.mubr.f32.gmra.mxu0 %v3415
  %v3508 = vpop.f32.mrf.mxu0
  %v3509 = vadd.f32 %v3407, %v3508
  %v3510 = vpop.f32.mrf.mxu0
  %3511 = vmatprep.mubr.f32.mxu0 0.0
  %3512 = vmatmul.mubr.f32.gmra.mxu0 %v3418
  %v3513 = vpop.f32.mrf.mxu0
  %v3514 = vadd.f32 %v3407, %v3513
  %v3515 = vpop.f32.mrf.mxu0
  %3516 = vmatprep.mubr.f32.mxu0 0.0
  %3517 = vmatmul.mubr.f32.gmra.mxu0 %v3421
  %v3518 = vpop.f32.mrf.mxu0
  %v3519 = vadd.f32 %v3407, %v3518
  %v3520 = vpop.f32.mrf.mxu0
  %3521 = vmatprep.mubr.f32.mxu0 0.0
  %3522 = vmatmul.mubr.f32.gmra.mxu0 %v3424
  %v3523 = vpop.f32.mrf.mxu0
  %v3524 = vadd.f32 %v3407, %v3523
  %v3525 = vpop.f32.mrf.mxu0
  %3526 = vmatprep.mubr.f32.mxu0 0.0
  %3527 = vmatmul.mubr.f32.gmra.mxu0 %v3427
  %v3528 = vpop.f32.mrf.mxu0
  %v3529 = vadd.f32 %v3407, %v3528
  %v3530 = vpop.f32.mrf.mxu0
  %3531 = vmatprep.mubr.f32.mxu0 0.0
  %3532 = vmatmul.mubr.f32.gmra.mxu0 %v3430
  %v3533 = vpop.f32.mrf.mxu0
  %v3534 = vadd.f32 %v3407, %v3533
  %v3535 = vpop.f32.mrf.mxu0
  %3536 = vdwg.mxu0
  %v3537 = vxor.u32 %v3499, 2147483648
  %v3538 = vxor.u32 %v3504, 2147483648
  %v3539 = vxor.u32 %v3509, 2147483648
  %v3540 = vxor.u32 %v3514, 2147483648
  %v3541 = vxor.u32 %v3519, 2147483648
  %v3542 = vxor.u32 %v3524, 2147483648
  %v3543 = vxor.u32 %v3529, 2147483648
  %v3544 = vxor.u32 %v3534, 2147483648
  %v3545 = vmul.f32 %v3537, 1.442695
  %v3546 = vpow.pop %v3545
  %v3547 = vmul.f32 %v3538, 1.442695
  %v3548 = vpow.pop %v3547
  %v3549 = vmul.f32 %v3539, 1.442695
  %v3550 = vpow.pop %v3549
  %v3551 = vmul.f32 %v3540, 1.442695
  %v3552 = vpow.pop %v3551
  %v3553 = vmul.f32 %v3541, 1.442695
  %v3554 = vpow.pop %v3553
  %v3555 = vmul.f32 %v3542, 1.442695
  %v3556 = vpow.pop %v3555
  %v3557 = vmul.f32 %v3543, 1.442695
  %v3558 = vpow.pop %v3557
  %v3559 = vmul.f32 %v3544, 1.442695
  %v3560 = vpow.pop %v3559
  %v3561 = vadd.f32 %v3546, 1.0
  %v3562 = vadd.f32 %v3548, 1.0
  %v3563 = vadd.f32 %v3550, 1.0
  %v3564 = vadd.f32 %v3552, 1.0
  %v3565 = vadd.f32 %v3554, 1.0
  %v3566 = vadd.f32 %v3556, 1.0
  %v3567 = vadd.f32 %v3558, 1.0
  %v3568 = vadd.f32 %v3560, 1.0
  %v3569 = vrcp.pop %v3561
  %v3570 = vmul.f32 1.0, %v3569
  %v3571 = vrcp.pop %v3562
  %v3572 = vmul.f32 1.0, %v3571
  %v3573 = vrcp.pop %v3563
  %v3574 = vmul.f32 1.0, %v3573
  %v3575 = vrcp.pop %v3564
  %v3576 = vmul.f32 1.0, %v3575
  %v3577 = vrcp.pop %v3565
  %v3578 = vmul.f32 1.0, %v3577
  %v3579 = vrcp.pop %v3566
  %v3580 = vmul.f32 1.0, %v3579
  %v3581 = vrcp.pop %v3567
  %v3582 = vmul.f32 1.0, %v3581
  %v3583 = vrcp.pop %v3568
  %v3584 = vmul.f32 1.0, %v3583
  %v3585 = vmul.f32 %v3499, %v3570
  %v3586 = vmul.f32 %v3504, %v3572
  %v3587 = vmul.f32 %v3509, %v3574
  %v3588 = vmul.f32 %v3514, %v3576
  %v3589 = vmul.f32 %v3519, %v3578
  %v3590 = vmul.f32 %v3524, %v3580
  %v3591 = vmul.f32 %v3529, %v3582
  %v3592 = vmul.f32 %v3534, %v3584
  %v3593 = vld [vmem:[%s3 + $0xc0] sm:$0xff]
  %v3594 = vld [vmem:[%s3 + $0xc8] sm:$0xff]
  %v3595 = vld [vmem:[%s3 + $0xd0] sm:$0xff]
  %v3596 = vld [vmem:[%s3 + $0xd8] sm:$0xff]
  %v3597 = vld [vmem:[%s4 + $0x7] sm:$0x1]
  %v3598 = vlaneseq
  %v3599 = vshrl.u32 %v3598, 7
  %v3600 = vsub.s32 0, %v3599
  %v3601 = vrot.slane %v3597, %v3600
  %v3603 = vsel %vm192, %v3585, 0
  %v3606 = vsel %vm192, %v3586, 0
  %v3609 = vsel %vm192, %v3587, 0
  %v3612 = vsel %vm192, %v3588, 0
  %v3615 = vsel %vm192, %v3589, 0
  %v3618 = vsel %vm192, %v3590, 0
  %v3621 = vsel %vm192, %v3591, 0
  %v3624 = vsel %vm192, %v3592, 0
  %3626 = vmatprep.subr.mxu0 0.0
  %3627 = vmatpush1.msra.mxu0 0.0
  %3628 = vmatprep.subr.mxu0 0.0
  %3629 = vmatpush1.msra.mxu0 0.0
  %3630 = vmatprep.subr.mxu0 0.0
  %3631 = vmatpush1.msra.mxu0 0.0
  %3632 = vmatprep.subr.mxu0 0.0
  %3633 = vmatpush1.msra.mxu0 0.0
  %3634 = vmatprep.subr.mxu0 0.0
  %3635 = vmatpush1.msra.mxu0 0.0
  %3636 = vmatprep.subr.mxu0 0.0
  %3637 = vmatpush1.msra.mxu0 0.0
  %3638 = vmatprep.subr.mxu0 0.0
  %3639 = vmatpush1.msra.mxu0 0.0
  %3640 = vmatprep.subr.mxu0 0.0
  %3641 = vmatpush1.msra.mxu0 0.0
  %3642 = vmatprep.subr.mxu0 0.0
  %3643 = vmatpush1.msra.mxu0 0.0
  %3644 = vmatprep.subr.mxu0 0.0
  %3645 = vmatpush1.msra.mxu0 0.0
  %3646 = vmatprep.subr.mxu0 0.0
  %3647 = vmatpush1.msra.mxu0 0.0
  %3648 = vmatprep.subr.mxu0 0.0
  %3649 = vmatpush1.msra.mxu0 0.0
  %3650 = vmatprep.subr.mxu0 0.0
  %3651 = vmatpush1.msra.mxu0 %v3596
  %3652 = vmatprep.subr.mxu0 0.0
  %3653 = vmatpush1.msra.mxu0 %v3595
  %3654 = vmatprep.subr.mxu0 0.0
  %3655 = vmatpush1.msra.mxu0 %v3594
  %3656 = vmatprep.subr.mxu0 0.0
  %3657 = vmatpush1.msra.mxu0 %v3593
  %3658 = vmatprep.subr.mxu0 0.0
  %3659 = vmatpush2.msra.mxu0 0.0
  %3660 = vmatprep.subr.mxu0 0.0
  %3661 = vmatpush2.msra.mxu0 0.0
  %3662 = vmatprep.subr.mxu0 0.0
  %3663 = vmatpush2.msra.mxu0 0.0
  %3664 = vmatprep.subr.mxu0 0.0
  %3665 = vmatpush2.msra.mxu0 0.0
  %3666 = vmatprep.subr.mxu0 0.0
  %3667 = vmatpush2.msra.mxu0 0.0
  %3668 = vmatprep.subr.mxu0 0.0
  %3669 = vmatpush2.msra.mxu0 0.0
  %3670 = vmatprep.subr.mxu0 0.0
  %3671 = vmatpush2.msra.mxu0 0.0
  %3672 = vmatprep.subr.mxu0 0.0
  %3673 = vmatpush2.msra.mxu0 0.0
  %3674 = vmatprep.subr.mxu0 0.0
  %3675 = vmatpush2.msra.mxu0 0.0
  %3676 = vmatprep.subr.mxu0 0.0
  %3677 = vmatpush2.msra.mxu0 0.0
  %3678 = vmatprep.subr.mxu0 0.0
  %3679 = vmatpush2.msra.mxu0 0.0
  %3680 = vmatprep.subr.mxu0 0.0
  %3681 = vmatpush2.msra.mxu0 0.0
  %3682 = vmatprep.subr.mxu0 0.0
  %3683 = vmatpush2.msra.mxu0 0.0
  %3684 = vmatprep.subr.mxu0 0.0
  %3685 = vmatpush2.msra.mxu0 0.0
  %3686 = vmatprep.subr.mxu0 0.0
  %3687 = vmatpush2.msra.mxu0 0.0
  %3688 = vmatprep.subr.mxu0 0.0
  %3689 = vmatpush2.msra.mxu0 0.0
  %3690 = vmatprep.mubr.f32.mxu0 0.0
  %3691 = vmatmul.mubr.f32.gmra.mxu0 %v3603
  %v3692 = vpop.f32.mrf.mxu0
  %v3693 = vadd.f32 %v3601, %v3692
  %v3694 = vpop.f32.mrf.mxu0
  %3695 = vmatprep.mubr.f32.mxu0 0.0
  %3696 = vmatmul.mubr.f32.gmra.mxu0 %v3606
  %v3697 = vpop.f32.mrf.mxu0
  %v3698 = vadd.f32 %v3601, %v3697
  %v3699 = vpop.f32.mrf.mxu0
  %3700 = vmatprep.mubr.f32.mxu0 0.0
  %3701 = vmatmul.mubr.f32.gmra.mxu0 %v3609
  %v3702 = vpop.f32.mrf.mxu0
  %v3703 = vadd.f32 %v3601, %v3702
  %v3704 = vpop.f32.mrf.mxu0
  %3705 = vmatprep.mubr.f32.mxu0 0.0
  %3706 = vmatmul.mubr.f32.gmra.mxu0 %v3612
  %v3707 = vpop.f32.mrf.mxu0
  %v3708 = vadd.f32 %v3601, %v3707
  %v3709 = vpop.f32.mrf.mxu0
  %3710 = vmatprep.mubr.f32.mxu0 0.0
  %3711 = vmatmul.mubr.f32.gmra.mxu0 %v3615
  %v3712 = vpop.f32.mrf.mxu0
  %v3713 = vadd.f32 %v3601, %v3712
  %v3714 = vpop.f32.mrf.mxu0
  %3715 = vmatprep.mubr.f32.mxu0 0.0
  %3716 = vmatmul.mubr.f32.gmra.mxu0 %v3618
  %v3717 = vpop.f32.mrf.mxu0
  %v3718 = vadd.f32 %v3601, %v3717
  %v3719 = vpop.f32.mrf.mxu0
  %3720 = vmatprep.mubr.f32.mxu0 0.0
  %3721 = vmatmul.mubr.f32.gmra.mxu0 %v3621
  %v3722 = vpop.f32.mrf.mxu0
  %v3723 = vadd.f32 %v3601, %v3722
  %v3724 = vpop.f32.mrf.mxu0
  %3725 = vmatprep.mubr.f32.mxu0 0.0
  %3726 = vmatmul.mubr.f32.gmra.mxu0 %v3624
  %v3727 = vpop.f32.mrf.mxu0
  %v3728 = vadd.f32 %v3601, %v3727
  %v3729 = vpop.f32.mrf.mxu0
  %3730 = vdwg.mxu0
  %v3731 = vmul.f32 %v3361, %v3693
  %v3732 = vmul.f32 %v3366, %v3698
  %v3733 = vmul.f32 %v3371, %v3703
  %v3734 = vmul.f32 %v3376, %v3708
  %v3735 = vmul.f32 %v3381, %v3713
  %v3736 = vmul.f32 %v3386, %v3718
  %v3737 = vmul.f32 %v3391, %v3723
  %v3738 = vmul.f32 %v3396, %v3728
  %v3739 = vld [vmem:[%s3 + $0xe0] sm:$0xff]
  %v3740 = vld [vmem:[%s3 + $0xe8] sm:$0xff]
  %v3741 = vld [vmem:[%s3 + $0xf0] sm:$0xff]
  %v3742 = vld [vmem:[%s3 + $0xf8] sm:$0xff]
  %v3743 = vld [vmem:[%s4 + $0x8] sm:$0x1]
  %v3744 = vlaneseq
  %v3745 = vshrl.u32 %v3744, 7
  %v3746 = vsub.s32 0, %v3745
  %v3747 = vrot.slane %v3743, %v3746
  %v3749 = vsel %vm192, %v3731, 0
  %v3752 = vsel %vm192, %v3732, 0
  %v3755 = vsel %vm192, %v3733, 0
  %v3758 = vsel %vm192, %v3734, 0
  %v3761 = vsel %vm192, %v3735, 0
  %v3764 = vsel %vm192, %v3736, 0
  %v3767 = vsel %vm192, %v3737, 0
  %v3770 = vsel %vm192, %v3738, 0
  %3772 = vmatprep.subr.mxu0 0.0
  %3773 = vmatpush1.msra.mxu0 0.0
  %3774 = vmatprep.subr.mxu0 0.0
  %3775 = vmatpush1.msra.mxu0 0.0
  %3776 = vmatprep.subr.mxu0 0.0
  %3777 = vmatpush1.msra.mxu0 0.0
  %3778 = vmatprep.subr.mxu0 0.0
  %3779 = vmatpush1.msra.mxu0 0.0
  %3780 = vmatprep.subr.mxu0 0.0
  %3781 = vmatpush1.msra.mxu0 0.0
  %3782 = vmatprep.subr.mxu0 0.0
  %3783 = vmatpush1.msra.mxu0 0.0
  %3784 = vmatprep.subr.mxu0 0.0
  %3785 = vmatpush1.msra.mxu0 0.0
  %3786 = vmatprep.subr.mxu0 0.0
  %3787 = vmatpush1.msra.mxu0 0.0
  %3788 = vmatprep.subr.mxu0 0.0
  %3789 = vmatpush1.msra.mxu0 0.0
  %3790 = vmatprep.subr.mxu0 0.0
  %3791 = vmatpush1.msra.mxu0 0.0
  %3792 = vmatprep.subr.mxu0 0.0
  %3793 = vmatpush1.msra.mxu0 0.0
  %3794 = vmatprep.subr.mxu0 0.0
  %3795 = vmatpush1.msra.mxu0 0.0
  %3796 = vmatprep.subr.mxu0 0.0
  %3797 = vmatpush1.msra.mxu0 %v3742
  %3798 = vmatprep.subr.mxu0 0.0
  %3799 = vmatpush1.msra.mxu0 %v3741
  %3800 = vmatprep.subr.mxu0 0.0
  %3801 = vmatpush1.msra.mxu0 %v3740
  %3802 = vmatprep.subr.mxu0 0.0
  %3803 = vmatpush1.msra.mxu0 %v3739
  %3804 = vmatprep.subr.mxu0 0.0
  %3805 = vmatpush2.msra.mxu0 0.0
  %3806 = vmatprep.subr.mxu0 0.0
  %3807 = vmatpush2.msra.mxu0 0.0
  %3808 = vmatprep.subr.mxu0 0.0
  %3809 = vmatpush2.msra.mxu0 0.0
  %3810 = vmatprep.subr.mxu0 0.0
  %3811 = vmatpush2.msra.mxu0 0.0
  %3812 = vmatprep.subr.mxu0 0.0
  %3813 = vmatpush2.msra.mxu0 0.0
  %3814 = vmatprep.subr.mxu0 0.0
  %3815 = vmatpush2.msra.mxu0 0.0
  %3816 = vmatprep.subr.mxu0 0.0
  %3817 = vmatpush2.msra.mxu0 0.0
  %3818 = vmatprep.subr.mxu0 0.0
  %3819 = vmatpush2.msra.mxu0 0.0
  %3820 = vmatprep.subr.mxu0 0.0
  %3821 = vmatpush2.msra.mxu0 0.0
  %3822 = vmatprep.subr.mxu0 0.0
  %3823 = vmatpush2.msra.mxu0 0.0
  %3824 = vmatprep.subr.mxu0 0.0
  %3825 = vmatpush2.msra.mxu0 0.0
  %3826 = vmatprep.subr.mxu0 0.0
  %3827 = vmatpush2.msra.mxu0 0.0
  %3828 = vmatprep.subr.mxu0 0.0
  %3829 = vmatpush2.msra.mxu0 0.0
  %3830 = vmatprep.subr.mxu0 0.0
  %3831 = vmatpush2.msra.mxu0 0.0
  %3832 = vmatprep.subr.mxu0 0.0
  %3833 = vmatpush2.msra.mxu0 0.0
  %3834 = vmatprep.subr.mxu0 0.0
  %3835 = vmatpush2.msra.mxu0 0.0
  %3836 = vmatprep.mubr.f32.mxu0 0.0
  %3837 = vmatmul.mubr.f32.gmra.mxu0 %v3749
  %v3838 = vpop.f32.mrf.mxu0
  %v3839 = vadd.f32 %v3747, %v3838
  %v3840 = vpop.f32.mrf.mxu0
  %3841 = vmatprep.mubr.f32.mxu0 0.0
  %3842 = vmatmul.mubr.f32.gmra.mxu0 %v3752
  %v3843 = vpop.f32.mrf.mxu0
  %v3844 = vadd.f32 %v3747, %v3843
  %v3845 = vpop.f32.mrf.mxu0
  %3846 = vmatprep.mubr.f32.mxu0 0.0
  %3847 = vmatmul.mubr.f32.gmra.mxu0 %v3755
  %v3848 = vpop.f32.mrf.mxu0
  %v3849 = vadd.f32 %v3747, %v3848
  %v3850 = vpop.f32.mrf.mxu0
  %3851 = vmatprep.mubr.f32.mxu0 0.0
  %3852 = vmatmul.mubr.f32.gmra.mxu0 %v3758
  %v3853 = vpop.f32.mrf.mxu0
  %v3854 = vadd.f32 %v3747, %v3853
  %v3855 = vpop.f32.mrf.mxu0
  %3856 = vmatprep.mubr.f32.mxu0 0.0
  %3857 = vmatmul.mubr.f32.gmra.mxu0 %v3761
  %v3858 = vpop.f32.mrf.mxu0
  %v3859 = vadd.f32 %v3747, %v3858
  %v3860 = vpop.f32.mrf.mxu0
  %3861 = vmatprep.mubr.f32.mxu0 0.0
  %3862 = vmatmul.mubr.f32.gmra.mxu0 %v3764
  %v3863 = vpop.f32.mrf.mxu0
  %v3864 = vadd.f32 %v3747, %v3863
  %v3865 = vpop.f32.mrf.mxu0
  %3866 = vmatprep.mubr.f32.mxu0 0.0
  %3867 = vmatmul.mubr.f32.gmra.mxu0 %v3767
  %v3868 = vpop.f32.mrf.mxu0
  %v3869 = vadd.f32 %v3747, %v3868
  %v3870 = vpop.f32.mrf.mxu0
  %3871 = vmatprep.mubr.f32.mxu0 0.0
  %3872 = vmatmul.mubr.f32.gmra.mxu0 %v3770
  %v3873 = vpop.f32.mrf.mxu0
  %v3874 = vadd.f32 %v3747, %v3873
  %v3875 = vpop.f32.mrf.mxu0
  %3876 = vdwg.mxu0
  %v3877 = vxor.u32 %v3839, 2147483648
  %v3878 = vxor.u32 %v3844, 2147483648
  %v3879 = vxor.u32 %v3849, 2147483648
  %v3880 = vxor.u32 %v3854, 2147483648
  %v3881 = vxor.u32 %v3859, 2147483648
  %v3882 = vxor.u32 %v3864, 2147483648
  %v3883 = vxor.u32 %v3869, 2147483648
  %v3884 = vxor.u32 %v3874, 2147483648
  %v3885 = vmul.f32 %v3877, 1.442695
  %v3886 = vpow.pop %v3885
  %v3887 = vmul.f32 %v3878, 1.442695
  %v3888 = vpow.pop %v3887
  %v3889 = vmul.f32 %v3879, 1.442695
  %v3890 = vpow.pop %v3889
  %v3891 = vmul.f32 %v3880, 1.442695
  %v3892 = vpow.pop %v3891
  %v3893 = vmul.f32 %v3881, 1.442695
  %v3894 = vpow.pop %v3893
  %v3895 = vmul.f32 %v3882, 1.442695
  %v3896 = vpow.pop %v3895
  %v3897 = vmul.f32 %v3883, 1.442695
  %v3898 = vpow.pop %v3897
  %v3899 = vmul.f32 %v3884, 1.442695
  %v3900 = vpow.pop %v3899
  %v3901 = vadd.f32 %v3886, 1.0
  %v3902 = vadd.f32 %v3888, 1.0
  %v3903 = vadd.f32 %v3890, 1.0
  %v3904 = vadd.f32 %v3892, 1.0
  %v3905 = vadd.f32 %v3894, 1.0
  %v3906 = vadd.f32 %v3896, 1.0
  %v3907 = vadd.f32 %v3898, 1.0
  %v3908 = vadd.f32 %v3900, 1.0
  %v3909 = vrcp.pop %v3901
  %v3910 = vmul.f32 1.0, %v3909
  %v3911 = vrcp.pop %v3902
  %v3912 = vmul.f32 1.0, %v3911
  %v3913 = vrcp.pop %v3903
  %v3914 = vmul.f32 1.0, %v3913
  %v3915 = vrcp.pop %v3904
  %v3916 = vmul.f32 1.0, %v3915
  %v3917 = vrcp.pop %v3905
  %v3918 = vmul.f32 1.0, %v3917
  %v3919 = vrcp.pop %v3906
  %v3920 = vmul.f32 1.0, %v3919
  %v3921 = vrcp.pop %v3907
  %v3922 = vmul.f32 1.0, %v3921
  %v3923 = vrcp.pop %v3908
  %v3924 = vmul.f32 1.0, %v3923
  %v3925 = vmul.f32 %v3839, %v3910
  %v3926 = vmul.f32 %v3844, %v3912
  %v3927 = vmul.f32 %v3849, %v3914
  %v3928 = vmul.f32 %v3854, %v3916
  %v3929 = vmul.f32 %v3859, %v3918
  %v3930 = vmul.f32 %v3864, %v3920
  %v3931 = vmul.f32 %v3869, %v3922
  %v3932 = vmul.f32 %v3874, %v3924
  %v3933 = vld [vmem:[%s3 + $0x100] sm:$0xff]
  %v3934 = vld [vmem:[%s3 + $0x108] sm:$0xff]
  %v3935 = vld [vmem:[%s3 + $0x110] sm:$0xff]
  %v3936 = vld [vmem:[%s3 + $0x118] sm:$0xff]
  %v3937 = vld [vmem:[%s4 + $0x9] sm:$0x1]
  %v3938 = vlaneseq
  %v3939 = vshrl.u32 %v3938, 7
  %v3940 = vsub.s32 0, %v3939
  %v3941 = vrot.slane %v3937, %v3940
  %v3943 = vsel %vm192, %v3925, 0
  %v3946 = vsel %vm192, %v3926, 0
  %v3949 = vsel %vm192, %v3927, 0
  %v3952 = vsel %vm192, %v3928, 0
  %v3955 = vsel %vm192, %v3929, 0
  %v3958 = vsel %vm192, %v3930, 0
  %v3961 = vsel %vm192, %v3931, 0
  %v3964 = vsel %vm192, %v3932, 0
  %3966 = vmatprep.subr.mxu0 0.0
  %3967 = vmatpush1.msra.mxu0 0.0
  %3968 = vmatprep.subr.mxu0 0.0
  %3969 = vmatpush1.msra.mxu0 0.0
  %3970 = vmatprep.subr.mxu0 0.0
  %3971 = vmatpush1.msra.mxu0 0.0
  %3972 = vmatprep.subr.mxu0 0.0
  %3973 = vmatpush1.msra.mxu0 0.0
  %3974 = vmatprep.subr.mxu0 0.0
  %3975 = vmatpush1.msra.mxu0 0.0
  %3976 = vmatprep.subr.mxu0 0.0
  %3977 = vmatpush1.msra.mxu0 0.0
  %3978 = vmatprep.subr.mxu0 0.0
  %3979 = vmatpush1.msra.mxu0 0.0
  %3980 = vmatprep.subr.mxu0 0.0
  %3981 = vmatpush1.msra.mxu0 0.0
  %3982 = vmatprep.subr.mxu0 0.0
  %3983 = vmatpush1.msra.mxu0 0.0
  %3984 = vmatprep.subr.mxu0 0.0
  %3985 = vmatpush1.msra.mxu0 0.0
  %3986 = vmatprep.subr.mxu0 0.0
  %3987 = vmatpush1.msra.mxu0 0.0
  %3988 = vmatprep.subr.mxu0 0.0
  %3989 = vmatpush1.msra.mxu0 0.0
  %3990 = vmatprep.subr.mxu0 0.0
  %3991 = vmatpush1.msra.mxu0 %v3936
  %3992 = vmatprep.subr.mxu0 0.0
  %3993 = vmatpush1.msra.mxu0 %v3935
  %3994 = vmatprep.subr.mxu0 0.0
  %3995 = vmatpush1.msra.mxu0 %v3934
  %3996 = vmatprep.subr.mxu0 0.0
  %3997 = vmatpush1.msra.mxu0 %v3933
  %3998 = vmatprep.subr.mxu0 0.0
  %3999 = vmatpush2.msra.mxu0 0.0
  %4000 = vmatprep.subr.mxu0 0.0
  %4001 = vmatpush2.msra.mxu0 0.0
  %4002 = vmatprep.subr.mxu0 0.0
  %4003 = vmatpush2.msra.mxu0 0.0
  %4004 = vmatprep.subr.mxu0 0.0
  %4005 = vmatpush2.msra.mxu0 0.0
  %4006 = vmatprep.subr.mxu0 0.0
  %4007 = vmatpush2.msra.mxu0 0.0
  %4008 = vmatprep.subr.mxu0 0.0
  %4009 = vmatpush2.msra.mxu0 0.0
  %4010 = vmatprep.subr.mxu0 0.0
  %4011 = vmatpush2.msra.mxu0 0.0
  %4012 = vmatprep.subr.mxu0 0.0
  %4013 = vmatpush2.msra.mxu0 0.0
  %4014 = vmatprep.subr.mxu0 0.0
  %4015 = vmatpush2.msra.mxu0 0.0
  %4016 = vmatprep.subr.mxu0 0.0
  %4017 = vmatpush2.msra.mxu0 0.0
  %4018 = vmatprep.subr.mxu0 0.0
  %4019 = vmatpush2.msra.mxu0 0.0
  %4020 = vmatprep.subr.mxu0 0.0
  %4021 = vmatpush2.msra.mxu0 0.0
  %4022 = vmatprep.subr.mxu0 0.0
  %4023 = vmatpush2.msra.mxu0 0.0
  %4024 = vmatprep.subr.mxu0 0.0
  %4025 = vmatpush2.msra.mxu0 0.0
  %4026 = vmatprep.subr.mxu0 0.0
  %4027 = vmatpush2.msra.mxu0 0.0
  %4028 = vmatprep.subr.mxu0 0.0
  %4029 = vmatpush2.msra.mxu0 0.0
  %4030 = vmatprep.mubr.f32.mxu0 0.0
  %4031 = vmatmul.mubr.f32.gmra.mxu0 %v3943
  %v4032 = vpop.f32.mrf.mxu0
  %v4033 = vadd.f32 %v3941, %v4032
  %v4034 = vpop.f32.mrf.mxu0
  %4035 = vmatprep.mubr.f32.mxu0 0.0
  %4036 = vmatmul.mubr.f32.gmra.mxu0 %v3946
  %v4037 = vpop.f32.mrf.mxu0
  %v4038 = vadd.f32 %v3941, %v4037
  %v4039 = vpop.f32.mrf.mxu0
  %4040 = vmatprep.mubr.f32.mxu0 0.0
  %4041 = vmatmul.mubr.f32.gmra.mxu0 %v3949
  %v4042 = vpop.f32.mrf.mxu0
  %v4043 = vadd.f32 %v3941, %v4042
  %v4044 = vpop.f32.mrf.mxu0
  %4045 = vmatprep.mubr.f32.mxu0 0.0
  %4046 = vmatmul.mubr.f32.gmra.mxu0 %v3952
  %v4047 = vpop.f32.mrf.mxu0
  %v4048 = vadd.f32 %v3941, %v4047
  %v4049 = vpop.f32.mrf.mxu0
  %4050 = vmatprep.mubr.f32.mxu0 0.0
  %4051 = vmatmul.mubr.f32.gmra.mxu0 %v3955
  %v4052 = vpop.f32.mrf.mxu0
  %v4053 = vadd.f32 %v3941, %v4052
  %v4054 = vpop.f32.mrf.mxu0
  %4055 = vmatprep.mubr.f32.mxu0 0.0
  %4056 = vmatmul.mubr.f32.gmra.mxu0 %v3958
  %v4057 = vpop.f32.mrf.mxu0
  %v4058 = vadd.f32 %v3941, %v4057
  %v4059 = vpop.f32.mrf.mxu0
  %4060 = vmatprep.mubr.f32.mxu0 0.0
  %4061 = vmatmul.mubr.f32.gmra.mxu0 %v3961
  %v4062 = vpop.f32.mrf.mxu0
  %v4063 = vadd.f32 %v3941, %v4062
  %v4064 = vpop.f32.mrf.mxu0
  %4065 = vmatprep.mubr.f32.mxu0 0.0
  %4066 = vmatmul.mubr.f32.gmra.mxu0 %v3964
  %v4067 = vpop.f32.mrf.mxu0
  %v4068 = vadd.f32 %v3941, %v4067
  %v4069 = vpop.f32.mrf.mxu0
  %4070 = vdwg.mxu0
  %v4071 = vld [vmem:[%s10 + $0x80] sm:$0xff]
  %v4072 = vld [vmem:[%s10 + $0x88] sm:$0xff]
  %v4073 = vld [vmem:[%s10 + $0x90] sm:$0xff]
  %v4074 = vld [vmem:[%s10 + $0x98] sm:$0xff]
  %v4075 = vld [vmem:[%s10 + $0xa0] sm:$0xff]
  %v4076 = vld [vmem:[%s10 + $0xa8] sm:$0xff]
  %v4077 = vld [vmem:[%s10 + $0xb0] sm:$0xff]
  %v4078 = vld [vmem:[%s10 + $0xb8] sm:$0xff]
  %v4079 = vld [vmem:[%s10 + $0xc0] sm:$0xff]
  %v4080 = vld [vmem:[%s10 + $0xc8] sm:$0xff]
  %v4081 = vld [vmem:[%s10 + $0xd0] sm:$0xff]
  %v4082 = vld [vmem:[%s10 + $0xd8] sm:$0xff]
  %v4083 = vld [vmem:[%s10 + $0xe0] sm:$0xff]
  %v4084 = vld [vmem:[%s10 + $0xe8] sm:$0xff]
  %v4085 = vld [vmem:[%s10 + $0xf0] sm:$0xff]
  %v4086 = vld [vmem:[%s10 + $0xf8] sm:$0xff]
  %v4087 = vld [vmem:[%s11 + $0x80] sm:$0xff]
  %v4088 = vld [vmem:[%s11 + $0x88] sm:$0xff]
  %v4089 = vld [vmem:[%s11 + $0x90] sm:$0xff]
  %v4090 = vld [vmem:[%s11 + $0x98] sm:$0xff]
  %v4091 = vld [vmem:[%s11 + $0xa0] sm:$0xff]
  %v4092 = vld [vmem:[%s11 + $0xa8] sm:$0xff]
  %v4093 = vld [vmem:[%s11 + $0xb0] sm:$0xff]
  %v4094 = vld [vmem:[%s11 + $0xb8] sm:$0xff]
  %v4095 = vld [vmem:[%s11 + $0xc0] sm:$0xff]
  %v4096 = vld [vmem:[%s11 + $0xc8] sm:$0xff]
  %v4097 = vld [vmem:[%s11 + $0xd0] sm:$0xff]
  %v4098 = vld [vmem:[%s11 + $0xd8] sm:$0xff]
  %v4099 = vld [vmem:[%s11 + $0xe0] sm:$0xff]
  %v4100 = vld [vmem:[%s11 + $0xe8] sm:$0xff]
  %v4101 = vld [vmem:[%s11 + $0xf0] sm:$0xff]
  %v4102 = vld [vmem:[%s11 + $0xf8] sm:$0xff]
  %v4104 = vsel %vm1292, %v4071, 0
  %v4107 = vsel %vm1292, %v4072, 0
  %v4110 = vsel %vm1292, %v4073, 0
  %v4113 = vsel %vm1292, %v4074, 0
  %v4116 = vsel %vm1292, %v4075, 0
  %v4119 = vsel %vm1292, %v4076, 0
  %v4122 = vsel %vm1292, %v4077, 0
  %v4125 = vsel %vm1292, %v4078, 0
  %v4128 = vsel %vm1292, %v4079, 0
  %v4131 = vsel %vm1292, %v4080, 0
  %v4134 = vsel %vm1292, %v4081, 0
  %v4137 = vsel %vm1292, %v4082, 0
  %v4140 = vsel %vm1292, %v4083, 0
  %v4143 = vsel %vm1292, %v4084, 0
  %v4146 = vsel %vm1292, %v4085, 0
  %v4149 = vsel %vm1292, %v4086, 0
  %4151 = vmatprep.subr.mxu0 0.0
  %4152 = vmatpush1.msra.mxu0 0.0
  %4153 = vmatprep.subr.mxu0 0.0
  %4154 = vmatpush1.msra.mxu0 0.0
  %4155 = vmatprep.subr.mxu0 0.0
  %4156 = vmatpush1.msra.mxu0 0.0
  %4157 = vmatprep.subr.mxu0 0.0
  %4158 = vmatpush1.msra.mxu0 0.0
  %4159 = vmatprep.subr.mxu0 0.0
  %4160 = vmatpush1.msra.mxu0 0.0
  %4161 = vmatprep.subr.mxu0 0.0
  %4162 = vmatpush1.msra.mxu0 0.0
  %4163 = vmatprep.subr.mxu0 0.0
  %4164 = vmatpush1.msra.mxu0 0.0
  %4165 = vmatprep.subr.mxu0 0.0
  %4166 = vmatpush1.msra.mxu0 0.0
  %4167 = vmatprep.subr.mxu0 0.0
  %4168 = vmatpush1.msra.mxu0 %v4068
  %4169 = vmatprep.subr.mxu0 0.0
  %4170 = vmatpush1.msra.mxu0 %v4063
  %4171 = vmatprep.subr.mxu0 0.0
  %4172 = vmatpush1.msra.mxu0 %v4058
  %4173 = vmatprep.subr.mxu0 0.0
  %4174 = vmatpush1.msra.mxu0 %v4053
  %4175 = vmatprep.subr.mxu0 0.0
  %4176 = vmatpush1.msra.mxu0 %v4048
  %4177 = vmatprep.subr.mxu0 0.0
  %4178 = vmatpush1.msra.mxu0 %v4043
  %4179 = vmatprep.subr.mxu0 0.0
  %4180 = vmatpush1.msra.mxu0 %v4038
  %4181 = vmatprep.subr.mxu0 0.0
  %4182 = vmatpush1.msra.mxu0 %v4033
  %4183 = vmatprep.subr.mxu0 0.0
  %4184 = vmatpush2.msra.mxu0 0.0
  %4185 = vmatprep.subr.mxu0 0.0
  %4186 = vmatpush2.msra.mxu0 0.0
  %4187 = vmatprep.subr.mxu0 0.0
  %4188 = vmatpush2.msra.mxu0 0.0
  %4189 = vmatprep.subr.mxu0 0.0
  %4190 = vmatpush2.msra.mxu0 0.0
  %4191 = vmatprep.subr.mxu0 0.0
  %4192 = vmatpush2.msra.mxu0 0.0
  %4193 = vmatprep.subr.mxu0 0.0
  %4194 = vmatpush2.msra.mxu0 0.0
  %4195 = vmatprep.subr.mxu0 0.0
  %4196 = vmatpush2.msra.mxu0 0.0
  %4197 = vmatprep.subr.mxu0 0.0
  %4198 = vmatpush2.msra.mxu0 0.0
  %4199 = vmatprep.subr.mxu0 0.0
  %4200 = vmatpush2.msra.mxu0 0.0
  %4201 = vmatprep.subr.mxu0 0.0
  %4202 = vmatpush2.msra.mxu0 0.0
  %4203 = vmatprep.subr.mxu0 0.0
  %4204 = vmatpush2.msra.mxu0 0.0
  %4205 = vmatprep.subr.mxu0 0.0
  %4206 = vmatpush2.msra.mxu0 0.0
  %4207 = vmatprep.subr.mxu0 0.0
  %4208 = vmatpush2.msra.mxu0 0.0
  %4209 = vmatprep.subr.mxu0 0.0
  %4210 = vmatpush2.msra.mxu0 0.0
  %4211 = vmatprep.subr.mxu0 0.0
  %4212 = vmatpush2.msra.mxu0 0.0
  %4213 = vmatprep.subr.mxu0 0.0
  %4214 = vmatpush2.msra.mxu0 0.0
  %4215 = vmatprep.mubr.f32.mxu0 0.0
  %4216 = vmatmul.mubr.f32.gmra.mxu0 %v4104
  %v4217 = vpop.f32.mrf.mxu0
  %v4218 = vadd.f32 %v4087, %v4217
  %v4219 = vpop.f32.mrf.mxu0
  %4220 = vmatprep.mubr.f32.mxu0 0.0
  %4221 = vmatmul.mubr.f32.gmra.mxu0 %v4107
  %v4222 = vpop.f32.mrf.mxu0
  %v4223 = vadd.f32 %v4088, %v4222
  %v4224 = vpop.f32.mrf.mxu0
  %4225 = vmatprep.mubr.f32.mxu0 0.0
  %4226 = vmatmul.mubr.f32.gmra.mxu0 %v4110
  %v4227 = vpop.f32.mrf.mxu0
  %v4228 = vadd.f32 %v4089, %v4227
  %v4229 = vpop.f32.mrf.mxu0
  %4230 = vmatprep.mubr.f32.mxu0 0.0
  %4231 = vmatmul.mubr.f32.gmra.mxu0 %v4113
  %v4232 = vpop.f32.mrf.mxu0
  %v4233 = vadd.f32 %v4090, %v4232
  %v4234 = vpop.f32.mrf.mxu0
  %4235 = vmatprep.mubr.f32.mxu0 0.0
  %4236 = vmatmul.mubr.f32.gmra.mxu0 %v4116
  %v4237 = vpop.f32.mrf.mxu0
  %v4238 = vadd.f32 %v4091, %v4237
  %v4239 = vpop.f32.mrf.mxu0
  %4240 = vmatprep.mubr.f32.mxu0 0.0
  %4241 = vmatmul.mubr.f32.gmra.mxu0 %v4119
  %v4242 = vpop.f32.mrf.mxu0
  %v4243 = vadd.f32 %v4092, %v4242
  %v4244 = vpop.f32.mrf.mxu0
  %4245 = vmatprep.mubr.f32.mxu0 0.0
  %4246 = vmatmul.mubr.f32.gmra.mxu0 %v4122
  %v4247 = vpop.f32.mrf.mxu0
  %v4248 = vadd.f32 %v4093, %v4247
  %v4249 = vpop.f32.mrf.mxu0
  %4250 = vmatprep.mubr.f32.mxu0 0.0
  %4251 = vmatmul.mubr.f32.gmra.mxu0 %v4125
  %v4252 = vpop.f32.mrf.mxu0
  %v4253 = vadd.f32 %v4094, %v4252
  %v4254 = vpop.f32.mrf.mxu0
  %4255 = vmatprep.mubr.f32.mxu0 0.0
  %4256 = vmatmul.mubr.f32.gmra.mxu0 %v4128
  %v4257 = vpop.f32.mrf.mxu0
  %v4258 = vadd.f32 %v4095, %v4257
  %v4259 = vpop.f32.mrf.mxu0
  %4260 = vmatprep.mubr.f32.mxu0 0.0
  %4261 = vmatmul.mubr.f32.gmra.mxu0 %v4131
  %v4262 = vpop.f32.mrf.mxu0
  %v4263 = vadd.f32 %v4096, %v4262
  %v4264 = vpop.f32.mrf.mxu0
  %4265 = vmatprep.mubr.f32.mxu0 0.0
  %4266 = vmatmul.mubr.f32.gmra.mxu0 %v4134
  %v4267 = vpop.f32.mrf.mxu0
  %v4268 = vadd.f32 %v4097, %v4267
  %v4269 = vpop.f32.mrf.mxu0
  %4270 = vmatprep.mubr.f32.mxu0 0.0
  %4271 = vmatmul.mubr.f32.gmra.mxu0 %v4137
  %v4272 = vpop.f32.mrf.mxu0
  %v4273 = vadd.f32 %v4098, %v4272
  %v4274 = vpop.f32.mrf.mxu0
  %4275 = vmatprep.mubr.f32.mxu0 0.0
  %4276 = vmatmul.mubr.f32.gmra.mxu0 %v4140
  %v4277 = vpop.f32.mrf.mxu0
  %v4278 = vadd.f32 %v4099, %v4277
  %v4279 = vpop.f32.mrf.mxu0
  %4280 = vmatprep.mubr.f32.mxu0 0.0
  %4281 = vmatmul.mubr.f32.gmra.mxu0 %v4143
  %v4282 = vpop.f32.mrf.mxu0
  %v4283 = vadd.f32 %v4100, %v4282
  %v4284 = vpop.f32.mrf.mxu0
  %4285 = vmatprep.mubr.f32.mxu0 0.0
  %4286 = vmatmul.mubr.f32.gmra.mxu0 %v4146
  %v4287 = vpop.f32.mrf.mxu0
  %v4288 = vadd.f32 %v4101, %v4287
  %v4289 = vpop.f32.mrf.mxu0
  %4290 = vmatprep.mubr.f32.mxu0 0.0
  %4291 = vmatmul.mubr.f32.gmra.mxu0 %v4149
  %v4292 = vpop.f32.mrf.mxu0
  %v4293 = vadd.f32 %v4102, %v4292
  %v4294 = vpop.f32.mrf.mxu0
  %4295 = vdwg.mxu0
  %4304 = vrot.lane.b32.xlu0 %v4218, 64
  %v4305 = vpop.permute.xlu0 %4304
  %4306 = vrot.lane.b32.xlu0 %v4223, 64
  %v4307 = vpop.permute.xlu0 %4306
  %4308 = vrot.lane.b32.xlu0 %v4228, 64
  %v4309 = vpop.permute.xlu0 %4308
  %4310 = vrot.lane.b32.xlu0 %v4233, 64
  %v4311 = vpop.permute.xlu0 %4310
  %4312 = vrot.lane.b32.xlu0 %v4238, 64
  %v4313 = vpop.permute.xlu0 %4312
  %4314 = vrot.lane.b32.xlu0 %v4243, 64
  %v4315 = vpop.permute.xlu0 %4314
  %4316 = vrot.lane.b32.xlu0 %v4248, 64
  %v4317 = vpop.permute.xlu0 %4316
  %4318 = vrot.lane.b32.xlu0 %v4253, 64
  %v4319 = vpop.permute.xlu0 %4318
  %v4328 = vmul.f32 %v614, %v4305
  %v4329 = vmul.f32 %v614, %v4307
  %v4330 = vmul.f32 %v614, %v4309
  %v4331 = vmul.f32 %v614, %v4311
  %v4332 = vmul.f32 %v614, %v4313
  %v4333 = vmul.f32 %v614, %v4315
  %v4334 = vmul.f32 %v614, %v4317
  %v4335 = vmul.f32 %v614, %v4319
  %4344 = vrot.lane.b32.xlu0 %v4328, 96
  %v4345 = vpop.permute.xlu0 %4344
  %4346 = vrot.lane.b32.xlu0 %v4329, 96
  %v4347 = vpop.permute.xlu0 %4346
  %4348 = vrot.lane.b32.xlu0 %v4330, 96
  %v4349 = vpop.permute.xlu0 %4348
  %4350 = vrot.lane.b32.xlu0 %v4331, 96
  %v4351 = vpop.permute.xlu0 %4350
  %4352 = vrot.lane.b32.xlu0 %v4332, 96
  %v4353 = vpop.permute.xlu0 %4352
  %4354 = vrot.lane.b32.xlu0 %v4333, 96
  %v4355 = vpop.permute.xlu0 %4354
  %4356 = vrot.lane.b32.xlu0 %v4334, 96
  %v4357 = vpop.permute.xlu0 %4356
  %4358 = vrot.lane.b32.xlu0 %v4335, 96
  %v4359 = vpop.permute.xlu0 %4358
  %v4368 = vadd.f32 %v619, %v4345
  %v4369 = vadd.f32 %v620, %v4347
  %v4370 = vadd.f32 %v621, %v4349
  %v4371 = vadd.f32 %v622, %v4351
  %v4372 = vadd.f32 %v623, %v4353
  %v4373 = vadd.f32 %v624, %v4355
  %v4374 = vadd.f32 %v625, %v4357
  %v4375 = vadd.f32 %v626, %v4359
  %4384 = vrot.lane.b32.xlu0 %v4258, 64
  %v4385 = vpop.permute.xlu0 %4384
  %4386 = vrot.lane.b32.xlu0 %v4263, 64
  %v4387 = vpop.permute.xlu0 %4386
  %4388 = vrot.lane.b32.xlu0 %v4268, 64
  %v4389 = vpop.permute.xlu0 %4388
  %4390 = vrot.lane.b32.xlu0 %v4273, 64
  %v4391 = vpop.permute.xlu0 %4390
  %4392 = vrot.lane.b32.xlu0 %v4278, 64
  %v4393 = vpop.permute.xlu0 %4392
  %4394 = vrot.lane.b32.xlu0 %v4283, 64
  %v4395 = vpop.permute.xlu0 %4394
  %4396 = vrot.lane.b32.xlu0 %v4288, 64
  %v4397 = vpop.permute.xlu0 %4396
  %4398 = vrot.lane.b32.xlu0 %v4293, 64
  %v4399 = vpop.permute.xlu0 %4398
  %v4408 = vmul.f32 %v674, %v4385
  %v4409 = vmul.f32 %v674, %v4387
  %v4410 = vmul.f32 %v674, %v4389
  %v4411 = vmul.f32 %v674, %v4391
  %v4412 = vmul.f32 %v674, %v4393
  %v4413 = vmul.f32 %v674, %v4395
  %v4414 = vmul.f32 %v674, %v4397
  %v4415 = vmul.f32 %v674, %v4399
  %4424 = vrot.lane.b32.xlu0 %v4408, 96
  %v4425 = vpop.permute.xlu0 %4424
  %4426 = vrot.lane.b32.xlu0 %v4409, 96
  %v4427 = vpop.permute.xlu0 %4426
  %4428 = vrot.lane.b32.xlu0 %v4410, 96
  %v4429 = vpop.permute.xlu0 %4428
  %4430 = vrot.lane.b32.xlu0 %v4411, 96
  %v4431 = vpop.permute.xlu0 %4430
  %4432 = vrot.lane.b32.xlu0 %v4412, 96
  %v4433 = vpop.permute.xlu0 %4432
  %4434 = vrot.lane.b32.xlu0 %v4413, 96
  %v4435 = vpop.permute.xlu0 %4434
  %4436 = vrot.lane.b32.xlu0 %v4414, 96
  %v4437 = vpop.permute.xlu0 %4436
  %4438 = vrot.lane.b32.xlu0 %v4415, 96
  %v4439 = vpop.permute.xlu0 %4438
  %v4448 = vadd.f32 %v679, %v4425
  %v4449 = vadd.f32 %v680, %v4427
  %v4450 = vadd.f32 %v681, %v4429
  %v4451 = vadd.f32 %v682, %v4431
  %v4452 = vadd.f32 %v683, %v4433
  %v4453 = vadd.f32 %v684, %v4435
  %v4454 = vadd.f32 %v685, %v4437
  %v4455 = vadd.f32 %v686, %v4439
  %4472 = vrot.lane.b32.xlu0 %v4368, 96
  %v4473 = vpop.permute.xlu0 %4472
  %4474 = vrot.lane.b32.xlu0 %v4369, 96
  %v4475 = vpop.permute.xlu0 %4474
  %4476 = vrot.lane.b32.xlu0 %v4370, 96
  %v4477 = vpop.permute.xlu0 %4476
  %4478 = vrot.lane.b32.xlu0 %v4371, 96
  %v4479 = vpop.permute.xlu0 %4478
  %4480 = vrot.lane.b32.xlu0 %v4372, 96
  %v4481 = vpop.permute.xlu0 %4480
  %4482 = vrot.lane.b32.xlu0 %v4373, 96
  %v4483 = vpop.permute.xlu0 %4482
  %4484 = vrot.lane.b32.xlu0 %v4374, 96
  %v4485 = vpop.permute.xlu0 %4484
  %4486 = vrot.lane.b32.xlu0 %v4375, 96
  %v4487 = vpop.permute.xlu0 %4486
  %4488 = vrot.lane.b32.xlu0 %v4448, 96
  %v4489 = vpop.permute.xlu0 %4488
  %4490 = vrot.lane.b32.xlu0 %v4449, 96
  %v4491 = vpop.permute.xlu0 %4490
  %4492 = vrot.lane.b32.xlu0 %v4450, 96
  %v4493 = vpop.permute.xlu0 %4492
  %4494 = vrot.lane.b32.xlu0 %v4451, 96
  %v4495 = vpop.permute.xlu0 %4494
  %4496 = vrot.lane.b32.xlu0 %v4452, 96
  %v4497 = vpop.permute.xlu0 %4496
  %4498 = vrot.lane.b32.xlu0 %v4453, 96
  %v4499 = vpop.permute.xlu0 %4498
  %4500 = vrot.lane.b32.xlu0 %v4454, 96
  %v4501 = vpop.permute.xlu0 %4500
  %4502 = vrot.lane.b32.xlu0 %v4455, 96
  %v4503 = vpop.permute.xlu0 %4502
  %4520 = vst.msk [vmem:[%s12] sm:$0xff] %vm192, %v4473
  %4521 = vst.msk [vmem:[%s12 + $0x8] sm:$0xff] %vm192, %v4475
  %4522 = vst.msk [vmem:[%s12 + $0x10] sm:$0xff] %vm192, %v4477
  %4523 = vst.msk [vmem:[%s12 + $0x18] sm:$0xff] %vm192, %v4479
  %4524 = vst.msk [vmem:[%s12 + $0x20] sm:$0xff] %vm192, %v4481
  %4525 = vst.msk [vmem:[%s12 + $0x28] sm:$0xff] %vm192, %v4483
  %4526 = vst.msk [vmem:[%s12 + $0x30] sm:$0xff] %vm192, %v4485
  %4527 = vst.msk [vmem:[%s12 + $0x38] sm:$0xff] %vm192, %v4487
  %4528 = vst.msk [vmem:[%s12 + $0x40] sm:$0xff] %vm192, %v4489
  %4529 = vst.msk [vmem:[%s12 + $0x48] sm:$0xff] %vm192, %v4491
  %4530 = vst.msk [vmem:[%s12 + $0x50] sm:$0xff] %vm192, %v4493
  %4531 = vst.msk [vmem:[%s12 + $0x58] sm:$0xff] %vm192, %v4495
  %4532 = vst.msk [vmem:[%s12 + $0x60] sm:$0xff] %vm192, %v4497
  %4533 = vst.msk [vmem:[%s12 + $0x68] sm:$0xff] %vm192, %v4499
  %4534 = vst.msk [vmem:[%s12 + $0x70] sm:$0xff] %vm192, %v4501
  %4535 = vst.msk [vmem:[%s12 + $0x78] sm:$0xff] %vm192, %v4503
  // Predicated region
  $region50: #{tpu_custom_call.1} parent=0 // pred_check
    _
  $region51: #{tpu_custom_call.1} parent=0 // pred_check_branch
    %4537 = sbr.rel (0) target = $region53
  $region52: #{tpu_custom_call.1} parent=0 // pred_region
    _
  $region53: #{tpu_custom_call.1} parent=0 // pred_fallthru
    _
  // Predicated region
  $region54: #{tpu_custom_call.1} parent=0 // pred_check
    _
  $region55: #{tpu_custom_call.1} parent=0 // pred_check_branch
    %4539 = sbr.rel (0) target = $region57
  $region56: #{tpu_custom_call.1} parent=0 // pred_region
    _
  $region57: #{tpu_custom_call.1} parent=0 // pred_fallthru
    _

</llo_original>
